<compile_context>
chip_gen: v6e
topology: v6e:2x2x1
jax: 0.10.0
libtpu: 0.0.40
codegen_flags: <defaults>
</compile_context>

<pallas_src>
import jax
import jax.numpy as jnp
from jax import lax
from jax.experimental import pallas as pl
from jax.experimental.pallas import tpu as pltpu


# ----------------------------------------------------------------------------
# Fused Pallas kernel (single invocation, whole batch folded into lanes)
# ----------------------------------------------------------------------------
def _make_spade_kernel(N, C, Cs, F, H, W):
    HW = H * W
    NHW = N * HW
    inv_hw = 1.0 / float(HW)

    # Lane-rotation amounts realizing the 3x3 zero-padded spatial shifts on the
    # flattened (n, h, w) lane axis; tap index o = dy*3 + dx.
    shifts = []
    for dy in range(3):
        for dx in range(3):
            off = (dy - 1) * W + (dx - 1)
            shifts.append((-off) % NHW)

    def _conv3x3(inp, w_ref, bias, masks, rows_out):
        """9-offset shift-and-accumulate 3x3 conv (zero padding via masks).

        inp: (rows_in, NHW); w_ref[o]: (rows_out, rows_in); bias: (rows_out, 1).
        """
        acc = jnp.broadcast_to(bias, (rows_out, NHW))     # bias folded into init
        for o, s in enumerate(shifts):
            if s == 0:                                    # center tap: no shift/mask
                v = inp
            else:
                v = pltpu.roll(inp, shift=s, axis=1) * masks[o:o + 1, :]
            acc = acc + jnp.dot(w_ref[o], v, preferred_element_type=jnp.float32)
        return acc

    def kernel(masks_ref, x_ref, seg_ref, w1_ref, b1_ref, wgb_ref, bgb_ref,
               out_ref):
        masks = masks_ref[...]                                            # (9, NHW)

        # conv1(seg) + relu, whole batch in one lane-folded pass.
        act = jnp.maximum(
            _conv3x3(seg_ref[...], w1_ref, b1_ref[...], masks, F), 0.0)   # (F, NHW)

        # Fused gamma/beta conv (stacked (2C, F) weights).
        gb = _conv3x3(act, wgb_ref, bgb_ref[...], masks, 2 * C)           # (2C, NHW)
        gamma = gb[0:C, :]
        beta = gb[C:2 * C, :]

        # (buggy-faithful) per-image "instance norm" + modulation, one HW
        # segment of the lane axis per image (static, lane-tile-aligned slices).
        x = x_ref[...]                                                    # (C, NHW)
        for n in range(N):
            lo, hi = n * HW, (n + 1) * HW
            xs = x[:, lo:hi]                                              # (C, HW)
            s = jnp.sum(xs, axis=1, keepdims=True)                        # (C, 1)
            mean = s * inv_hw
            # Reference: std = sqrt((sum^2 - mean^2)/HW); rsqrt (EUP) + multiply
            # instead of sqrt + divide.
            inv_std = lax.rsqrt((s * s - mean * mean) * inv_hw)
            out_ref[:, lo:hi] = ((xs - mean) * inv_std * (1.0 + gamma[:, lo:hi])
                                 + beta[:, lo:hi])

    return kernel


# ----------------------------------------------------------------------------
# Plain-JAX glue (layout plumbing only)
# ----------------------------------------------------------------------------
def _nearest_interp_nchw(seg, H, W):
    """torch.nn.functional.interpolate(mode='nearest') semantics (gather)."""
    N, C, Hs, Ws = seg.shape
    ih = (jnp.arange(H) * Hs) // H
    iw = (jnp.arange(W) * Ws) // W
    return seg[:, :, ih[:, None], iw[None, :]]                    # (N, C, H, W)


def _border_masks(H, W):
    """(9, H*W) f32 masks: 1 where the (dy-1, dx-1)-shifted pixel is in-bounds."""
    yy = jnp.arange(H)[:, None]
    xx = jnp.arange(W)[None, :]
    rows = []
    for dy in range(3):
        for dx in range(3):
            oy, ox = dy - 1, dx - 1
            m = ((yy + oy >= 0) & (yy + oy < H) &
                 (xx + ox >= 0) & (xx + ox < W))
            rows.append(m.astype(jnp.float32).reshape(H * W))
    return jnp.stack(rows, axis=0)


def _conv_w_per_tap(w):
    """(Cout, Cin, 3, 3) -> (9, Cout, Cin), tap index o = dy*3 + dx."""
    cout, cin, kh, kw = w.shape
    return jnp.transpose(w, (2, 3, 0, 1)).reshape(kh * kw, cout, cin)


# ----------------------------------------------------------------------------
# SPADE forward (Pallas)
# ----------------------------------------------------------------------------
def spade_forward(x, seg, params):
    """x: (N, C, H, W) f32, seg: (N, 8, Hs, Ws) f32.  Returns (N, C, H, W)."""
    w1, b1, wg, bg, wb, bb = params
    N, C, H, W = x.shape
    HW = H * W
    F, Cs = w1.shape[0], w1.shape[1]

    # Lane-dense, batch-folded layouts: lane index = n*HW + h*W + w.
    x_cn = jnp.transpose(x, (1, 0, 2, 3)).reshape(C, N * HW)
    seg_cn = jnp.transpose(_nearest_interp_nchw(seg, H, W),
                           (1, 0, 2, 3)).reshape(Cs, N * HW)
    masks = jnp.tile(_border_masks(H, W), (1, N))                 # (9, N*HW)

    w1t = _conv_w_per_tap(w1)                                     # (9, F, Cs)
    wgbt = _conv_w_per_tap(jnp.concatenate([wg, wb], axis=0))     # (9, 2C, F)
    b1c = b1.reshape(F, 1)
    bgbc = jnp.concatenate([bg, bb], axis=0).reshape(2 * C, 1)

    kernel = _make_spade_kernel(N, C, Cs, F, H, W)
    vmem = pl.BlockSpec(memory_space=pltpu.MemorySpace.VMEM)

    out_cn = pl.pallas_call(
        kernel,
        out_shape=jax.ShapeDtypeStruct((C, N * HW), jnp.float32),
        in_specs=[vmem] * 7,
        out_specs=vmem,
    )(masks, x_cn, seg_cn, w1t, b1c, wgbt, bgbc)

    return jnp.transpose(out_cn.reshape(C, N, H, W), (1, 0, 2, 3))


# ----------------------------------------------------------------------------
# Pure-JAX reference (mirrors the PyTorch forward exactly)
# ----------------------------------------------------------------------------
def spade_reference(x, seg, params):
    w1, b1, wg, bg, wb, bb = params
    N, C, H, W = x.shape
    s = jnp.sum(x.reshape(N, C, H * W), axis=-1)
    mean = s / (H * W)
    std = jnp.sqrt((s ** 2 - mean ** 2) / (H * W))
    xn = (x - mean[:, :, None, None]) / std[:, :, None, None]

    dn = ('NCHW', 'OIHW', 'NCHW')
    seg_i = _nearest_interp_nchw(seg, H, W)
    a = jax.nn.relu(lax.conv_general_dilated(seg_i, w1, (1, 1), [(1, 1), (1, 1)],
                                             dimension_numbers=dn)
                    + b1[None, :, None, None])
    gamma = lax.conv_general_dilated(a, wg, (1, 1), [(1, 1), (1, 1)],
                                     dimension_numbers=dn) + bg[None, :, None, None]
    beta = lax.conv_general_dilated(a, wb, (1, 1), [(1, 1), (1, 1)],
                                    dimension_numbers=dn) + bb[None, :, None, None]
    return xn * (1.0 + gamma) + beta


# ----------------------------------------------------------------------------
if __name__ == "__main__":
    # Module config: SPADE(spade_filter=32, spade_kernel=3, k=4)
    spade_filter, spade_kernel, k = 32, 3, 4
    N, C, H, W = 2, k, 16, 16           # x: (N, C, H, W); k must equal C
    Cin_seg, Hs, Ws = 8, 8, 8           # seg: (N, 8, Hs, Ws), conv expects 8 ch

    key = jax.random.PRNGKey(0)
    k0, k1, k2, k3, k4, k5, k6, k7 = jax.random.split(key, 8)

    x = jax.random.normal(k0, (N, C, H, W), jnp.float32)
    seg = jax.random.normal(k1, (N, Cin_seg, Hs, Ws), jnp.float32)

    # Deterministic synthetic parameters (Conv2d weight layout: OIHW, bias: (O,))
    w1 = 0.1 * jax.random.normal(k2, (spade_filter, Cin_seg, spade_kernel, spade_kernel), jnp.float32)
    b1 = 0.1 * jax.random.normal(k3, (spade_filter,), jnp.float32)
    wg = 0.1 * jax.random.normal(k4, (k, spade_filter, spade_kernel, spade_kernel), jnp.float32)
    bg = 0.1 * jax.random.normal(k5, (k,), jnp.float32)
    wb = 0.1 * jax.random.normal(k6, (k, spade_filter, spade_kernel, spade_kernel), jnp.float32)
    bb = 0.1 * jax.random.normal(k7, (k,), jnp.float32)
    params = (w1, b1, wg, bg, wb, bb)

    out = jax.jit(spade_forward)(x, seg, params)
    out = jax.block_until_ready(out)

    ref = jax.block_until_ready(spade_reference(x, seg, params))
    err = float(jnp.max(jnp.abs(out - ref)) / (jnp.max(jnp.abs(ref)) + 1.0))
    assert out.shape == (N, C, H, W) and out.dtype == jnp.float32
    assert err < 1e-3, f"mismatch vs reference: rel-max-err={err}"

    print("KERNEL_OK")
</pallas_src>

<mosaic_0001>
module attributes {stable_mosaic.version = 11 : i64} {
  func.func @kernel(%arg0: memref<9x512xf32, #tpu.memory_space<vmem>>, %arg1: memref<4x512xf32, #tpu.memory_space<vmem>>, %arg2: memref<8x512xf32, #tpu.memory_space<vmem>>, %arg3: memref<9x32x8xf32, #tpu.memory_space<vmem>>, %arg4: memref<32x1xf32, #tpu.memory_space<vmem>>, %arg5: memref<9x8x32xf32, #tpu.memory_space<vmem>>, %arg6: memref<8x1xf32, #tpu.memory_space<vmem>>, %arg7: memref<4x512xf32, #tpu.memory_space<vmem>>) attributes {dimension_semantics = [], scalar_prefetch = 0 : i64, scratch_operands = 0 : i64, tpu.core_type = #tpu.core_type<tc>} {
    %c0 = arith.constant 0 : index
    %c0_0 = arith.constant 0 : index
    %0 = vector.load %arg0[%c0, %c0_0] : memref<9x512xf32, #tpu.memory_space<vmem>>, vector<9x512xf32>
    %c0_1 = arith.constant 0 : index
    %c0_2 = arith.constant 0 : index
    %1 = vector.load %arg2[%c0_1, %c0_2] : memref<8x512xf32, #tpu.memory_space<vmem>>, vector<8x512xf32>
    %c0_3 = arith.constant 0 : index
    %c0_4 = arith.constant 0 : index
    %2 = vector.load %arg4[%c0_3, %c0_4] : memref<32x1xf32, #tpu.memory_space<vmem>>, vector<32x1xf32>
    %3 = vector.shape_cast %2 : vector<32x1xf32> to vector<32x1xf32>
    %4 = vector.broadcast %3 : vector<32x1xf32> to vector<32x512xf32>
    %c17_i32 = arith.constant 17 : i32
    %5 = tpu.dynamic_rotate %1 by %c17_i32 dim 1 : vector<8x512xf32>, i32 -> vector<8x512xf32>
    %6 = vector.extract_strided_slice %0 {offsets = [0, 0], sizes = [1, 512], strides = [1, 1]} : vector<9x512xf32> to vector<1x512xf32>
    %7 = vector.broadcast %6 : vector<1x512xf32> to vector<8x512xf32>
    %8 = arith.mulf %5, %7 : vector<8x512xf32>
    %c0_5 = arith.constant 0 : index
    %c0_6 = arith.constant 0 : index
    %c0_7 = arith.constant 0 : index
    %9 = vector.load %arg3[%c0_5, %c0_6, %c0_7] : memref<9x32x8xf32, #tpu.memory_space<vmem>>, vector<1x32x8xf32>
    %10 = vector.shape_cast %9 : vector<1x32x8xf32> to vector<32x8xf32>
    %cst = arith.constant dense<0.000000e+00> : vector<32x512xf32>
    %11 = tpu.matmul %10, %8, %cst {dimension_numbers = #tpu.dot_dimension_numbers<[1], [0], [0], [1], [0, 0, 1, 1], [], []>} : vector<32x8xf32>, vector<8x512xf32>, vector<32x512xf32> -> vector<32x512xf32>
    %12 = arith.addf %4, %11 : vector<32x512xf32>
    %c16_i32 = arith.constant 16 : i32
    %13 = tpu.dynamic_rotate %1 by %c16_i32 dim 1 : vector<8x512xf32>, i32 -> vector<8x512xf32>
    %14 = vector.extract_strided_slice %0 {offsets = [1, 0], sizes = [1, 512], strides = [1, 1]} : vector<9x512xf32> to vector<1x512xf32>
    %15 = vector.broadcast %14 : vector<1x512xf32> to vector<8x512xf32>
    %16 = arith.mulf %13, %15 : vector<8x512xf32>
    %c1 = arith.constant 1 : index
    %c0_8 = arith.constant 0 : index
    %c0_9 = arith.constant 0 : index
    %17 = vector.load %arg3[%c1, %c0_8, %c0_9] : memref<9x32x8xf32, #tpu.memory_space<vmem>>, vector<1x32x8xf32>
    %18 = vector.shape_cast %17 : vector<1x32x8xf32> to vector<32x8xf32>
    %cst_10 = arith.constant dense<0.000000e+00> : vector<32x512xf32>
    %19 = tpu.matmul %18, %16, %cst_10 {dimension_numbers = #tpu.dot_dimension_numbers<[1], [0], [0], [1], [0, 0, 1, 1], [], []>} : vector<32x8xf32>, vector<8x512xf32>, vector<32x512xf32> -> vector<32x512xf32>
    %20 = arith.addf %12, %19 : vector<32x512xf32>
    %c15_i32 = arith.constant 15 : i32
    %21 = tpu.dynamic_rotate %1 by %c15_i32 dim 1 : vector<8x512xf32>, i32 -> vector<8x512xf32>
    %22 = vector.extract_strided_slice %0 {offsets = [2, 0], sizes = [1, 512], strides = [1, 1]} : vector<9x512xf32> to vector<1x512xf32>
    %23 = vector.broadcast %22 : vector<1x512xf32> to vector<8x512xf32>
    %24 = arith.mulf %21, %23 : vector<8x512xf32>
    %c2 = arith.constant 2 : index
    %c0_11 = arith.constant 0 : index
    %c0_12 = arith.constant 0 : index
    %25 = vector.load %arg3[%c2, %c0_11, %c0_12] : memref<9x32x8xf32, #tpu.memory_space<vmem>>, vector<1x32x8xf32>
    %26 = vector.shape_cast %25 : vector<1x32x8xf32> to vector<32x8xf32>
    %cst_13 = arith.constant dense<0.000000e+00> : vector<32x512xf32>
    %27 = tpu.matmul %26, %24, %cst_13 {dimension_numbers = #tpu.dot_dimension_numbers<[1], [0], [0], [1], [0, 0, 1, 1], [], []>} : vector<32x8xf32>, vector<8x512xf32>, vector<32x512xf32> -> vector<32x512xf32>
    %28 = arith.addf %20, %27 : vector<32x512xf32>
    %c1_i32 = arith.constant 1 : i32
    %29 = tpu.dynamic_rotate %1 by %c1_i32 dim 1 : vector<8x512xf32>, i32 -> vector<8x512xf32>
    %30 = vector.extract_strided_slice %0 {offsets = [3, 0], sizes = [1, 512], strides = [1, 1]} : vector<9x512xf32> to vector<1x512xf32>
    %31 = vector.broadcast %30 : vector<1x512xf32> to vector<8x512xf32>
    %32 = arith.mulf %29, %31 : vector<8x512xf32>
    %c3 = arith.constant 3 : index
    %c0_14 = arith.constant 0 : index
    %c0_15 = arith.constant 0 : index
    %33 = vector.load %arg3[%c3, %c0_14, %c0_15] : memref<9x32x8xf32, #tpu.memory_space<vmem>>, vector<1x32x8xf32>
    %34 = vector.shape_cast %33 : vector<1x32x8xf32> to vector<32x8xf32>
    %cst_16 = arith.constant dense<0.000000e+00> : vector<32x512xf32>
    %35 = tpu.matmul %34, %32, %cst_16 {dimension_numbers = #tpu.dot_dimension_numbers<[1], [0], [0], [1], [0, 0, 1, 1], [], []>} : vector<32x8xf32>, vector<8x512xf32>, vector<32x512xf32> -> vector<32x512xf32>
    %36 = arith.addf %28, %35 : vector<32x512xf32>
    %c4 = arith.constant 4 : index
    %c0_17 = arith.constant 0 : index
    %c0_18 = arith.constant 0 : index
    %37 = vector.load %arg3[%c4, %c0_17, %c0_18] : memref<9x32x8xf32, #tpu.memory_space<vmem>>, vector<1x32x8xf32>
    %38 = vector.shape_cast %37 : vector<1x32x8xf32> to vector<32x8xf32>
    %cst_19 = arith.constant dense<0.000000e+00> : vector<32x512xf32>
    %39 = tpu.matmul %38, %1, %cst_19 {dimension_numbers = #tpu.dot_dimension_numbers<[1], [0], [0], [1], [0, 0, 1, 1], [], []>} : vector<32x8xf32>, vector<8x512xf32>, vector<32x512xf32> -> vector<32x512xf32>
    %40 = arith.addf %36, %39 : vector<32x512xf32>
    %c511_i32 = arith.constant 511 : i32
    %41 = tpu.dynamic_rotate %1 by %c511_i32 dim 1 : vector<8x512xf32>, i32 -> vector<8x512xf32>
    %42 = vector.extract_strided_slice %0 {offsets = [5, 0], sizes = [1, 512], strides = [1, 1]} : vector<9x512xf32> to vector<1x512xf32>
    %43 = vector.broadcast %42 : vector<1x512xf32> to vector<8x512xf32>
    %44 = arith.mulf %41, %43 : vector<8x512xf32>
    %c5 = arith.constant 5 : index
    %c0_20 = arith.constant 0 : index
    %c0_21 = arith.constant 0 : index
    %45 = vector.load %arg3[%c5, %c0_20, %c0_21] : memref<9x32x8xf32, #tpu.memory_space<vmem>>, vector<1x32x8xf32>
    %46 = vector.shape_cast %45 : vector<1x32x8xf32> to vector<32x8xf32>
    %cst_22 = arith.constant dense<0.000000e+00> : vector<32x512xf32>
    %47 = tpu.matmul %46, %44, %cst_22 {dimension_numbers = #tpu.dot_dimension_numbers<[1], [0], [0], [1], [0, 0, 1, 1], [], []>} : vector<32x8xf32>, vector<8x512xf32>, vector<32x512xf32> -> vector<32x512xf32>
    %48 = arith.addf %40, %47 : vector<32x512xf32>
    %c497_i32 = arith.constant 497 : i32
    %49 = tpu.dynamic_rotate %1 by %c497_i32 dim 1 : vector<8x512xf32>, i32 -> vector<8x512xf32>
    %50 = vector.extract_strided_slice %0 {offsets = [6, 0], sizes = [1, 512], strides = [1, 1]} : vector<9x512xf32> to vector<1x512xf32>
    %51 = vector.broadcast %50 : vector<1x512xf32> to vector<8x512xf32>
    %52 = arith.mulf %49, %51 : vector<8x512xf32>
    %c6 = arith.constant 6 : index
    %c0_23 = arith.constant 0 : index
    %c0_24 = arith.constant 0 : index
    %53 = vector.load %arg3[%c6, %c0_23, %c0_24] : memref<9x32x8xf32, #tpu.memory_space<vmem>>, vector<1x32x8xf32>
    %54 = vector.shape_cast %53 : vector<1x32x8xf32> to vector<32x8xf32>
    %cst_25 = arith.constant dense<0.000000e+00> : vector<32x512xf32>
    %55 = tpu.matmul %54, %52, %cst_25 {dimension_numbers = #tpu.dot_dimension_numbers<[1], [0], [0], [1], [0, 0, 1, 1], [], []>} : vector<32x8xf32>, vector<8x512xf32>, vector<32x512xf32> -> vector<32x512xf32>
    %56 = arith.addf %48, %55 : vector<32x512xf32>
    %c496_i32 = arith.constant 496 : i32
    %57 = tpu.dynamic_rotate %1 by %c496_i32 dim 1 : vector<8x512xf32>, i32 -> vector<8x512xf32>
    %58 = vector.extract_strided_slice %0 {offsets = [7, 0], sizes = [1, 512], strides = [1, 1]} : vector<9x512xf32> to vector<1x512xf32>
    %59 = vector.broadcast %58 : vector<1x512xf32> to vector<8x512xf32>
    %60 = arith.mulf %57, %59 : vector<8x512xf32>
    %c7 = arith.constant 7 : index
    %c0_26 = arith.constant 0 : index
    %c0_27 = arith.constant 0 : index
    %61 = vector.load %arg3[%c7, %c0_26, %c0_27] : memref<9x32x8xf32, #tpu.memory_space<vmem>>, vector<1x32x8xf32>
    %62 = vector.shape_cast %61 : vector<1x32x8xf32> to vector<32x8xf32>
    %cst_28 = arith.constant dense<0.000000e+00> : vector<32x512xf32>
    %63 = tpu.matmul %62, %60, %cst_28 {dimension_numbers = #tpu.dot_dimension_numbers<[1], [0], [0], [1], [0, 0, 1, 1], [], []>} : vector<32x8xf32>, vector<8x512xf32>, vector<32x512xf32> -> vector<32x512xf32>
    %64 = arith.addf %56, %63 : vector<32x512xf32>
    %c495_i32 = arith.constant 495 : i32
    %65 = tpu.dynamic_rotate %1 by %c495_i32 dim 1 : vector<8x512xf32>, i32 -> vector<8x512xf32>
    %66 = vector.extract_strided_slice %0 {offsets = [8, 0], sizes = [1, 512], strides = [1, 1]} : vector<9x512xf32> to vector<1x512xf32>
    %67 = vector.broadcast %66 : vector<1x512xf32> to vector<8x512xf32>
    %68 = arith.mulf %65, %67 : vector<8x512xf32>
    %c8 = arith.constant 8 : index
    %c0_29 = arith.constant 0 : index
    %c0_30 = arith.constant 0 : index
    %69 = vector.load %arg3[%c8, %c0_29, %c0_30] : memref<9x32x8xf32, #tpu.memory_space<vmem>>, vector<1x32x8xf32>
    %70 = vector.shape_cast %69 : vector<1x32x8xf32> to vector<32x8xf32>
    %cst_31 = arith.constant dense<0.000000e+00> : vector<32x512xf32>
    %71 = tpu.matmul %70, %68, %cst_31 {dimension_numbers = #tpu.dot_dimension_numbers<[1], [0], [0], [1], [0, 0, 1, 1], [], []>} : vector<32x8xf32>, vector<8x512xf32>, vector<32x512xf32> -> vector<32x512xf32>
    %72 = arith.addf %64, %71 : vector<32x512xf32>
    %cst_32 = arith.constant 0.000000e+00 : f32
    %73 = vector.broadcast %cst_32 : f32 to vector<32x512xf32>
    %74 = arith.maximumf %72, %73 : vector<32x512xf32>
    %c0_33 = arith.constant 0 : index
    %c0_34 = arith.constant 0 : index
    %75 = vector.load %arg6[%c0_33, %c0_34] : memref<8x1xf32, #tpu.memory_space<vmem>>, vector<8x1xf32>
    %76 = vector.shape_cast %75 : vector<8x1xf32> to vector<8x1xf32>
    %77 = vector.broadcast %76 : vector<8x1xf32> to vector<8x512xf32>
    %c17_i32_35 = arith.constant 17 : i32
    %78 = tpu.dynamic_rotate %74 by %c17_i32_35 dim 1 : vector<32x512xf32>, i32 -> vector<32x512xf32>
    %79 = vector.extract_strided_slice %0 {offsets = [0, 0], sizes = [1, 512], strides = [1, 1]} : vector<9x512xf32> to vector<1x512xf32>
    %80 = vector.broadcast %79 : vector<1x512xf32> to vector<32x512xf32>
    %81 = arith.mulf %78, %80 : vector<32x512xf32>
    %c0_36 = arith.constant 0 : index
    %c0_37 = arith.constant 0 : index
    %c0_38 = arith.constant 0 : index
    %82 = vector.load %arg5[%c0_36, %c0_37, %c0_38] : memref<9x8x32xf32, #tpu.memory_space<vmem>>, vector<1x8x32xf32>
    %83 = vector.shape_cast %82 : vector<1x8x32xf32> to vector<8x32xf32>
    %cst_39 = arith.constant dense<0.000000e+00> : vector<8x512xf32>
    %84 = tpu.matmul %83, %81, %cst_39 {dimension_numbers = #tpu.dot_dimension_numbers<[1], [0], [0], [1], [0, 0, 1, 1], [], []>} : vector<8x32xf32>, vector<32x512xf32>, vector<8x512xf32> -> vector<8x512xf32>
    %85 = arith.addf %77, %84 : vector<8x512xf32>
    %c16_i32_40 = arith.constant 16 : i32
    %86 = tpu.dynamic_rotate %74 by %c16_i32_40 dim 1 : vector<32x512xf32>, i32 -> vector<32x512xf32>
    %87 = vector.extract_strided_slice %0 {offsets = [1, 0], sizes = [1, 512], strides = [1, 1]} : vector<9x512xf32> to vector<1x512xf32>
    %88 = vector.broadcast %87 : vector<1x512xf32> to vector<32x512xf32>
    %89 = arith.mulf %86, %88 : vector<32x512xf32>
    %c1_41 = arith.constant 1 : index
    %c0_42 = arith.constant 0 : index
    %c0_43 = arith.constant 0 : index
    %90 = vector.load %arg5[%c1_41, %c0_42, %c0_43] : memref<9x8x32xf32, #tpu.memory_space<vmem>>, vector<1x8x32xf32>
    %91 = vector.shape_cast %90 : vector<1x8x32xf32> to vector<8x32xf32>
    %cst_44 = arith.constant dense<0.000000e+00> : vector<8x512xf32>
    %92 = tpu.matmul %91, %89, %cst_44 {dimension_numbers = #tpu.dot_dimension_numbers<[1], [0], [0], [1], [0, 0, 1, 1], [], []>} : vector<8x32xf32>, vector<32x512xf32>, vector<8x512xf32> -> vector<8x512xf32>
    %93 = arith.addf %85, %92 : vector<8x512xf32>
    %c15_i32_45 = arith.constant 15 : i32
    %94 = tpu.dynamic_rotate %74 by %c15_i32_45 dim 1 : vector<32x512xf32>, i32 -> vector<32x512xf32>
    %95 = vector.extract_strided_slice %0 {offsets = [2, 0], sizes = [1, 512], strides = [1, 1]} : vector<9x512xf32> to vector<1x512xf32>
    %96 = vector.broadcast %95 : vector<1x512xf32> to vector<32x512xf32>
    %97 = arith.mulf %94, %96 : vector<32x512xf32>
    %c2_46 = arith.constant 2 : index
    %c0_47 = arith.constant 0 : index
    %c0_48 = arith.constant 0 : index
    %98 = vector.load %arg5[%c2_46, %c0_47, %c0_48] : memref<9x8x32xf32, #tpu.memory_space<vmem>>, vector<1x8x32xf32>
    %99 = vector.shape_cast %98 : vector<1x8x32xf32> to vector<8x32xf32>
    %cst_49 = arith.constant dense<0.000000e+00> : vector<8x512xf32>
    %100 = tpu.matmul %99, %97, %cst_49 {dimension_numbers = #tpu.dot_dimension_numbers<[1], [0], [0], [1], [0, 0, 1, 1], [], []>} : vector<8x32xf32>, vector<32x512xf32>, vector<8x512xf32> -> vector<8x512xf32>
    %101 = arith.addf %93, %100 : vector<8x512xf32>
    %c1_i32_50 = arith.constant 1 : i32
    %102 = tpu.dynamic_rotate %74 by %c1_i32_50 dim 1 : vector<32x512xf32>, i32 -> vector<32x512xf32>
    %103 = vector.extract_strided_slice %0 {offsets = [3, 0], sizes = [1, 512], strides = [1, 1]} : vector<9x512xf32> to vector<1x512xf32>
    %104 = vector.broadcast %103 : vector<1x512xf32> to vector<32x512xf32>
    %105 = arith.mulf %102, %104 : vector<32x512xf32>
    %c3_51 = arith.constant 3 : index
    %c0_52 = arith.constant 0 : index
    %c0_53 = arith.constant 0 : index
    %106 = vector.load %arg5[%c3_51, %c0_52, %c0_53] : memref<9x8x32xf32, #tpu.memory_space<vmem>>, vector<1x8x32xf32>
    %107 = vector.shape_cast %106 : vector<1x8x32xf32> to vector<8x32xf32>
    %cst_54 = arith.constant dense<0.000000e+00> : vector<8x512xf32>
    %108 = tpu.matmul %107, %105, %cst_54 {dimension_numbers = #tpu.dot_dimension_numbers<[1], [0], [0], [1], [0, 0, 1, 1], [], []>} : vector<8x32xf32>, vector<32x512xf32>, vector<8x512xf32> -> vector<8x512xf32>
    %109 = arith.addf %101, %108 : vector<8x512xf32>
    %c4_55 = arith.constant 4 : index
    %c0_56 = arith.constant 0 : index
    %c0_57 = arith.constant 0 : index
    %110 = vector.load %arg5[%c4_55, %c0_56, %c0_57] : memref<9x8x32xf32, #tpu.memory_space<vmem>>, vector<1x8x32xf32>
    %111 = vector.shape_cast %110 : vector<1x8x32xf32> to vector<8x32xf32>
    %cst_58 = arith.constant dense<0.000000e+00> : vector<8x512xf32>
    %112 = tpu.matmul %111, %74, %cst_58 {dimension_numbers = #tpu.dot_dimension_numbers<[1], [0], [0], [1], [0, 0, 1, 1], [], []>} : vector<8x32xf32>, vector<32x512xf32>, vector<8x512xf32> -> vector<8x512xf32>
    %113 = arith.addf %109, %112 : vector<8x512xf32>
    %c511_i32_59 = arith.constant 511 : i32
    %114 = tpu.dynamic_rotate %74 by %c511_i32_59 dim 1 : vector<32x512xf32>, i32 -> vector<32x512xf32>
    %115 = vector.extract_strided_slice %0 {offsets = [5, 0], sizes = [1, 512], strides = [1, 1]} : vector<9x512xf32> to vector<1x512xf32>
    %116 = vector.broadcast %115 : vector<1x512xf32> to vector<32x512xf32>
    %117 = arith.mulf %114, %116 : vector<32x512xf32>
    %c5_60 = arith.constant 5 : index
    %c0_61 = arith.constant 0 : index
    %c0_62 = arith.constant 0 : index
    %118 = vector.load %arg5[%c5_60, %c0_61, %c0_62] : memref<9x8x32xf32, #tpu.memory_space<vmem>>, vector<1x8x32xf32>
    %119 = vector.shape_cast %118 : vector<1x8x32xf32> to vector<8x32xf32>
    %cst_63 = arith.constant dense<0.000000e+00> : vector<8x512xf32>
    %120 = tpu.matmul %119, %117, %cst_63 {dimension_numbers = #tpu.dot_dimension_numbers<[1], [0], [0], [1], [0, 0, 1, 1], [], []>} : vector<8x32xf32>, vector<32x512xf32>, vector<8x512xf32> -> vector<8x512xf32>
    %121 = arith.addf %113, %120 : vector<8x512xf32>
    %c497_i32_64 = arith.constant 497 : i32
    %122 = tpu.dynamic_rotate %74 by %c497_i32_64 dim 1 : vector<32x512xf32>, i32 -> vector<32x512xf32>
    %123 = vector.extract_strided_slice %0 {offsets = [6, 0], sizes = [1, 512], strides = [1, 1]} : vector<9x512xf32> to vector<1x512xf32>
    %124 = vector.broadcast %123 : vector<1x512xf32> to vector<32x512xf32>
    %125 = arith.mulf %122, %124 : vector<32x512xf32>
    %c6_65 = arith.constant 6 : index
    %c0_66 = arith.constant 0 : index
    %c0_67 = arith.constant 0 : index
    %126 = vector.load %arg5[%c6_65, %c0_66, %c0_67] : memref<9x8x32xf32, #tpu.memory_space<vmem>>, vector<1x8x32xf32>
    %127 = vector.shape_cast %126 : vector<1x8x32xf32> to vector<8x32xf32>
    %cst_68 = arith.constant dense<0.000000e+00> : vector<8x512xf32>
    %128 = tpu.matmul %127, %125, %cst_68 {dimension_numbers = #tpu.dot_dimension_numbers<[1], [0], [0], [1], [0, 0, 1, 1], [], []>} : vector<8x32xf32>, vector<32x512xf32>, vector<8x512xf32> -> vector<8x512xf32>
    %129 = arith.addf %121, %128 : vector<8x512xf32>
    %c496_i32_69 = arith.constant 496 : i32
    %130 = tpu.dynamic_rotate %74 by %c496_i32_69 dim 1 : vector<32x512xf32>, i32 -> vector<32x512xf32>
    %131 = vector.extract_strided_slice %0 {offsets = [7, 0], sizes = [1, 512], strides = [1, 1]} : vector<9x512xf32> to vector<1x512xf32>
    %132 = vector.broadcast %131 : vector<1x512xf32> to vector<32x512xf32>
    %133 = arith.mulf %130, %132 : vector<32x512xf32>
    %c7_70 = arith.constant 7 : index
    %c0_71 = arith.constant 0 : index
    %c0_72 = arith.constant 0 : index
    %134 = vector.load %arg5[%c7_70, %c0_71, %c0_72] : memref<9x8x32xf32, #tpu.memory_space<vmem>>, vector<1x8x32xf32>
    %135 = vector.shape_cast %134 : vector<1x8x32xf32> to vector<8x32xf32>
    %cst_73 = arith.constant dense<0.000000e+00> : vector<8x512xf32>
    %136 = tpu.matmul %135, %133, %cst_73 {dimension_numbers = #tpu.dot_dimension_numbers<[1], [0], [0], [1], [0, 0, 1, 1], [], []>} : vector<8x32xf32>, vector<32x512xf32>, vector<8x512xf32> -> vector<8x512xf32>
    %137 = arith.addf %129, %136 : vector<8x512xf32>
    %c495_i32_74 = arith.constant 495 : i32
    %138 = tpu.dynamic_rotate %74 by %c495_i32_74 dim 1 : vector<32x512xf32>, i32 -> vector<32x512xf32>
    %139 = vector.extract_strided_slice %0 {offsets = [8, 0], sizes = [1, 512], strides = [1, 1]} : vector<9x512xf32> to vector<1x512xf32>
    %140 = vector.broadcast %139 : vector<1x512xf32> to vector<32x512xf32>
    %141 = arith.mulf %138, %140 : vector<32x512xf32>
    %c8_75 = arith.constant 8 : index
    %c0_76 = arith.constant 0 : index
    %c0_77 = arith.constant 0 : index
    %142 = vector.load %arg5[%c8_75, %c0_76, %c0_77] : memref<9x8x32xf32, #tpu.memory_space<vmem>>, vector<1x8x32xf32>
    %143 = vector.shape_cast %142 : vector<1x8x32xf32> to vector<8x32xf32>
    %cst_78 = arith.constant dense<0.000000e+00> : vector<8x512xf32>
    %144 = tpu.matmul %143, %141, %cst_78 {dimension_numbers = #tpu.dot_dimension_numbers<[1], [0], [0], [1], [0, 0, 1, 1], [], []>} : vector<8x32xf32>, vector<32x512xf32>, vector<8x512xf32> -> vector<8x512xf32>
    %145 = arith.addf %137, %144 : vector<8x512xf32>
    %146 = vector.extract_strided_slice %145 {offsets = [0, 0], sizes = [4, 512], strides = [1, 1]} : vector<8x512xf32> to vector<4x512xf32>
    %147 = vector.extract_strided_slice %145 {offsets = [4, 0], sizes = [4, 512], strides = [1, 1]} : vector<8x512xf32> to vector<4x512xf32>
    %c0_79 = arith.constant 0 : index
    %c0_80 = arith.constant 0 : index
    %148 = vector.load %arg1[%c0_79, %c0_80] : memref<4x512xf32, #tpu.memory_space<vmem>>, vector<4x512xf32>
    %149 = vector.extract_strided_slice %148 {offsets = [0, 0], sizes = [4, 256], strides = [1, 1]} : vector<4x512xf32> to vector<4x256xf32>
    %cst_81 = arith.constant dense<0.000000e+00> : vector<4xf32>
    %150 = vector.multi_reduction <add>, %149, %cst_81 [1] : vector<4x256xf32> to vector<4xf32>
    %151 = vector.shape_cast %150 : vector<4xf32> to vector<4x1xf32>
    %cst_82 = arith.constant 3.906250e-03 : f32
    %152 = vector.broadcast %cst_82 : f32 to vector<4x1xf32>
    %153 = arith.mulf %151, %152 : vector<4x1xf32>
    %154 = arith.mulf %151, %151 : vector<4x1xf32>
    %155 = arith.mulf %153, %153 : vector<4x1xf32>
    %156 = arith.subf %154, %155 : vector<4x1xf32>
    %cst_83 = arith.constant 3.906250e-03 : f32
    %157 = vector.broadcast %cst_83 : f32 to vector<4x1xf32>
    %158 = arith.mulf %156, %157 : vector<4x1xf32>
    %159 = math.rsqrt %158 : vector<4x1xf32>
    %160 = vector.broadcast %153 : vector<4x1xf32> to vector<4x256xf32>
    %161 = arith.subf %149, %160 : vector<4x256xf32>
    %162 = vector.broadcast %159 : vector<4x1xf32> to vector<4x256xf32>
    %163 = arith.mulf %161, %162 : vector<4x256xf32>
    %164 = vector.extract_strided_slice %146 {offsets = [0, 0], sizes = [4, 256], strides = [1, 1]} : vector<4x512xf32> to vector<4x256xf32>
    %cst_84 = arith.constant 1.000000e+00 : f32
    %165 = vector.broadcast %cst_84 : f32 to vector<4x256xf32>
    %166 = arith.addf %165, %164 : vector<4x256xf32>
    %167 = arith.mulf %163, %166 : vector<4x256xf32>
    %168 = vector.extract_strided_slice %147 {offsets = [0, 0], sizes = [4, 256], strides = [1, 1]} : vector<4x512xf32> to vector<4x256xf32>
    %169 = arith.addf %167, %168 : vector<4x256xf32>
    %c0_85 = arith.constant 0 : index
    %c0_86 = arith.constant 0 : index
    %170 = vector.load %arg7[%c0_85, %c0_86] : memref<4x512xf32, #tpu.memory_space<vmem>>, vector<4x256xf32>
    tpu.vector_store %arg7[%c0_85, %c0_86], %169 {strides = array<i32>} : memref<4x512xf32, #tpu.memory_space<vmem>>, vector<4x256xf32>,
    %171 = vector.extract_strided_slice %148 {offsets = [0, 256], sizes = [4, 256], strides = [1, 1]} : vector<4x512xf32> to vector<4x256xf32>
    %cst_87 = arith.constant dense<0.000000e+00> : vector<4xf32>
    %172 = vector.multi_reduction <add>, %171, %cst_87 [1] : vector<4x256xf32> to vector<4xf32>
    %173 = vector.shape_cast %172 : vector<4xf32> to vector<4x1xf32>
    %cst_88 = arith.constant 3.906250e-03 : f32
    %174 = vector.broadcast %cst_88 : f32 to vector<4x1xf32>
    %175 = arith.mulf %173, %174 : vector<4x1xf32>
    %176 = arith.mulf %173, %173 : vector<4x1xf32>
    %177 = arith.mulf %175, %175 : vector<4x1xf32>
    %178 = arith.subf %176, %177 : vector<4x1xf32>
    %cst_89 = arith.constant 3.906250e-03 : f32
    %179 = vector.broadcast %cst_89 : f32 to vector<4x1xf32>
    %180 = arith.mulf %178, %179 : vector<4x1xf32>
    %181 = math.rsqrt %180 : vector<4x1xf32>
    %182 = vector.broadcast %175 : vector<4x1xf32> to vector<4x256xf32>
    %183 = arith.subf %171, %182 : vector<4x256xf32>
    %184 = vector.broadcast %181 : vector<4x1xf32> to vector<4x256xf32>
    %185 = arith.mulf %183, %184 : vector<4x256xf32>
    %186 = vector.extract_strided_slice %146 {offsets = [0, 256], sizes = [4, 256], strides = [1, 1]} : vector<4x512xf32> to vector<4x256xf32>
    %cst_90 = arith.constant 1.000000e+00 : f32
    %187 = vector.broadcast %cst_90 : f32 to vector<4x256xf32>
    %188 = arith.addf %187, %186 : vector<4x256xf32>
    %189 = arith.mulf %185, %188 : vector<4x256xf32>
    %190 = vector.extract_strided_slice %147 {offsets = [0, 256], sizes = [4, 256], strides = [1, 1]} : vector<4x512xf32> to vector<4x256xf32>
    %191 = arith.addf %189, %190 : vector<4x256xf32>
    %c0_91 = arith.constant 0 : index
    %c256 = arith.constant 256 : index
    %192 = vector.load %arg7[%c0_91, %c256] : memref<4x512xf32, #tpu.memory_space<vmem>>, vector<4x256xf32>
    tpu.vector_store %arg7[%c0_91, %c256], %191 {strides = array<i32>} : memref<4x512xf32, #tpu.memory_space<vmem>>, vector<4x256xf32>,
    return
  }
}

</mosaic_0001>

<llo_original>
// kernel: spade_forward.1
$region0: #{spade_forward.1}
  #allocation0 [shape = 'u32[]', space=smem, size = 0x4, offset = 0x4, fixed_abs, tag = 'smem constant byte address 0x4 - core index']
  #allocation1 [shape = 'u32[144,128]{1,0:T(1,128)}', space=vmem, size = 0x12000, scoped, tag = 'internal scratch']
  %s0 = inlined_call_operand.vmem [shape: f32[9,512], index: 0, kind: input, shape index: {}]
  %s1 = inlined_call_operand.vmem [shape: f32[4,512], index: 1, kind: input, shape index: {}]
  %s2 = inlined_call_operand.vmem [shape: f32[8,512], index: 2, kind: input, shape index: {}]
  %s3 = inlined_call_operand.vmem [shape: f32[9,32,8], index: 3, kind: input, shape index: {}]
  %s4 = inlined_call_operand.vmem [shape: f32[32,1], index: 4, kind: input, shape index: {}]
  %s5 = inlined_call_operand.vmem [shape: f32[9,8,32], index: 5, kind: input, shape index: {}]
  %s6 = inlined_call_operand.vmem [shape: f32[8,1], index: 6, kind: input, shape index: {}]
  %s7 = inlined_call_operand.vmem [shape: f32[4,512], index: 7, kind: output, shape index: {}]
  %s8 = sld [smem:[#allocation0]]
  $region38: #{spade_forward.1} parent=0
    _
  %s10 = ssub.s32 1, %s8
  %s11 = scalar_select 0, %s10, %s8
  // Predicated region
  $region2: #{spade_forward.1} parent=0 // pred_check
    _
  $region3: #{spade_forward.1} parent=0 // pred_check_branch
    %13 = sbr.rel (0) target = $region5
  $region4: #{spade_forward.1} parent=0 // pred_region
    _
  $region5: #{spade_forward.1} parent=0 // pred_fallthru
    _
  // Predicated region
  $region6: #{spade_forward.1} parent=0 // pred_check
    _
  $region7: #{spade_forward.1} parent=0 // pred_check_branch
    %15 = sbr.rel (0) target = $region9
  $region8: #{spade_forward.1} parent=0 // pred_region
    _
  $region9: #{spade_forward.1} parent=0 // pred_fallthru
    _
  // Predicated region
  $region10: #{spade_forward.1} parent=0 // pred_check
    _
  $region11: #{spade_forward.1} parent=0 // pred_check_branch
    %17 = sbr.rel (0) target = $region13
  $region12: #{spade_forward.1} parent=0 // pred_region
    _
  $region13: #{spade_forward.1} parent=0 // pred_fallthru
    _
  // Predicated region
  $region14: #{spade_forward.1} parent=0 // pred_check
    _
  $region15: #{spade_forward.1} parent=0 // pred_check_branch
    %19 = sbr.rel (0) target = $region17
  $region16: #{spade_forward.1} parent=0 // pred_region
    _
  $region17: #{spade_forward.1} parent=0 // pred_fallthru
    _
  // Predicated region
  $region18: #{spade_forward.1} parent=0 // pred_check
    _
  $region19: #{spade_forward.1} parent=0 // pred_check_branch
    %21 = sbr.rel (0) target = $region21
  $region20: #{spade_forward.1} parent=0 // pred_region
    _
  $region21: #{spade_forward.1} parent=0 // pred_fallthru
    _
  // Predicated region
  $region22: #{spade_forward.1} parent=0 // pred_check
    _
  $region23: #{spade_forward.1} parent=0 // pred_check_branch
    %23 = sbr.rel (0) target = $region25
  $region24: #{spade_forward.1} parent=0 // pred_region
    _
  $region25: #{spade_forward.1} parent=0 // pred_fallthru
    _
  // Predicated region
  $region26: #{spade_forward.1} parent=0 // pred_check
    _
  $region27: #{spade_forward.1} parent=0 // pred_check_branch
    %25 = sbr.rel (0) target = $region29
  $region28: #{spade_forward.1} parent=0 // pred_region
    _
  $region29: #{spade_forward.1} parent=0 // pred_fallthru
    _
  %v26 = vld [vmem:[%s0] sm:$0xff]
  %v27 = vld [vmem:[%s0 + $0x8] sm:$0xff]
  %v28 = vld [vmem:[%s0 + $0x10] sm:$0xff]
  %v29 = vld [vmem:[%s0 + $0x18] sm:$0xff]
  %v30 = vld [vmem:[%s0 + $0x20] sm:$0x1]
  %v31 = vld [vmem:[%s0 + $0x28] sm:$0x1]
  %v32 = vld [vmem:[%s0 + $0x30] sm:$0x1]
  %v33 = vld [vmem:[%s0 + $0x38] sm:$0x1]
  %v34 = vld [vmem:[%s2] sm:$0xff]
  %v35 = vld [vmem:[%s2 + $0x8] sm:$0xff]
  %v36 = vld [vmem:[%s2 + $0x10] sm:$0xff]
  %v37 = vld [vmem:[%s2 + $0x18] sm:$0xff]
  %v38 = vld [vmem:[%s4] sm:$0xff]
  %v39 = vld [vmem:[%s4 + $0x8] sm:$0xff]
  %v40 = vld [vmem:[%s4 + $0x10] sm:$0xff]
  %v41 = vld [vmem:[%s4 + $0x18] sm:$0xff]
  %43 = vset.pattern.permute.xlu0 0
  %44 = vperm.xlu0 %43, %v38
  %v45 = vpop.permute.xlu0 %44
  %48 = vset.pattern.permute.xlu0 0
  %49 = vperm.xlu0 %48, %v39
  %v50 = vpop.permute.xlu0 %49
  %53 = vset.pattern.permute.xlu0 0
  %54 = vperm.xlu0 %53, %v40
  %v55 = vpop.permute.xlu0 %54
  %58 = vset.pattern.permute.xlu0 0
  %59 = vperm.xlu0 %58, %v41
  %v60 = vpop.permute.xlu0 %59
  %62 = vrot.lane.b32.xlu0 %v34, 17
  %v63 = vpop.permute.xlu0 %62
  %64 = vrot.lane.b32.xlu0 %v35, 17
  %v65 = vpop.permute.xlu0 %64
  %66 = vrot.lane.b32.xlu0 %v36, 17
  %v67 = vpop.permute.xlu0 %66
  %68 = vrot.lane.b32.xlu0 %v37, 17
  %v69 = vpop.permute.xlu0 %68
  %v70 = vlaneseq
  %v71 = vand.u32 %v70, 127
  %vm72 = vcmp.lt.s32.totalorder %v71, 17
  %v73 = vsel %vm72, %v67, %v69
  %v74 = vsel %vm72, %v65, %v67
  %v75 = vsel %vm72, %v63, %v65
  %v76 = vsel %vm72, %v69, %v63
  %v77 = vlaneseq
  %v78 = vshrl.u32 %v77, 7
  %v79 = vsub.s32 0, %v78
  %v80 = vrot.slane %v26, %v79
  %v81 = vlaneseq
  %v82 = vshrl.u32 %v81, 7
  %v83 = vsub.s32 0, %v82
  %v84 = vrot.slane %v27, %v83
  %v85 = vlaneseq
  %v86 = vshrl.u32 %v85, 7
  %v87 = vsub.s32 0, %v86
  %v88 = vrot.slane %v28, %v87
  %v89 = vlaneseq
  %v90 = vshrl.u32 %v89, 7
  %v91 = vsub.s32 0, %v90
  %v92 = vrot.slane %v29, %v91
  %v93 = vmul.f32 %v76, %v80
  %v94 = vmul.f32 %v75, %v84
  %v95 = vmul.f32 %v74, %v88
  %v96 = vmul.f32 %v73, %v92
  %v97 = vld [vmem:[%s3] sm:$0xff]
  %v98 = vld [vmem:[%s3 + $0x8] sm:$0xff]
  %v99 = vld [vmem:[%s3 + $0x10] sm:$0xff]
  %v100 = vld [vmem:[%s3 + $0x18] sm:$0xff]
  %vm101 = vcmask 64512
  %v103 = vsel %vm101, %v97, 0
  %v106 = vsel %vm101, %v98, 0
  %v109 = vsel %vm101, %v99, 0
  %v112 = vsel %vm101, %v100, 0
  %114 = vmatprep.subr.mxu0 0.0
  %115 = vmatpush1.msra.mxu0 0.0
  %116 = vmatprep.subr.mxu0 0.0
  %117 = vmatpush1.msra.mxu0 0.0
  %118 = vmatprep.subr.mxu0 0.0
  %119 = vmatpush1.msra.mxu0 0.0
  %120 = vmatprep.subr.mxu0 0.0
  %121 = vmatpush1.msra.mxu0 0.0
  %122 = vmatprep.subr.mxu0 0.0
  %123 = vmatpush1.msra.mxu0 0.0
  %124 = vmatprep.subr.mxu0 0.0
  %125 = vmatpush1.msra.mxu0 0.0
  %126 = vmatprep.subr.mxu0 0.0
  %127 = vmatpush1.msra.mxu0 0.0
  %128 = vmatprep.subr.mxu0 0.0
  %129 = vmatpush1.msra.mxu0 0.0
  %130 = vmatprep.subr.mxu0 0.0
  %131 = vmatpush1.msra.mxu0 0.0
  %132 = vmatprep.subr.mxu0 0.0
  %133 = vmatpush1.msra.mxu0 0.0
  %134 = vmatprep.subr.mxu0 0.0
  %135 = vmatpush1.msra.mxu0 0.0
  %136 = vmatprep.subr.mxu0 0.0
  %137 = vmatpush1.msra.mxu0 0.0
  %138 = vmatprep.subr.mxu0 0.0
  %139 = vmatpush1.msra.mxu0 0.0
  %140 = vmatprep.subr.mxu0 0.0
  %141 = vmatpush1.msra.mxu0 0.0
  %142 = vmatprep.subr.mxu0 0.0
  %143 = vmatpush1.msra.mxu0 0.0
  %144 = vmatprep.subr.mxu0 %v94
  %145 = vmatpush1.msra.mxu0 %v93
  %146 = vmatprep.subr.mxu0 0.0
  %147 = vmatpush2.msra.mxu0 0.0
  %148 = vmatprep.subr.mxu0 0.0
  %149 = vmatpush2.msra.mxu0 0.0
  %150 = vmatprep.subr.mxu0 0.0
  %151 = vmatpush2.msra.mxu0 0.0
  %152 = vmatprep.subr.mxu0 0.0
  %153 = vmatpush2.msra.mxu0 0.0
  %154 = vmatprep.subr.mxu0 0.0
  %155 = vmatpush2.msra.mxu0 0.0
  %156 = vmatprep.subr.mxu0 0.0
  %157 = vmatpush2.msra.mxu0 0.0
  %158 = vmatprep.subr.mxu0 0.0
  %159 = vmatpush2.msra.mxu0 0.0
  %160 = vmatprep.subr.mxu0 0.0
  %161 = vmatpush2.msra.mxu0 0.0
  %162 = vmatprep.subr.mxu0 0.0
  %163 = vmatpush2.msra.mxu0 0.0
  %164 = vmatprep.subr.mxu0 0.0
  %165 = vmatpush2.msra.mxu0 0.0
  %166 = vmatprep.subr.mxu0 0.0
  %167 = vmatpush2.msra.mxu0 0.0
  %168 = vmatprep.subr.mxu0 0.0
  %169 = vmatpush2.msra.mxu0 0.0
  %170 = vmatprep.subr.mxu0 0.0
  %171 = vmatpush2.msra.mxu0 0.0
  %172 = vmatprep.subr.mxu0 0.0
  %173 = vmatpush2.msra.mxu0 0.0
  %174 = vmatprep.subr.mxu0 0.0
  %175 = vmatpush2.msra.mxu0 0.0
  %176 = vmatprep.subr.mxu0 0.0
  %177 = vmatpush2.msra.mxu0 0.0
  %178 = vmatprep.mubr.f32.mxu0 0.0
  %179 = vmatmul.mubr.f32.gmra.mxu0 %v103
  %v180 = vpop.f32.mrf.mxu0
  %v181 = vadd.f32 0.0, %v180
  %v182 = vpop.f32.mrf.mxu0
  %v183 = vadd.f32 0.0, %v182
  %184 = vmatprep.mubr.f32.mxu0 0.0
  %185 = vmatmul.mubr.f32.gmra.mxu0 %v106
  %v186 = vpop.f32.mrf.mxu0
  %v187 = vadd.f32 0.0, %v186
  %v188 = vpop.f32.mrf.mxu0
  %v189 = vadd.f32 0.0, %v188
  %190 = vmatprep.mubr.f32.mxu0 0.0
  %191 = vmatmul.mubr.f32.gmra.mxu0 %v109
  %v192 = vpop.f32.mrf.mxu0
  %v193 = vadd.f32 0.0, %v192
  %v194 = vpop.f32.mrf.mxu0
  %v195 = vadd.f32 0.0, %v194
  %196 = vmatprep.mubr.f32.mxu0 0.0
  %197 = vmatmul.mubr.f32.gmra.mxu0 %v112
  %v198 = vpop.f32.mrf.mxu0
  %v199 = vadd.f32 0.0, %v198
  %v200 = vpop.f32.mrf.mxu0
  %v201 = vadd.f32 0.0, %v200
  %202 = vdwg.mxu0
  %203 = vmatprep.subr.mxu0 0.0
  %204 = vmatpush1.msra.mxu0 0.0
  %205 = vmatprep.subr.mxu0 0.0
  %206 = vmatpush1.msra.mxu0 0.0
  %207 = vmatprep.subr.mxu0 0.0
  %208 = vmatpush1.msra.mxu0 0.0
  %209 = vmatprep.subr.mxu0 0.0
  %210 = vmatpush1.msra.mxu0 0.0
  %211 = vmatprep.subr.mxu0 0.0
  %212 = vmatpush1.msra.mxu0 0.0
  %213 = vmatprep.subr.mxu0 0.0
  %214 = vmatpush1.msra.mxu0 0.0
  %215 = vmatprep.subr.mxu0 0.0
  %216 = vmatpush1.msra.mxu0 0.0
  %217 = vmatprep.subr.mxu0 0.0
  %218 = vmatpush1.msra.mxu0 0.0
  %219 = vmatprep.subr.mxu0 0.0
  %220 = vmatpush1.msra.mxu0 0.0
  %221 = vmatprep.subr.mxu0 0.0
  %222 = vmatpush1.msra.mxu0 0.0
  %223 = vmatprep.subr.mxu0 0.0
  %224 = vmatpush1.msra.mxu0 0.0
  %225 = vmatprep.subr.mxu0 0.0
  %226 = vmatpush1.msra.mxu0 0.0
  %227 = vmatprep.subr.mxu0 0.0
  %228 = vmatpush1.msra.mxu0 0.0
  %229 = vmatprep.subr.mxu0 0.0
  %230 = vmatpush1.msra.mxu0 0.0
  %231 = vmatprep.subr.mxu0 0.0
  %232 = vmatpush1.msra.mxu0 0.0
  %233 = vmatprep.subr.mxu0 %v96
  %234 = vmatpush1.msra.mxu0 %v95
  %235 = vmatprep.subr.mxu0 0.0
  %236 = vmatpush2.msra.mxu0 0.0
  %237 = vmatprep.subr.mxu0 0.0
  %238 = vmatpush2.msra.mxu0 0.0
  %239 = vmatprep.subr.mxu0 0.0
  %240 = vmatpush2.msra.mxu0 0.0
  %241 = vmatprep.subr.mxu0 0.0
  %242 = vmatpush2.msra.mxu0 0.0
  %243 = vmatprep.subr.mxu0 0.0
  %244 = vmatpush2.msra.mxu0 0.0
  %245 = vmatprep.subr.mxu0 0.0
  %246 = vmatpush2.msra.mxu0 0.0
  %247 = vmatprep.subr.mxu0 0.0
  %248 = vmatpush2.msra.mxu0 0.0
  %249 = vmatprep.subr.mxu0 0.0
  %250 = vmatpush2.msra.mxu0 0.0
  %251 = vmatprep.subr.mxu0 0.0
  %252 = vmatpush2.msra.mxu0 0.0
  %253 = vmatprep.subr.mxu0 0.0
  %254 = vmatpush2.msra.mxu0 0.0
  %255 = vmatprep.subr.mxu0 0.0
  %256 = vmatpush2.msra.mxu0 0.0
  %257 = vmatprep.subr.mxu0 0.0
  %258 = vmatpush2.msra.mxu0 0.0
  %259 = vmatprep.subr.mxu0 0.0
  %260 = vmatpush2.msra.mxu0 0.0
  %261 = vmatprep.subr.mxu0 0.0
  %262 = vmatpush2.msra.mxu0 0.0
  %263 = vmatprep.subr.mxu0 0.0
  %264 = vmatpush2.msra.mxu0 0.0
  %265 = vmatprep.subr.mxu0 0.0
  %266 = vmatpush2.msra.mxu0 0.0
  %267 = vmatprep.mubr.f32.mxu0 0.0
  %268 = vmatmul.mubr.f32.gmra.mxu0 %v103
  %v269 = vpop.f32.mrf.mxu0
  %v270 = vadd.f32 0.0, %v269
  %v271 = vpop.f32.mrf.mxu0
  %v272 = vadd.f32 0.0, %v271
  %273 = vmatprep.mubr.f32.mxu0 0.0
  %274 = vmatmul.mubr.f32.gmra.mxu0 %v106
  %v275 = vpop.f32.mrf.mxu0
  %v276 = vadd.f32 0.0, %v275
  %v277 = vpop.f32.mrf.mxu0
  %v278 = vadd.f32 0.0, %v277
  %279 = vmatprep.mubr.f32.mxu0 0.0
  %280 = vmatmul.mubr.f32.gmra.mxu0 %v109
  %v281 = vpop.f32.mrf.mxu0
  %v282 = vadd.f32 0.0, %v281
  %v283 = vpop.f32.mrf.mxu0
  %v284 = vadd.f32 0.0, %v283
  %285 = vmatprep.mubr.f32.mxu0 0.0
  %286 = vmatmul.mubr.f32.gmra.mxu0 %v112
  %v287 = vpop.f32.mrf.mxu0
  %v288 = vadd.f32 0.0, %v287
  %v289 = vpop.f32.mrf.mxu0
  %v290 = vadd.f32 0.0, %v289
  %291 = vdwg.mxu0
  %v292 = vadd.f32 %v45, %v181
  %v293 = vadd.f32 %v45, %v183
  %v294 = vadd.f32 %v45, %v270
  %v295 = vadd.f32 %v45, %v272
  %v296 = vadd.f32 %v50, %v187
  %v297 = vadd.f32 %v50, %v189
  %v298 = vadd.f32 %v50, %v276
  %v299 = vadd.f32 %v50, %v278
  %v300 = vadd.f32 %v55, %v193
  %v301 = vadd.f32 %v55, %v195
  %v302 = vadd.f32 %v55, %v282
  %v303 = vadd.f32 %v55, %v284
  %v304 = vadd.f32 %v60, %v199
  %v305 = vadd.f32 %v60, %v201
  %v306 = vadd.f32 %v60, %v288
  %v307 = vadd.f32 %v60, %v290
  %308 = vrot.lane.b32.xlu0 %v34, 16
  %v309 = vpop.permute.xlu0 %308
  %310 = vrot.lane.b32.xlu0 %v35, 16
  %v311 = vpop.permute.xlu0 %310
  %312 = vrot.lane.b32.xlu0 %v36, 16
  %v313 = vpop.permute.xlu0 %312
  %314 = vrot.lane.b32.xlu0 %v37, 16
  %v315 = vpop.permute.xlu0 %314
  %vm316 = vcmp.lt.s32.totalorder %v71, 16
  %v317 = vsel %vm316, %v313, %v315
  %v318 = vsel %vm316, %v311, %v313
  %v319 = vsel %vm316, %v309, %v311
  %v320 = vsel %vm316, %v315, %v309
  %v321 = vlaneseq
  %v322 = vshrl.u32 %v321, 7
  %v323 = vsub.s32 1, %v322
  %v324 = vrot.slane %v26, %v323
  %v325 = vlaneseq
  %v326 = vshrl.u32 %v325, 7
  %v327 = vsub.s32 1, %v326
  %v328 = vrot.slane %v27, %v327
  %v329 = vlaneseq
  %v330 = vshrl.u32 %v329, 7
  %v331 = vsub.s32 1, %v330
  %v332 = vrot.slane %v28, %v331
  %v333 = vlaneseq
  %v334 = vshrl.u32 %v333, 7
  %v335 = vsub.s32 1, %v334
  %v336 = vrot.slane %v29, %v335
  %v337 = vmul.f32 %v320, %v324
  %v338 = vmul.f32 %v319, %v328
  %v339 = vmul.f32 %v318, %v332
  %v340 = vmul.f32 %v317, %v336
  %s341 = scalar_lea.vmem %s3, 32
  %v342 = vld [vmem:[%s341] sm:$0xff]
  %v343 = vld [vmem:[%s341 + $0x8] sm:$0xff]
  %v344 = vld [vmem:[%s341 + $0x10] sm:$0xff]
  %v345 = vld [vmem:[%s341 + $0x18] sm:$0xff]
  %v347 = vsel %vm101, %v342, 0
  %v350 = vsel %vm101, %v343, 0
  %v353 = vsel %vm101, %v344, 0
  %v356 = vsel %vm101, %v345, 0
  %358 = vmatprep.subr.mxu0 0.0
  %359 = vmatpush1.msra.mxu0 0.0
  %360 = vmatprep.subr.mxu0 0.0
  %361 = vmatpush1.msra.mxu0 0.0
  %362 = vmatprep.subr.mxu0 0.0
  %363 = vmatpush1.msra.mxu0 0.0
  %364 = vmatprep.subr.mxu0 0.0
  %365 = vmatpush1.msra.mxu0 0.0
  %366 = vmatprep.subr.mxu0 0.0
  %367 = vmatpush1.msra.mxu0 0.0
  %368 = vmatprep.subr.mxu0 0.0
  %369 = vmatpush1.msra.mxu0 0.0
  %370 = vmatprep.subr.mxu0 0.0
  %371 = vmatpush1.msra.mxu0 0.0
  %372 = vmatprep.subr.mxu0 0.0
  %373 = vmatpush1.msra.mxu0 0.0
  %374 = vmatprep.subr.mxu0 0.0
  %375 = vmatpush1.msra.mxu0 0.0
  %376 = vmatprep.subr.mxu0 0.0
  %377 = vmatpush1.msra.mxu0 0.0
  %378 = vmatprep.subr.mxu0 0.0
  %379 = vmatpush1.msra.mxu0 0.0
  %380 = vmatprep.subr.mxu0 0.0
  %381 = vmatpush1.msra.mxu0 0.0
  %382 = vmatprep.subr.mxu0 0.0
  %383 = vmatpush1.msra.mxu0 0.0
  %384 = vmatprep.subr.mxu0 0.0
  %385 = vmatpush1.msra.mxu0 0.0
  %386 = vmatprep.subr.mxu0 0.0
  %387 = vmatpush1.msra.mxu0 0.0
  %388 = vmatprep.subr.mxu0 %v338
  %389 = vmatpush1.msra.mxu0 %v337
  %390 = vmatprep.subr.mxu0 0.0
  %391 = vmatpush2.msra.mxu0 0.0
  %392 = vmatprep.subr.mxu0 0.0
  %393 = vmatpush2.msra.mxu0 0.0
  %394 = vmatprep.subr.mxu0 0.0
  %395 = vmatpush2.msra.mxu0 0.0
  %396 = vmatprep.subr.mxu0 0.0
  %397 = vmatpush2.msra.mxu0 0.0
  %398 = vmatprep.subr.mxu0 0.0
  %399 = vmatpush2.msra.mxu0 0.0
  %400 = vmatprep.subr.mxu0 0.0
  %401 = vmatpush2.msra.mxu0 0.0
  %402 = vmatprep.subr.mxu0 0.0
  %403 = vmatpush2.msra.mxu0 0.0
  %404 = vmatprep.subr.mxu0 0.0
  %405 = vmatpush2.msra.mxu0 0.0
  %406 = vmatprep.subr.mxu0 0.0
  %407 = vmatpush2.msra.mxu0 0.0
  %408 = vmatprep.subr.mxu0 0.0
  %409 = vmatpush2.msra.mxu0 0.0
  %410 = vmatprep.subr.mxu0 0.0
  %411 = vmatpush2.msra.mxu0 0.0
  %412 = vmatprep.subr.mxu0 0.0
  %413 = vmatpush2.msra.mxu0 0.0
  %414 = vmatprep.subr.mxu0 0.0
  %415 = vmatpush2.msra.mxu0 0.0
  %416 = vmatprep.subr.mxu0 0.0
  %417 = vmatpush2.msra.mxu0 0.0
  %418 = vmatprep.subr.mxu0 0.0
  %419 = vmatpush2.msra.mxu0 0.0
  %420 = vmatprep.subr.mxu0 0.0
  %421 = vmatpush2.msra.mxu0 0.0
  %422 = vmatprep.mubr.f32.mxu0 0.0
  %423 = vmatmul.mubr.f32.gmra.mxu0 %v347
  %v424 = vpop.f32.mrf.mxu0
  %v425 = vadd.f32 0.0, %v424
  %v426 = vpop.f32.mrf.mxu0
  %v427 = vadd.f32 0.0, %v426
  %428 = vmatprep.mubr.f32.mxu0 0.0
  %429 = vmatmul.mubr.f32.gmra.mxu0 %v350
  %v430 = vpop.f32.mrf.mxu0
  %v431 = vadd.f32 0.0, %v430
  %v432 = vpop.f32.mrf.mxu0
  %v433 = vadd.f32 0.0, %v432
  %434 = vmatprep.mubr.f32.mxu0 0.0
  %435 = vmatmul.mubr.f32.gmra.mxu0 %v353
  %v436 = vpop.f32.mrf.mxu0
  %v437 = vadd.f32 0.0, %v436
  %v438 = vpop.f32.mrf.mxu0
  %v439 = vadd.f32 0.0, %v438
  %440 = vmatprep.mubr.f32.mxu0 0.0
  %441 = vmatmul.mubr.f32.gmra.mxu0 %v356
  %v442 = vpop.f32.mrf.mxu0
  %v443 = vadd.f32 0.0, %v442
  %v444 = vpop.f32.mrf.mxu0
  %v445 = vadd.f32 0.0, %v444
  %446 = vdwg.mxu0
  %447 = vmatprep.subr.mxu0 0.0
  %448 = vmatpush1.msra.mxu0 0.0
  %449 = vmatprep.subr.mxu0 0.0
  %450 = vmatpush1.msra.mxu0 0.0
  %451 = vmatprep.subr.mxu0 0.0
  %452 = vmatpush1.msra.mxu0 0.0
  %453 = vmatprep.subr.mxu0 0.0
  %454 = vmatpush1.msra.mxu0 0.0
  %455 = vmatprep.subr.mxu0 0.0
  %456 = vmatpush1.msra.mxu0 0.0
  %457 = vmatprep.subr.mxu0 0.0
  %458 = vmatpush1.msra.mxu0 0.0
  %459 = vmatprep.subr.mxu0 0.0
  %460 = vmatpush1.msra.mxu0 0.0
  %461 = vmatprep.subr.mxu0 0.0
  %462 = vmatpush1.msra.mxu0 0.0
  %463 = vmatprep.subr.mxu0 0.0
  %464 = vmatpush1.msra.mxu0 0.0
  %465 = vmatprep.subr.mxu0 0.0
  %466 = vmatpush1.msra.mxu0 0.0
  %467 = vmatprep.subr.mxu0 0.0
  %468 = vmatpush1.msra.mxu0 0.0
  %469 = vmatprep.subr.mxu0 0.0
  %470 = vmatpush1.msra.mxu0 0.0
  %471 = vmatprep.subr.mxu0 0.0
  %472 = vmatpush1.msra.mxu0 0.0
  %473 = vmatprep.subr.mxu0 0.0
  %474 = vmatpush1.msra.mxu0 0.0
  %475 = vmatprep.subr.mxu0 0.0
  %476 = vmatpush1.msra.mxu0 0.0
  %477 = vmatprep.subr.mxu0 %v340
  %478 = vmatpush1.msra.mxu0 %v339
  %479 = vmatprep.subr.mxu0 0.0
  %480 = vmatpush2.msra.mxu0 0.0
  %481 = vmatprep.subr.mxu0 0.0
  %482 = vmatpush2.msra.mxu0 0.0
  %483 = vmatprep.subr.mxu0 0.0
  %484 = vmatpush2.msra.mxu0 0.0
  %485 = vmatprep.subr.mxu0 0.0
  %486 = vmatpush2.msra.mxu0 0.0
  %487 = vmatprep.subr.mxu0 0.0
  %488 = vmatpush2.msra.mxu0 0.0
  %489 = vmatprep.subr.mxu0 0.0
  %490 = vmatpush2.msra.mxu0 0.0
  %491 = vmatprep.subr.mxu0 0.0
  %492 = vmatpush2.msra.mxu0 0.0
  %493 = vmatprep.subr.mxu0 0.0
  %494 = vmatpush2.msra.mxu0 0.0
  %495 = vmatprep.subr.mxu0 0.0
  %496 = vmatpush2.msra.mxu0 0.0
  %497 = vmatprep.subr.mxu0 0.0
  %498 = vmatpush2.msra.mxu0 0.0
  %499 = vmatprep.subr.mxu0 0.0
  %500 = vmatpush2.msra.mxu0 0.0
  %501 = vmatprep.subr.mxu0 0.0
  %502 = vmatpush2.msra.mxu0 0.0
  %503 = vmatprep.subr.mxu0 0.0
  %504 = vmatpush2.msra.mxu0 0.0
  %505 = vmatprep.subr.mxu0 0.0
  %506 = vmatpush2.msra.mxu0 0.0
  %507 = vmatprep.subr.mxu0 0.0
  %508 = vmatpush2.msra.mxu0 0.0
  %509 = vmatprep.subr.mxu0 0.0
  %510 = vmatpush2.msra.mxu0 0.0
  %511 = vmatprep.mubr.f32.mxu0 0.0
  %512 = vmatmul.mubr.f32.gmra.mxu0 %v347
  %v513 = vpop.f32.mrf.mxu0
  %v514 = vadd.f32 0.0, %v513
  %v515 = vpop.f32.mrf.mxu0
  %v516 = vadd.f32 0.0, %v515
  %517 = vmatprep.mubr.f32.mxu0 0.0
  %518 = vmatmul.mubr.f32.gmra.mxu0 %v350
  %v519 = vpop.f32.mrf.mxu0
  %v520 = vadd.f32 0.0, %v519
  %v521 = vpop.f32.mrf.mxu0
  %v522 = vadd.f32 0.0, %v521
  %523 = vmatprep.mubr.f32.mxu0 0.0
  %524 = vmatmul.mubr.f32.gmra.mxu0 %v353
  %v525 = vpop.f32.mrf.mxu0
  %v526 = vadd.f32 0.0, %v525
  %v527 = vpop.f32.mrf.mxu0
  %v528 = vadd.f32 0.0, %v527
  %529 = vmatprep.mubr.f32.mxu0 0.0
  %530 = vmatmul.mubr.f32.gmra.mxu0 %v356
  %v531 = vpop.f32.mrf.mxu0
  %v532 = vadd.f32 0.0, %v531
  %v533 = vpop.f32.mrf.mxu0
  %v534 = vadd.f32 0.0, %v533
  %535 = vdwg.mxu0
  %v536 = vadd.f32 %v292, %v425
  %v537 = vadd.f32 %v293, %v427
  %v538 = vadd.f32 %v294, %v514
  %v539 = vadd.f32 %v295, %v516
  %v540 = vadd.f32 %v296, %v431
  %v541 = vadd.f32 %v297, %v433
  %v542 = vadd.f32 %v298, %v520
  %v543 = vadd.f32 %v299, %v522
  %v544 = vadd.f32 %v300, %v437
  %v545 = vadd.f32 %v301, %v439
  %v546 = vadd.f32 %v302, %v526
  %v547 = vadd.f32 %v303, %v528
  %v548 = vadd.f32 %v304, %v443
  %v549 = vadd.f32 %v305, %v445
  %v550 = vadd.f32 %v306, %v532
  %v551 = vadd.f32 %v307, %v534
  %552 = vrot.lane.b32.xlu0 %v34, 15
  %v553 = vpop.permute.xlu0 %552
  %554 = vrot.lane.b32.xlu0 %v35, 15
  %v555 = vpop.permute.xlu0 %554
  %556 = vrot.lane.b32.xlu0 %v36, 15
  %v557 = vpop.permute.xlu0 %556
  %558 = vrot.lane.b32.xlu0 %v37, 15
  %v559 = vpop.permute.xlu0 %558
  %vm560 = vcmp.lt.s32.totalorder %v71, 15
  %v561 = vsel %vm560, %v557, %v559
  %v562 = vsel %vm560, %v555, %v557
  %v563 = vsel %vm560, %v553, %v555
  %v564 = vsel %vm560, %v559, %v553
  %v565 = vlaneseq
  %v566 = vshrl.u32 %v565, 7
  %v567 = vsub.s32 2, %v566
  %v568 = vrot.slane %v26, %v567
  %v569 = vlaneseq
  %v570 = vshrl.u32 %v569, 7
  %v571 = vsub.s32 2, %v570
  %v572 = vrot.slane %v27, %v571
  %v573 = vlaneseq
  %v574 = vshrl.u32 %v573, 7
  %v575 = vsub.s32 2, %v574
  %v576 = vrot.slane %v28, %v575
  %v577 = vlaneseq
  %v578 = vshrl.u32 %v577, 7
  %v579 = vsub.s32 2, %v578
  %v580 = vrot.slane %v29, %v579
  %v581 = vmul.f32 %v564, %v568
  %v582 = vmul.f32 %v563, %v572
  %v583 = vmul.f32 %v562, %v576
  %v584 = vmul.f32 %v561, %v580
  %s585 = scalar_lea.vmem %s3, 64
  %v586 = vld [vmem:[%s585] sm:$0xff]
  %v587 = vld [vmem:[%s585 + $0x8] sm:$0xff]
  %v588 = vld [vmem:[%s585 + $0x10] sm:$0xff]
  %v589 = vld [vmem:[%s585 + $0x18] sm:$0xff]
  %v591 = vsel %vm101, %v586, 0
  %v594 = vsel %vm101, %v587, 0
  %v597 = vsel %vm101, %v588, 0
  %v600 = vsel %vm101, %v589, 0
  %602 = vmatprep.subr.mxu0 0.0
  %603 = vmatpush1.msra.mxu0 0.0
  %604 = vmatprep.subr.mxu0 0.0
  %605 = vmatpush1.msra.mxu0 0.0
  %606 = vmatprep.subr.mxu0 0.0
  %607 = vmatpush1.msra.mxu0 0.0
  %608 = vmatprep.subr.mxu0 0.0
  %609 = vmatpush1.msra.mxu0 0.0
  %610 = vmatprep.subr.mxu0 0.0
  %611 = vmatpush1.msra.mxu0 0.0
  %612 = vmatprep.subr.mxu0 0.0
  %613 = vmatpush1.msra.mxu0 0.0
  %614 = vmatprep.subr.mxu0 0.0
  %615 = vmatpush1.msra.mxu0 0.0
  %616 = vmatprep.subr.mxu0 0.0
  %617 = vmatpush1.msra.mxu0 0.0
  %618 = vmatprep.subr.mxu0 0.0
  %619 = vmatpush1.msra.mxu0 0.0
  %620 = vmatprep.subr.mxu0 0.0
  %621 = vmatpush1.msra.mxu0 0.0
  %622 = vmatprep.subr.mxu0 0.0
  %623 = vmatpush1.msra.mxu0 0.0
  %624 = vmatprep.subr.mxu0 0.0
  %625 = vmatpush1.msra.mxu0 0.0
  %626 = vmatprep.subr.mxu0 0.0
  %627 = vmatpush1.msra.mxu0 0.0
  %628 = vmatprep.subr.mxu0 0.0
  %629 = vmatpush1.msra.mxu0 0.0
  %630 = vmatprep.subr.mxu0 0.0
  %631 = vmatpush1.msra.mxu0 0.0
  %632 = vmatprep.subr.mxu0 %v582
  %633 = vmatpush1.msra.mxu0 %v581
  %634 = vmatprep.subr.mxu0 0.0
  %635 = vmatpush2.msra.mxu0 0.0
  %636 = vmatprep.subr.mxu0 0.0
  %637 = vmatpush2.msra.mxu0 0.0
  %638 = vmatprep.subr.mxu0 0.0
  %639 = vmatpush2.msra.mxu0 0.0
  %640 = vmatprep.subr.mxu0 0.0
  %641 = vmatpush2.msra.mxu0 0.0
  %642 = vmatprep.subr.mxu0 0.0
  %643 = vmatpush2.msra.mxu0 0.0
  %644 = vmatprep.subr.mxu0 0.0
  %645 = vmatpush2.msra.mxu0 0.0
  %646 = vmatprep.subr.mxu0 0.0
  %647 = vmatpush2.msra.mxu0 0.0
  %648 = vmatprep.subr.mxu0 0.0
  %649 = vmatpush2.msra.mxu0 0.0
  %650 = vmatprep.subr.mxu0 0.0
  %651 = vmatpush2.msra.mxu0 0.0
  %652 = vmatprep.subr.mxu0 0.0
  %653 = vmatpush2.msra.mxu0 0.0
  %654 = vmatprep.subr.mxu0 0.0
  %655 = vmatpush2.msra.mxu0 0.0
  %656 = vmatprep.subr.mxu0 0.0
  %657 = vmatpush2.msra.mxu0 0.0
  %658 = vmatprep.subr.mxu0 0.0
  %659 = vmatpush2.msra.mxu0 0.0
  %660 = vmatprep.subr.mxu0 0.0
  %661 = vmatpush2.msra.mxu0 0.0
  %662 = vmatprep.subr.mxu0 0.0
  %663 = vmatpush2.msra.mxu0 0.0
  %664 = vmatprep.subr.mxu0 0.0
  %665 = vmatpush2.msra.mxu0 0.0
  %666 = vmatprep.mubr.f32.mxu0 0.0
  %667 = vmatmul.mubr.f32.gmra.mxu0 %v591
  %v668 = vpop.f32.mrf.mxu0
  %v669 = vadd.f32 0.0, %v668
  %v670 = vpop.f32.mrf.mxu0
  %v671 = vadd.f32 0.0, %v670
  %672 = vmatprep.mubr.f32.mxu0 0.0
  %673 = vmatmul.mubr.f32.gmra.mxu0 %v594
  %v674 = vpop.f32.mrf.mxu0
  %v675 = vadd.f32 0.0, %v674
  %v676 = vpop.f32.mrf.mxu0
  %v677 = vadd.f32 0.0, %v676
  %678 = vmatprep.mubr.f32.mxu0 0.0
  %679 = vmatmul.mubr.f32.gmra.mxu0 %v597
  %v680 = vpop.f32.mrf.mxu0
  %v681 = vadd.f32 0.0, %v680
  %v682 = vpop.f32.mrf.mxu0
  %v683 = vadd.f32 0.0, %v682
  %684 = vmatprep.mubr.f32.mxu0 0.0
  %685 = vmatmul.mubr.f32.gmra.mxu0 %v600
  %v686 = vpop.f32.mrf.mxu0
  %v687 = vadd.f32 0.0, %v686
  %v688 = vpop.f32.mrf.mxu0
  %v689 = vadd.f32 0.0, %v688
  %690 = vdwg.mxu0
  %691 = vmatprep.subr.mxu0 0.0
  %692 = vmatpush1.msra.mxu0 0.0
  %693 = vmatprep.subr.mxu0 0.0
  %694 = vmatpush1.msra.mxu0 0.0
  %695 = vmatprep.subr.mxu0 0.0
  %696 = vmatpush1.msra.mxu0 0.0
  %697 = vmatprep.subr.mxu0 0.0
  %698 = vmatpush1.msra.mxu0 0.0
  %699 = vmatprep.subr.mxu0 0.0
  %700 = vmatpush1.msra.mxu0 0.0
  %701 = vmatprep.subr.mxu0 0.0
  %702 = vmatpush1.msra.mxu0 0.0
  %703 = vmatprep.subr.mxu0 0.0
  %704 = vmatpush1.msra.mxu0 0.0
  %705 = vmatprep.subr.mxu0 0.0
  %706 = vmatpush1.msra.mxu0 0.0
  %707 = vmatprep.subr.mxu0 0.0
  %708 = vmatpush1.msra.mxu0 0.0
  %709 = vmatprep.subr.mxu0 0.0
  %710 = vmatpush1.msra.mxu0 0.0
  %711 = vmatprep.subr.mxu0 0.0
  %712 = vmatpush1.msra.mxu0 0.0
  %713 = vmatprep.subr.mxu0 0.0
  %714 = vmatpush1.msra.mxu0 0.0
  %715 = vmatprep.subr.mxu0 0.0
  %716 = vmatpush1.msra.mxu0 0.0
  %717 = vmatprep.subr.mxu0 0.0
  %718 = vmatpush1.msra.mxu0 0.0
  %719 = vmatprep.subr.mxu0 0.0
  %720 = vmatpush1.msra.mxu0 0.0
  %721 = vmatprep.subr.mxu0 %v584
  %722 = vmatpush1.msra.mxu0 %v583
  %723 = vmatprep.subr.mxu0 0.0
  %724 = vmatpush2.msra.mxu0 0.0
  %725 = vmatprep.subr.mxu0 0.0
  %726 = vmatpush2.msra.mxu0 0.0
  %727 = vmatprep.subr.mxu0 0.0
  %728 = vmatpush2.msra.mxu0 0.0
  %729 = vmatprep.subr.mxu0 0.0
  %730 = vmatpush2.msra.mxu0 0.0
  %731 = vmatprep.subr.mxu0 0.0
  %732 = vmatpush2.msra.mxu0 0.0
  %733 = vmatprep.subr.mxu0 0.0
  %734 = vmatpush2.msra.mxu0 0.0
  %735 = vmatprep.subr.mxu0 0.0
  %736 = vmatpush2.msra.mxu0 0.0
  %737 = vmatprep.subr.mxu0 0.0
  %738 = vmatpush2.msra.mxu0 0.0
  %739 = vmatprep.subr.mxu0 0.0
  %740 = vmatpush2.msra.mxu0 0.0
  %741 = vmatprep.subr.mxu0 0.0
  %742 = vmatpush2.msra.mxu0 0.0
  %743 = vmatprep.subr.mxu0 0.0
  %744 = vmatpush2.msra.mxu0 0.0
  %745 = vmatprep.subr.mxu0 0.0
  %746 = vmatpush2.msra.mxu0 0.0
  %747 = vmatprep.subr.mxu0 0.0
  %748 = vmatpush2.msra.mxu0 0.0
  %749 = vmatprep.subr.mxu0 0.0
  %750 = vmatpush2.msra.mxu0 0.0
  %751 = vmatprep.subr.mxu0 0.0
  %752 = vmatpush2.msra.mxu0 0.0
  %753 = vmatprep.subr.mxu0 0.0
  %754 = vmatpush2.msra.mxu0 0.0
  %755 = vmatprep.mubr.f32.mxu0 0.0
  %756 = vmatmul.mubr.f32.gmra.mxu0 %v591
  %v757 = vpop.f32.mrf.mxu0
  %v758 = vadd.f32 0.0, %v757
  %v759 = vpop.f32.mrf.mxu0
  %v760 = vadd.f32 0.0, %v759
  %761 = vmatprep.mubr.f32.mxu0 0.0
  %762 = vmatmul.mubr.f32.gmra.mxu0 %v594
  %v763 = vpop.f32.mrf.mxu0
  %v764 = vadd.f32 0.0, %v763
  %v765 = vpop.f32.mrf.mxu0
  %v766 = vadd.f32 0.0, %v765
  %767 = vmatprep.mubr.f32.mxu0 0.0
  %768 = vmatmul.mubr.f32.gmra.mxu0 %v597
  %v769 = vpop.f32.mrf.mxu0
  %v770 = vadd.f32 0.0, %v769
  %v771 = vpop.f32.mrf.mxu0
  %v772 = vadd.f32 0.0, %v771
  %773 = vmatprep.mubr.f32.mxu0 0.0
  %774 = vmatmul.mubr.f32.gmra.mxu0 %v600
  %v775 = vpop.f32.mrf.mxu0
  %v776 = vadd.f32 0.0, %v775
  %v777 = vpop.f32.mrf.mxu0
  %v778 = vadd.f32 0.0, %v777
  %779 = vdwg.mxu0
  %v780 = vadd.f32 %v536, %v669
  %v781 = vadd.f32 %v537, %v671
  %v782 = vadd.f32 %v538, %v758
  %v783 = vadd.f32 %v539, %v760
  %v784 = vadd.f32 %v540, %v675
  %v785 = vadd.f32 %v541, %v677
  %v786 = vadd.f32 %v542, %v764
  %v787 = vadd.f32 %v543, %v766
  %v788 = vadd.f32 %v544, %v681
  %v789 = vadd.f32 %v545, %v683
  %v790 = vadd.f32 %v546, %v770
  %v791 = vadd.f32 %v547, %v772
  %v792 = vadd.f32 %v548, %v687
  %v793 = vadd.f32 %v549, %v689
  %v794 = vadd.f32 %v550, %v776
  %v795 = vadd.f32 %v551, %v778
  %796 = vrot.lane.b32.xlu0 %v34, 1
  %v797 = vpop.permute.xlu0 %796
  %798 = vrot.lane.b32.xlu0 %v35, 1
  %v799 = vpop.permute.xlu0 %798
  %800 = vrot.lane.b32.xlu0 %v36, 1
  %v801 = vpop.permute.xlu0 %800
  %802 = vrot.lane.b32.xlu0 %v37, 1
  %v803 = vpop.permute.xlu0 %802
  %vm804 = vcmp.lt.s32.totalorder %v71, 1
  %v805 = vsel %vm804, %v801, %v803
  %v806 = vsel %vm804, %v799, %v801
  %v807 = vsel %vm804, %v797, %v799
  %v808 = vsel %vm804, %v803, %v797
  %v809 = vlaneseq
  %v810 = vshrl.u32 %v809, 7
  %v811 = vsub.s32 3, %v810
  %v812 = vrot.slane %v26, %v811
  %v813 = vlaneseq
  %v814 = vshrl.u32 %v813, 7
  %v815 = vsub.s32 3, %v814
  %v816 = vrot.slane %v27, %v815
  %v817 = vlaneseq
  %v818 = vshrl.u32 %v817, 7
  %v819 = vsub.s32 3, %v818
  %v820 = vrot.slane %v28, %v819
  %v821 = vlaneseq
  %v822 = vshrl.u32 %v821, 7
  %v823 = vsub.s32 3, %v822
  %v824 = vrot.slane %v29, %v823
  %v825 = vmul.f32 %v808, %v812
  %v826 = vmul.f32 %v807, %v816
  %v827 = vmul.f32 %v806, %v820
  %v828 = vmul.f32 %v805, %v824
  %s829 = scalar_lea.vmem %s3, 96
  %v830 = vld [vmem:[%s829] sm:$0xff]
  %v831 = vld [vmem:[%s829 + $0x8] sm:$0xff]
  %v832 = vld [vmem:[%s829 + $0x10] sm:$0xff]
  %v833 = vld [vmem:[%s829 + $0x18] sm:$0xff]
  %v835 = vsel %vm101, %v830, 0
  %v838 = vsel %vm101, %v831, 0
  %v841 = vsel %vm101, %v832, 0
  %v844 = vsel %vm101, %v833, 0
  %846 = vmatprep.subr.mxu0 0.0
  %847 = vmatpush1.msra.mxu0 0.0
  %848 = vmatprep.subr.mxu0 0.0
  %849 = vmatpush1.msra.mxu0 0.0
  %850 = vmatprep.subr.mxu0 0.0
  %851 = vmatpush1.msra.mxu0 0.0
  %852 = vmatprep.subr.mxu0 0.0
  %853 = vmatpush1.msra.mxu0 0.0
  %854 = vmatprep.subr.mxu0 0.0
  %855 = vmatpush1.msra.mxu0 0.0
  %856 = vmatprep.subr.mxu0 0.0
  %857 = vmatpush1.msra.mxu0 0.0
  %858 = vmatprep.subr.mxu0 0.0
  %859 = vmatpush1.msra.mxu0 0.0
  %860 = vmatprep.subr.mxu0 0.0
  %861 = vmatpush1.msra.mxu0 0.0
  %862 = vmatprep.subr.mxu0 0.0
  %863 = vmatpush1.msra.mxu0 0.0
  %864 = vmatprep.subr.mxu0 0.0
  %865 = vmatpush1.msra.mxu0 0.0
  %866 = vmatprep.subr.mxu0 0.0
  %867 = vmatpush1.msra.mxu0 0.0
  %868 = vmatprep.subr.mxu0 0.0
  %869 = vmatpush1.msra.mxu0 0.0
  %870 = vmatprep.subr.mxu0 0.0
  %871 = vmatpush1.msra.mxu0 0.0
  %872 = vmatprep.subr.mxu0 0.0
  %873 = vmatpush1.msra.mxu0 0.0
  %874 = vmatprep.subr.mxu0 0.0
  %875 = vmatpush1.msra.mxu0 0.0
  %876 = vmatprep.subr.mxu0 %v826
  %877 = vmatpush1.msra.mxu0 %v825
  %878 = vmatprep.subr.mxu0 0.0
  %879 = vmatpush2.msra.mxu0 0.0
  %880 = vmatprep.subr.mxu0 0.0
  %881 = vmatpush2.msra.mxu0 0.0
  %882 = vmatprep.subr.mxu0 0.0
  %883 = vmatpush2.msra.mxu0 0.0
  %884 = vmatprep.subr.mxu0 0.0
  %885 = vmatpush2.msra.mxu0 0.0
  %886 = vmatprep.subr.mxu0 0.0
  %887 = vmatpush2.msra.mxu0 0.0
  %888 = vmatprep.subr.mxu0 0.0
  %889 = vmatpush2.msra.mxu0 0.0
  %890 = vmatprep.subr.mxu0 0.0
  %891 = vmatpush2.msra.mxu0 0.0
  %892 = vmatprep.subr.mxu0 0.0
  %893 = vmatpush2.msra.mxu0 0.0
  %894 = vmatprep.subr.mxu0 0.0
  %895 = vmatpush2.msra.mxu0 0.0
  %896 = vmatprep.subr.mxu0 0.0
  %897 = vmatpush2.msra.mxu0 0.0
  %898 = vmatprep.subr.mxu0 0.0
  %899 = vmatpush2.msra.mxu0 0.0
  %900 = vmatprep.subr.mxu0 0.0
  %901 = vmatpush2.msra.mxu0 0.0
  %902 = vmatprep.subr.mxu0 0.0
  %903 = vmatpush2.msra.mxu0 0.0
  %904 = vmatprep.subr.mxu0 0.0
  %905 = vmatpush2.msra.mxu0 0.0
  %906 = vmatprep.subr.mxu0 0.0
  %907 = vmatpush2.msra.mxu0 0.0
  %908 = vmatprep.subr.mxu0 0.0
  %909 = vmatpush2.msra.mxu0 0.0
  %910 = vmatprep.mubr.f32.mxu0 0.0
  %911 = vmatmul.mubr.f32.gmra.mxu0 %v835
  %v912 = vpop.f32.mrf.mxu0
  %v913 = vadd.f32 0.0, %v912
  %v914 = vpop.f32.mrf.mxu0
  %v915 = vadd.f32 0.0, %v914
  %916 = vmatprep.mubr.f32.mxu0 0.0
  %917 = vmatmul.mubr.f32.gmra.mxu0 %v838
  %v918 = vpop.f32.mrf.mxu0
  %v919 = vadd.f32 0.0, %v918
  %v920 = vpop.f32.mrf.mxu0
  %v921 = vadd.f32 0.0, %v920
  %922 = vmatprep.mubr.f32.mxu0 0.0
  %923 = vmatmul.mubr.f32.gmra.mxu0 %v841
  %v924 = vpop.f32.mrf.mxu0
  %v925 = vadd.f32 0.0, %v924
  %v926 = vpop.f32.mrf.mxu0
  %v927 = vadd.f32 0.0, %v926
  %928 = vmatprep.mubr.f32.mxu0 0.0
  %929 = vmatmul.mubr.f32.gmra.mxu0 %v844
  %v930 = vpop.f32.mrf.mxu0
  %v931 = vadd.f32 0.0, %v930
  %v932 = vpop.f32.mrf.mxu0
  %v933 = vadd.f32 0.0, %v932
  %934 = vdwg.mxu0
  %935 = vmatprep.subr.mxu0 0.0
  %936 = vmatpush1.msra.mxu0 0.0
  %937 = vmatprep.subr.mxu0 0.0
  %938 = vmatpush1.msra.mxu0 0.0
  %939 = vmatprep.subr.mxu0 0.0
  %940 = vmatpush1.msra.mxu0 0.0
  %941 = vmatprep.subr.mxu0 0.0
  %942 = vmatpush1.msra.mxu0 0.0
  %943 = vmatprep.subr.mxu0 0.0
  %944 = vmatpush1.msra.mxu0 0.0
  %945 = vmatprep.subr.mxu0 0.0
  %946 = vmatpush1.msra.mxu0 0.0
  %947 = vmatprep.subr.mxu0 0.0
  %948 = vmatpush1.msra.mxu0 0.0
  %949 = vmatprep.subr.mxu0 0.0
  %950 = vmatpush1.msra.mxu0 0.0
  %951 = vmatprep.subr.mxu0 0.0
  %952 = vmatpush1.msra.mxu0 0.0
  %953 = vmatprep.subr.mxu0 0.0
  %954 = vmatpush1.msra.mxu0 0.0
  %955 = vmatprep.subr.mxu0 0.0
  %956 = vmatpush1.msra.mxu0 0.0
  %957 = vmatprep.subr.mxu0 0.0
  %958 = vmatpush1.msra.mxu0 0.0
  %959 = vmatprep.subr.mxu0 0.0
  %960 = vmatpush1.msra.mxu0 0.0
  %961 = vmatprep.subr.mxu0 0.0
  %962 = vmatpush1.msra.mxu0 0.0
  %963 = vmatprep.subr.mxu0 0.0
  %964 = vmatpush1.msra.mxu0 0.0
  %965 = vmatprep.subr.mxu0 %v828
  %966 = vmatpush1.msra.mxu0 %v827
  %967 = vmatprep.subr.mxu0 0.0
  %968 = vmatpush2.msra.mxu0 0.0
  %969 = vmatprep.subr.mxu0 0.0
  %970 = vmatpush2.msra.mxu0 0.0
  %971 = vmatprep.subr.mxu0 0.0
  %972 = vmatpush2.msra.mxu0 0.0
  %973 = vmatprep.subr.mxu0 0.0
  %974 = vmatpush2.msra.mxu0 0.0
  %975 = vmatprep.subr.mxu0 0.0
  %976 = vmatpush2.msra.mxu0 0.0
  %977 = vmatprep.subr.mxu0 0.0
  %978 = vmatpush2.msra.mxu0 0.0
  %979 = vmatprep.subr.mxu0 0.0
  %980 = vmatpush2.msra.mxu0 0.0
  %981 = vmatprep.subr.mxu0 0.0
  %982 = vmatpush2.msra.mxu0 0.0
  %983 = vmatprep.subr.mxu0 0.0
  %984 = vmatpush2.msra.mxu0 0.0
  %985 = vmatprep.subr.mxu0 0.0
  %986 = vmatpush2.msra.mxu0 0.0
  %987 = vmatprep.subr.mxu0 0.0
  %988 = vmatpush2.msra.mxu0 0.0
  %989 = vmatprep.subr.mxu0 0.0
  %990 = vmatpush2.msra.mxu0 0.0
  %991 = vmatprep.subr.mxu0 0.0
  %992 = vmatpush2.msra.mxu0 0.0
  %993 = vmatprep.subr.mxu0 0.0
  %994 = vmatpush2.msra.mxu0 0.0
  %995 = vmatprep.subr.mxu0 0.0
  %996 = vmatpush2.msra.mxu0 0.0
  %997 = vmatprep.subr.mxu0 0.0
  %998 = vmatpush2.msra.mxu0 0.0
  %999 = vmatprep.mubr.f32.mxu0 0.0
  %1000 = vmatmul.mubr.f32.gmra.mxu0 %v835
  %v1001 = vpop.f32.mrf.mxu0
  %v1002 = vadd.f32 0.0, %v1001
  %v1003 = vpop.f32.mrf.mxu0
  %v1004 = vadd.f32 0.0, %v1003
  %1005 = vmatprep.mubr.f32.mxu0 0.0
  %1006 = vmatmul.mubr.f32.gmra.mxu0 %v838
  %v1007 = vpop.f32.mrf.mxu0
  %v1008 = vadd.f32 0.0, %v1007
  %v1009 = vpop.f32.mrf.mxu0
  %v1010 = vadd.f32 0.0, %v1009
  %1011 = vmatprep.mubr.f32.mxu0 0.0
  %1012 = vmatmul.mubr.f32.gmra.mxu0 %v841
  %v1013 = vpop.f32.mrf.mxu0
  %v1014 = vadd.f32 0.0, %v1013
  %v1015 = vpop.f32.mrf.mxu0
  %v1016 = vadd.f32 0.0, %v1015
  %1017 = vmatprep.mubr.f32.mxu0 0.0
  %1018 = vmatmul.mubr.f32.gmra.mxu0 %v844
  %v1019 = vpop.f32.mrf.mxu0
  %v1020 = vadd.f32 0.0, %v1019
  %v1021 = vpop.f32.mrf.mxu0
  %v1022 = vadd.f32 0.0, %v1021
  %1023 = vdwg.mxu0
  %v1024 = vadd.f32 %v780, %v913
  %v1025 = vadd.f32 %v781, %v915
  %v1026 = vadd.f32 %v782, %v1002
  %v1027 = vadd.f32 %v783, %v1004
  %v1028 = vadd.f32 %v784, %v919
  %v1029 = vadd.f32 %v785, %v921
  %v1030 = vadd.f32 %v786, %v1008
  %v1031 = vadd.f32 %v787, %v1010
  %v1032 = vadd.f32 %v788, %v925
  %v1033 = vadd.f32 %v789, %v927
  %v1034 = vadd.f32 %v790, %v1014
  %v1035 = vadd.f32 %v791, %v1016
  %v1036 = vadd.f32 %v792, %v931
  %v1037 = vadd.f32 %v793, %v933
  %v1038 = vadd.f32 %v794, %v1020
  %v1039 = vadd.f32 %v795, %v1022
  %s1040 = scalar_lea.vmem %s3, 128
  %v1041 = vld [vmem:[%s1040] sm:$0xff]
  %v1042 = vld [vmem:[%s1040 + $0x8] sm:$0xff]
  %v1043 = vld [vmem:[%s1040 + $0x10] sm:$0xff]
  %v1044 = vld [vmem:[%s1040 + $0x18] sm:$0xff]
  %v1046 = vsel %vm101, %v1041, 0
  %v1049 = vsel %vm101, %v1042, 0
  %v1052 = vsel %vm101, %v1043, 0
  %v1055 = vsel %vm101, %v1044, 0
  %1057 = vmatprep.subr.mxu0 0.0
  %1058 = vmatpush1.msra.mxu0 0.0
  %1059 = vmatprep.subr.mxu0 0.0
  %1060 = vmatpush1.msra.mxu0 0.0
  %1061 = vmatprep.subr.mxu0 0.0
  %1062 = vmatpush1.msra.mxu0 0.0
  %1063 = vmatprep.subr.mxu0 0.0
  %1064 = vmatpush1.msra.mxu0 0.0
  %1065 = vmatprep.subr.mxu0 0.0
  %1066 = vmatpush1.msra.mxu0 0.0
  %1067 = vmatprep.subr.mxu0 0.0
  %1068 = vmatpush1.msra.mxu0 0.0
  %1069 = vmatprep.subr.mxu0 0.0
  %1070 = vmatpush1.msra.mxu0 0.0
  %1071 = vmatprep.subr.mxu0 0.0
  %1072 = vmatpush1.msra.mxu0 0.0
  %1073 = vmatprep.subr.mxu0 0.0
  %1074 = vmatpush1.msra.mxu0 0.0
  %1075 = vmatprep.subr.mxu0 0.0
  %1076 = vmatpush1.msra.mxu0 0.0
  %1077 = vmatprep.subr.mxu0 0.0
  %1078 = vmatpush1.msra.mxu0 0.0
  %1079 = vmatprep.subr.mxu0 0.0
  %1080 = vmatpush1.msra.mxu0 0.0
  %1081 = vmatprep.subr.mxu0 0.0
  %1082 = vmatpush1.msra.mxu0 0.0
  %1083 = vmatprep.subr.mxu0 0.0
  %1084 = vmatpush1.msra.mxu0 0.0
  %1085 = vmatprep.subr.mxu0 0.0
  %1086 = vmatpush1.msra.mxu0 0.0
  %1087 = vmatprep.subr.mxu0 %v35
  %1088 = vmatpush1.msra.mxu0 %v34
  %1089 = vmatprep.subr.mxu0 0.0
  %1090 = vmatpush2.msra.mxu0 0.0
  %1091 = vmatprep.subr.mxu0 0.0
  %1092 = vmatpush2.msra.mxu0 0.0
  %1093 = vmatprep.subr.mxu0 0.0
  %1094 = vmatpush2.msra.mxu0 0.0
  %1095 = vmatprep.subr.mxu0 0.0
  %1096 = vmatpush2.msra.mxu0 0.0
  %1097 = vmatprep.subr.mxu0 0.0
  %1098 = vmatpush2.msra.mxu0 0.0
  %1099 = vmatprep.subr.mxu0 0.0
  %1100 = vmatpush2.msra.mxu0 0.0
  %1101 = vmatprep.subr.mxu0 0.0
  %1102 = vmatpush2.msra.mxu0 0.0
  %1103 = vmatprep.subr.mxu0 0.0
  %1104 = vmatpush2.msra.mxu0 0.0
  %1105 = vmatprep.subr.mxu0 0.0
  %1106 = vmatpush2.msra.mxu0 0.0
  %1107 = vmatprep.subr.mxu0 0.0
  %1108 = vmatpush2.msra.mxu0 0.0
  %1109 = vmatprep.subr.mxu0 0.0
  %1110 = vmatpush2.msra.mxu0 0.0
  %1111 = vmatprep.subr.mxu0 0.0
  %1112 = vmatpush2.msra.mxu0 0.0
  %1113 = vmatprep.subr.mxu0 0.0
  %1114 = vmatpush2.msra.mxu0 0.0
  %1115 = vmatprep.subr.mxu0 0.0
  %1116 = vmatpush2.msra.mxu0 0.0
  %1117 = vmatprep.subr.mxu0 0.0
  %1118 = vmatpush2.msra.mxu0 0.0
  %1119 = vmatprep.subr.mxu0 0.0
  %1120 = vmatpush2.msra.mxu0 0.0
  %1121 = vmatprep.mubr.f32.mxu0 0.0
  %1122 = vmatmul.mubr.f32.gmra.mxu0 %v1046
  %v1123 = vpop.f32.mrf.mxu0
  %v1124 = vadd.f32 0.0, %v1123
  %v1125 = vpop.f32.mrf.mxu0
  %v1126 = vadd.f32 0.0, %v1125
  %1127 = vmatprep.mubr.f32.mxu0 0.0
  %1128 = vmatmul.mubr.f32.gmra.mxu0 %v1049
  %v1129 = vpop.f32.mrf.mxu0
  %v1130 = vadd.f32 0.0, %v1129
  %v1131 = vpop.f32.mrf.mxu0
  %v1132 = vadd.f32 0.0, %v1131
  %1133 = vmatprep.mubr.f32.mxu0 0.0
  %1134 = vmatmul.mubr.f32.gmra.mxu0 %v1052
  %v1135 = vpop.f32.mrf.mxu0
  %v1136 = vadd.f32 0.0, %v1135
  %v1137 = vpop.f32.mrf.mxu0
  %v1138 = vadd.f32 0.0, %v1137
  %1139 = vmatprep.mubr.f32.mxu0 0.0
  %1140 = vmatmul.mubr.f32.gmra.mxu0 %v1055
  %v1141 = vpop.f32.mrf.mxu0
  %v1142 = vadd.f32 0.0, %v1141
  %v1143 = vpop.f32.mrf.mxu0
  %v1144 = vadd.f32 0.0, %v1143
  %1145 = vdwg.mxu0
  %1146 = vmatprep.subr.mxu0 0.0
  %1147 = vmatpush1.msra.mxu0 0.0
  %1148 = vmatprep.subr.mxu0 0.0
  %1149 = vmatpush1.msra.mxu0 0.0
  %1150 = vmatprep.subr.mxu0 0.0
  %1151 = vmatpush1.msra.mxu0 0.0
  %1152 = vmatprep.subr.mxu0 0.0
  %1153 = vmatpush1.msra.mxu0 0.0
  %1154 = vmatprep.subr.mxu0 0.0
  %1155 = vmatpush1.msra.mxu0 0.0
  %1156 = vmatprep.subr.mxu0 0.0
  %1157 = vmatpush1.msra.mxu0 0.0
  %1158 = vmatprep.subr.mxu0 0.0
  %1159 = vmatpush1.msra.mxu0 0.0
  %1160 = vmatprep.subr.mxu0 0.0
  %1161 = vmatpush1.msra.mxu0 0.0
  %1162 = vmatprep.subr.mxu0 0.0
  %1163 = vmatpush1.msra.mxu0 0.0
  %1164 = vmatprep.subr.mxu0 0.0
  %1165 = vmatpush1.msra.mxu0 0.0
  %1166 = vmatprep.subr.mxu0 0.0
  %1167 = vmatpush1.msra.mxu0 0.0
  %1168 = vmatprep.subr.mxu0 0.0
  %1169 = vmatpush1.msra.mxu0 0.0
  %1170 = vmatprep.subr.mxu0 0.0
  %1171 = vmatpush1.msra.mxu0 0.0
  %1172 = vmatprep.subr.mxu0 0.0
  %1173 = vmatpush1.msra.mxu0 0.0
  %1174 = vmatprep.subr.mxu0 0.0
  %1175 = vmatpush1.msra.mxu0 0.0
  %1176 = vmatprep.subr.mxu0 %v37
  %1177 = vmatpush1.msra.mxu0 %v36
  %1178 = vmatprep.subr.mxu0 0.0
  %1179 = vmatpush2.msra.mxu0 0.0
  %1180 = vmatprep.subr.mxu0 0.0
  %1181 = vmatpush2.msra.mxu0 0.0
  %1182 = vmatprep.subr.mxu0 0.0
  %1183 = vmatpush2.msra.mxu0 0.0
  %1184 = vmatprep.subr.mxu0 0.0
  %1185 = vmatpush2.msra.mxu0 0.0
  %1186 = vmatprep.subr.mxu0 0.0
  %1187 = vmatpush2.msra.mxu0 0.0
  %1188 = vmatprep.subr.mxu0 0.0
  %1189 = vmatpush2.msra.mxu0 0.0
  %1190 = vmatprep.subr.mxu0 0.0
  %1191 = vmatpush2.msra.mxu0 0.0
  %1192 = vmatprep.subr.mxu0 0.0
  %1193 = vmatpush2.msra.mxu0 0.0
  %1194 = vmatprep.subr.mxu0 0.0
  %1195 = vmatpush2.msra.mxu0 0.0
  %1196 = vmatprep.subr.mxu0 0.0
  %1197 = vmatpush2.msra.mxu0 0.0
  %1198 = vmatprep.subr.mxu0 0.0
  %1199 = vmatpush2.msra.mxu0 0.0
  %1200 = vmatprep.subr.mxu0 0.0
  %1201 = vmatpush2.msra.mxu0 0.0
  %1202 = vmatprep.subr.mxu0 0.0
  %1203 = vmatpush2.msra.mxu0 0.0
  %1204 = vmatprep.subr.mxu0 0.0
  %1205 = vmatpush2.msra.mxu0 0.0
  %1206 = vmatprep.subr.mxu0 0.0
  %1207 = vmatpush2.msra.mxu0 0.0
  %1208 = vmatprep.subr.mxu0 0.0
  %1209 = vmatpush2.msra.mxu0 0.0
  %1210 = vmatprep.mubr.f32.mxu0 0.0
  %1211 = vmatmul.mubr.f32.gmra.mxu0 %v1046
  %v1212 = vpop.f32.mrf.mxu0
  %v1213 = vadd.f32 0.0, %v1212
  %v1214 = vpop.f32.mrf.mxu0
  %v1215 = vadd.f32 0.0, %v1214
  %1216 = vmatprep.mubr.f32.mxu0 0.0
  %1217 = vmatmul.mubr.f32.gmra.mxu0 %v1049
  %v1218 = vpop.f32.mrf.mxu0
  %v1219 = vadd.f32 0.0, %v1218
  %v1220 = vpop.f32.mrf.mxu0
  %v1221 = vadd.f32 0.0, %v1220
  %1222 = vmatprep.mubr.f32.mxu0 0.0
  %1223 = vmatmul.mubr.f32.gmra.mxu0 %v1052
  %v1224 = vpop.f32.mrf.mxu0
  %v1225 = vadd.f32 0.0, %v1224
  %v1226 = vpop.f32.mrf.mxu0
  %v1227 = vadd.f32 0.0, %v1226
  %1228 = vmatprep.mubr.f32.mxu0 0.0
  %1229 = vmatmul.mubr.f32.gmra.mxu0 %v1055
  %v1230 = vpop.f32.mrf.mxu0
  %v1231 = vadd.f32 0.0, %v1230
  %v1232 = vpop.f32.mrf.mxu0
  %v1233 = vadd.f32 0.0, %v1232
  %1234 = vdwg.mxu0
  %v1235 = vadd.f32 %v1024, %v1124
  %v1236 = vadd.f32 %v1025, %v1126
  %v1237 = vadd.f32 %v1026, %v1213
  %v1238 = vadd.f32 %v1027, %v1215
  %v1239 = vadd.f32 %v1028, %v1130
  %v1240 = vadd.f32 %v1029, %v1132
  %v1241 = vadd.f32 %v1030, %v1219
  %v1242 = vadd.f32 %v1031, %v1221
  %v1243 = vadd.f32 %v1032, %v1136
  %v1244 = vadd.f32 %v1033, %v1138
  %v1245 = vadd.f32 %v1034, %v1225
  %v1246 = vadd.f32 %v1035, %v1227
  %v1247 = vadd.f32 %v1036, %v1142
  %v1248 = vadd.f32 %v1037, %v1144
  %v1249 = vadd.f32 %v1038, %v1231
  %v1250 = vadd.f32 %v1039, %v1233
  %1251 = vrot.lane.b32.xlu0 %v34, 127
  %v1252 = vpop.permute.xlu0 %1251
  %1253 = vrot.lane.b32.xlu0 %v35, 127
  %v1254 = vpop.permute.xlu0 %1253
  %1255 = vrot.lane.b32.xlu0 %v36, 127
  %v1256 = vpop.permute.xlu0 %1255
  %1257 = vrot.lane.b32.xlu0 %v37, 127
  %v1258 = vpop.permute.xlu0 %1257
  %vm1259 = vcmp.lt.s32.totalorder %v71, 127
  %v1260 = vsel %vm1259, %v1256, %v1258
  %v1261 = vsel %vm1259, %v1254, %v1256
  %v1262 = vsel %vm1259, %v1252, %v1254
  %v1263 = vsel %vm1259, %v1258, %v1252
  %v1264 = vlaneseq
  %v1265 = vshrl.u32 %v1264, 7
  %v1266 = vsub.s32 5, %v1265
  %v1267 = vrot.slane %v26, %v1266
  %v1268 = vlaneseq
  %v1269 = vshrl.u32 %v1268, 7
  %v1270 = vsub.s32 5, %v1269
  %v1271 = vrot.slane %v27, %v1270
  %v1272 = vlaneseq
  %v1273 = vshrl.u32 %v1272, 7
  %v1274 = vsub.s32 5, %v1273
  %v1275 = vrot.slane %v28, %v1274
  %v1276 = vlaneseq
  %v1277 = vshrl.u32 %v1276, 7
  %v1278 = vsub.s32 5, %v1277
  %v1279 = vrot.slane %v29, %v1278
  %v1280 = vmul.f32 %v1262, %v1267
  %v1281 = vmul.f32 %v1261, %v1271
  %v1282 = vmul.f32 %v1260, %v1275
  %v1283 = vmul.f32 %v1263, %v1279
  %s1284 = scalar_lea.vmem %s3, 160
  %v1285 = vld [vmem:[%s1284] sm:$0xff]
  %v1286 = vld [vmem:[%s1284 + $0x8] sm:$0xff]
  %v1287 = vld [vmem:[%s1284 + $0x10] sm:$0xff]
  %v1288 = vld [vmem:[%s1284 + $0x18] sm:$0xff]
  %v1290 = vsel %vm101, %v1285, 0
  %v1293 = vsel %vm101, %v1286, 0
  %v1296 = vsel %vm101, %v1287, 0
  %v1299 = vsel %vm101, %v1288, 0
  %1301 = vmatprep.subr.mxu0 0.0
  %1302 = vmatpush1.msra.mxu0 0.0
  %1303 = vmatprep.subr.mxu0 0.0
  %1304 = vmatpush1.msra.mxu0 0.0
  %1305 = vmatprep.subr.mxu0 0.0
  %1306 = vmatpush1.msra.mxu0 0.0
  %1307 = vmatprep.subr.mxu0 0.0
  %1308 = vmatpush1.msra.mxu0 0.0
  %1309 = vmatprep.subr.mxu0 0.0
  %1310 = vmatpush1.msra.mxu0 0.0
  %1311 = vmatprep.subr.mxu0 0.0
  %1312 = vmatpush1.msra.mxu0 0.0
  %1313 = vmatprep.subr.mxu0 0.0
  %1314 = vmatpush1.msra.mxu0 0.0
  %1315 = vmatprep.subr.mxu0 0.0
  %1316 = vmatpush1.msra.mxu0 0.0
  %1317 = vmatprep.subr.mxu0 0.0
  %1318 = vmatpush1.msra.mxu0 0.0
  %1319 = vmatprep.subr.mxu0 0.0
  %1320 = vmatpush1.msra.mxu0 0.0
  %1321 = vmatprep.subr.mxu0 0.0
  %1322 = vmatpush1.msra.mxu0 0.0
  %1323 = vmatprep.subr.mxu0 0.0
  %1324 = vmatpush1.msra.mxu0 0.0
  %1325 = vmatprep.subr.mxu0 0.0
  %1326 = vmatpush1.msra.mxu0 0.0
  %1327 = vmatprep.subr.mxu0 0.0
  %1328 = vmatpush1.msra.mxu0 0.0
  %1329 = vmatprep.subr.mxu0 0.0
  %1330 = vmatpush1.msra.mxu0 0.0
  %1331 = vmatprep.subr.mxu0 %v1281
  %1332 = vmatpush1.msra.mxu0 %v1280
  %1333 = vmatprep.subr.mxu0 0.0
  %1334 = vmatpush2.msra.mxu0 0.0
  %1335 = vmatprep.subr.mxu0 0.0
  %1336 = vmatpush2.msra.mxu0 0.0
  %1337 = vmatprep.subr.mxu0 0.0
  %1338 = vmatpush2.msra.mxu0 0.0
  %1339 = vmatprep.subr.mxu0 0.0
  %1340 = vmatpush2.msra.mxu0 0.0
  %1341 = vmatprep.subr.mxu0 0.0
  %1342 = vmatpush2.msra.mxu0 0.0
  %1343 = vmatprep.subr.mxu0 0.0
  %1344 = vmatpush2.msra.mxu0 0.0
  %1345 = vmatprep.subr.mxu0 0.0
  %1346 = vmatpush2.msra.mxu0 0.0
  %1347 = vmatprep.subr.mxu0 0.0
  %1348 = vmatpush2.msra.mxu0 0.0
  %1349 = vmatprep.subr.mxu0 0.0
  %1350 = vmatpush2.msra.mxu0 0.0
  %1351 = vmatprep.subr.mxu0 0.0
  %1352 = vmatpush2.msra.mxu0 0.0
  %1353 = vmatprep.subr.mxu0 0.0
  %1354 = vmatpush2.msra.mxu0 0.0
  %1355 = vmatprep.subr.mxu0 0.0
  %1356 = vmatpush2.msra.mxu0 0.0
  %1357 = vmatprep.subr.mxu0 0.0
  %1358 = vmatpush2.msra.mxu0 0.0
  %1359 = vmatprep.subr.mxu0 0.0
  %1360 = vmatpush2.msra.mxu0 0.0
  %1361 = vmatprep.subr.mxu0 0.0
  %1362 = vmatpush2.msra.mxu0 0.0
  %1363 = vmatprep.subr.mxu0 0.0
  %1364 = vmatpush2.msra.mxu0 0.0
  %1365 = vmatprep.mubr.f32.mxu0 0.0
  %1366 = vmatmul.mubr.f32.gmra.mxu0 %v1290
  %v1367 = vpop.f32.mrf.mxu0
  %v1368 = vadd.f32 0.0, %v1367
  %v1369 = vpop.f32.mrf.mxu0
  %v1370 = vadd.f32 0.0, %v1369
  %1371 = vmatprep.mubr.f32.mxu0 0.0
  %1372 = vmatmul.mubr.f32.gmra.mxu0 %v1293
  %v1373 = vpop.f32.mrf.mxu0
  %v1374 = vadd.f32 0.0, %v1373
  %v1375 = vpop.f32.mrf.mxu0
  %v1376 = vadd.f32 0.0, %v1375
  %1377 = vmatprep.mubr.f32.mxu0 0.0
  %1378 = vmatmul.mubr.f32.gmra.mxu0 %v1296
  %v1379 = vpop.f32.mrf.mxu0
  %v1380 = vadd.f32 0.0, %v1379
  %v1381 = vpop.f32.mrf.mxu0
  %v1382 = vadd.f32 0.0, %v1381
  %1383 = vmatprep.mubr.f32.mxu0 0.0
  %1384 = vmatmul.mubr.f32.gmra.mxu0 %v1299
  %v1385 = vpop.f32.mrf.mxu0
  %v1386 = vadd.f32 0.0, %v1385
  %v1387 = vpop.f32.mrf.mxu0
  %v1388 = vadd.f32 0.0, %v1387
  %1389 = vdwg.mxu0
  %1390 = vmatprep.subr.mxu0 0.0
  %1391 = vmatpush1.msra.mxu0 0.0
  %1392 = vmatprep.subr.mxu0 0.0
  %1393 = vmatpush1.msra.mxu0 0.0
  %1394 = vmatprep.subr.mxu0 0.0
  %1395 = vmatpush1.msra.mxu0 0.0
  %1396 = vmatprep.subr.mxu0 0.0
  %1397 = vmatpush1.msra.mxu0 0.0
  %1398 = vmatprep.subr.mxu0 0.0
  %1399 = vmatpush1.msra.mxu0 0.0
  %1400 = vmatprep.subr.mxu0 0.0
  %1401 = vmatpush1.msra.mxu0 0.0
  %1402 = vmatprep.subr.mxu0 0.0
  %1403 = vmatpush1.msra.mxu0 0.0
  %1404 = vmatprep.subr.mxu0 0.0
  %1405 = vmatpush1.msra.mxu0 0.0
  %1406 = vmatprep.subr.mxu0 0.0
  %1407 = vmatpush1.msra.mxu0 0.0
  %1408 = vmatprep.subr.mxu0 0.0
  %1409 = vmatpush1.msra.mxu0 0.0
  %1410 = vmatprep.subr.mxu0 0.0
  %1411 = vmatpush1.msra.mxu0 0.0
  %1412 = vmatprep.subr.mxu0 0.0
  %1413 = vmatpush1.msra.mxu0 0.0
  %1414 = vmatprep.subr.mxu0 0.0
  %1415 = vmatpush1.msra.mxu0 0.0
  %1416 = vmatprep.subr.mxu0 0.0
  %1417 = vmatpush1.msra.mxu0 0.0
  %1418 = vmatprep.subr.mxu0 0.0
  %1419 = vmatpush1.msra.mxu0 0.0
  %1420 = vmatprep.subr.mxu0 %v1283
  %1421 = vmatpush1.msra.mxu0 %v1282
  %1422 = vmatprep.subr.mxu0 0.0
  %1423 = vmatpush2.msra.mxu0 0.0
  %1424 = vmatprep.subr.mxu0 0.0
  %1425 = vmatpush2.msra.mxu0 0.0
  %1426 = vmatprep.subr.mxu0 0.0
  %1427 = vmatpush2.msra.mxu0 0.0
  %1428 = vmatprep.subr.mxu0 0.0
  %1429 = vmatpush2.msra.mxu0 0.0
  %1430 = vmatprep.subr.mxu0 0.0
  %1431 = vmatpush2.msra.mxu0 0.0
  %1432 = vmatprep.subr.mxu0 0.0
  %1433 = vmatpush2.msra.mxu0 0.0
  %1434 = vmatprep.subr.mxu0 0.0
  %1435 = vmatpush2.msra.mxu0 0.0
  %1436 = vmatprep.subr.mxu0 0.0
  %1437 = vmatpush2.msra.mxu0 0.0
  %1438 = vmatprep.subr.mxu0 0.0
  %1439 = vmatpush2.msra.mxu0 0.0
  %1440 = vmatprep.subr.mxu0 0.0
  %1441 = vmatpush2.msra.mxu0 0.0
  %1442 = vmatprep.subr.mxu0 0.0
  %1443 = vmatpush2.msra.mxu0 0.0
  %1444 = vmatprep.subr.mxu0 0.0
  %1445 = vmatpush2.msra.mxu0 0.0
  %1446 = vmatprep.subr.mxu0 0.0
  %1447 = vmatpush2.msra.mxu0 0.0
  %1448 = vmatprep.subr.mxu0 0.0
  %1449 = vmatpush2.msra.mxu0 0.0
  %1450 = vmatprep.subr.mxu0 0.0
  %1451 = vmatpush2.msra.mxu0 0.0
  %1452 = vmatprep.subr.mxu0 0.0
  %1453 = vmatpush2.msra.mxu0 0.0
  %1454 = vmatprep.mubr.f32.mxu0 0.0
  %1455 = vmatmul.mubr.f32.gmra.mxu0 %v1290
  %v1456 = vpop.f32.mrf.mxu0
  %v1457 = vadd.f32 0.0, %v1456
  %v1458 = vpop.f32.mrf.mxu0
  %v1459 = vadd.f32 0.0, %v1458
  %1460 = vmatprep.mubr.f32.mxu0 0.0
  %1461 = vmatmul.mubr.f32.gmra.mxu0 %v1293
  %v1462 = vpop.f32.mrf.mxu0
  %v1463 = vadd.f32 0.0, %v1462
  %v1464 = vpop.f32.mrf.mxu0
  %v1465 = vadd.f32 0.0, %v1464
  %1466 = vmatprep.mubr.f32.mxu0 0.0
  %1467 = vmatmul.mubr.f32.gmra.mxu0 %v1296
  %v1468 = vpop.f32.mrf.mxu0
  %v1469 = vadd.f32 0.0, %v1468
  %v1470 = vpop.f32.mrf.mxu0
  %v1471 = vadd.f32 0.0, %v1470
  %1472 = vmatprep.mubr.f32.mxu0 0.0
  %1473 = vmatmul.mubr.f32.gmra.mxu0 %v1299
  %v1474 = vpop.f32.mrf.mxu0
  %v1475 = vadd.f32 0.0, %v1474
  %v1476 = vpop.f32.mrf.mxu0
  %v1477 = vadd.f32 0.0, %v1476
  %1478 = vdwg.mxu0
  %v1479 = vadd.f32 %v1235, %v1368
  %v1480 = vadd.f32 %v1236, %v1370
  %v1481 = vadd.f32 %v1237, %v1457
  %v1482 = vadd.f32 %v1238, %v1459
  %v1483 = vadd.f32 %v1239, %v1374
  %v1484 = vadd.f32 %v1240, %v1376
  %v1485 = vadd.f32 %v1241, %v1463
  %v1486 = vadd.f32 %v1242, %v1465
  %v1487 = vadd.f32 %v1243, %v1380
  %v1488 = vadd.f32 %v1244, %v1382
  %v1489 = vadd.f32 %v1245, %v1469
  %v1490 = vadd.f32 %v1246, %v1471
  %v1491 = vadd.f32 %v1247, %v1386
  %v1492 = vadd.f32 %v1248, %v1388
  %v1493 = vadd.f32 %v1249, %v1475
  %v1494 = vadd.f32 %v1250, %v1477
  %1495 = vrot.lane.b32.xlu0 %v34, 113
  %v1496 = vpop.permute.xlu0 %1495
  %1497 = vrot.lane.b32.xlu0 %v35, 113
  %v1498 = vpop.permute.xlu0 %1497
  %1499 = vrot.lane.b32.xlu0 %v36, 113
  %v1500 = vpop.permute.xlu0 %1499
  %1501 = vrot.lane.b32.xlu0 %v37, 113
  %v1502 = vpop.permute.xlu0 %1501
  %vm1503 = vcmp.lt.s32.totalorder %v71, 113
  %v1504 = vsel %vm1503, %v1500, %v1502
  %v1505 = vsel %vm1503, %v1498, %v1500
  %v1506 = vsel %vm1503, %v1496, %v1498
  %v1507 = vsel %vm1503, %v1502, %v1496
  %v1508 = vlaneseq
  %v1509 = vshrl.u32 %v1508, 7
  %v1510 = vsub.s32 6, %v1509
  %v1511 = vrot.slane %v26, %v1510
  %v1512 = vlaneseq
  %v1513 = vshrl.u32 %v1512, 7
  %v1514 = vsub.s32 6, %v1513
  %v1515 = vrot.slane %v27, %v1514
  %v1516 = vlaneseq
  %v1517 = vshrl.u32 %v1516, 7
  %v1518 = vsub.s32 6, %v1517
  %v1519 = vrot.slane %v28, %v1518
  %v1520 = vlaneseq
  %v1521 = vshrl.u32 %v1520, 7
  %v1522 = vsub.s32 6, %v1521
  %v1523 = vrot.slane %v29, %v1522
  %v1524 = vmul.f32 %v1506, %v1511
  %v1525 = vmul.f32 %v1505, %v1515
  %v1526 = vmul.f32 %v1504, %v1519
  %v1527 = vmul.f32 %v1507, %v1523
  %s1528 = scalar_lea.vmem %s3, 192
  %v1529 = vld [vmem:[%s1528] sm:$0xff]
  %v1530 = vld [vmem:[%s1528 + $0x8] sm:$0xff]
  %v1531 = vld [vmem:[%s1528 + $0x10] sm:$0xff]
  %v1532 = vld [vmem:[%s1528 + $0x18] sm:$0xff]
  %v1534 = vsel %vm101, %v1529, 0
  %v1537 = vsel %vm101, %v1530, 0
  %v1540 = vsel %vm101, %v1531, 0
  %v1543 = vsel %vm101, %v1532, 0
  %1545 = vmatprep.subr.mxu0 0.0
  %1546 = vmatpush1.msra.mxu0 0.0
  %1547 = vmatprep.subr.mxu0 0.0
  %1548 = vmatpush1.msra.mxu0 0.0
  %1549 = vmatprep.subr.mxu0 0.0
  %1550 = vmatpush1.msra.mxu0 0.0
  %1551 = vmatprep.subr.mxu0 0.0
  %1552 = vmatpush1.msra.mxu0 0.0
  %1553 = vmatprep.subr.mxu0 0.0
  %1554 = vmatpush1.msra.mxu0 0.0
  %1555 = vmatprep.subr.mxu0 0.0
  %1556 = vmatpush1.msra.mxu0 0.0
  %1557 = vmatprep.subr.mxu0 0.0
  %1558 = vmatpush1.msra.mxu0 0.0
  %1559 = vmatprep.subr.mxu0 0.0
  %1560 = vmatpush1.msra.mxu0 0.0
  %1561 = vmatprep.subr.mxu0 0.0
  %1562 = vmatpush1.msra.mxu0 0.0
  %1563 = vmatprep.subr.mxu0 0.0
  %1564 = vmatpush1.msra.mxu0 0.0
  %1565 = vmatprep.subr.mxu0 0.0
  %1566 = vmatpush1.msra.mxu0 0.0
  %1567 = vmatprep.subr.mxu0 0.0
  %1568 = vmatpush1.msra.mxu0 0.0
  %1569 = vmatprep.subr.mxu0 0.0
  %1570 = vmatpush1.msra.mxu0 0.0
  %1571 = vmatprep.subr.mxu0 0.0
  %1572 = vmatpush1.msra.mxu0 0.0
  %1573 = vmatprep.subr.mxu0 0.0
  %1574 = vmatpush1.msra.mxu0 0.0
  %1575 = vmatprep.subr.mxu0 %v1525
  %1576 = vmatpush1.msra.mxu0 %v1524
  %1577 = vmatprep.subr.mxu0 0.0
  %1578 = vmatpush2.msra.mxu0 0.0
  %1579 = vmatprep.subr.mxu0 0.0
  %1580 = vmatpush2.msra.mxu0 0.0
  %1581 = vmatprep.subr.mxu0 0.0
  %1582 = vmatpush2.msra.mxu0 0.0
  %1583 = vmatprep.subr.mxu0 0.0
  %1584 = vmatpush2.msra.mxu0 0.0
  %1585 = vmatprep.subr.mxu0 0.0
  %1586 = vmatpush2.msra.mxu0 0.0
  %1587 = vmatprep.subr.mxu0 0.0
  %1588 = vmatpush2.msra.mxu0 0.0
  %1589 = vmatprep.subr.mxu0 0.0
  %1590 = vmatpush2.msra.mxu0 0.0
  %1591 = vmatprep.subr.mxu0 0.0
  %1592 = vmatpush2.msra.mxu0 0.0
  %1593 = vmatprep.subr.mxu0 0.0
  %1594 = vmatpush2.msra.mxu0 0.0
  %1595 = vmatprep.subr.mxu0 0.0
  %1596 = vmatpush2.msra.mxu0 0.0
  %1597 = vmatprep.subr.mxu0 0.0
  %1598 = vmatpush2.msra.mxu0 0.0
  %1599 = vmatprep.subr.mxu0 0.0
  %1600 = vmatpush2.msra.mxu0 0.0
  %1601 = vmatprep.subr.mxu0 0.0
  %1602 = vmatpush2.msra.mxu0 0.0
  %1603 = vmatprep.subr.mxu0 0.0
  %1604 = vmatpush2.msra.mxu0 0.0
  %1605 = vmatprep.subr.mxu0 0.0
  %1606 = vmatpush2.msra.mxu0 0.0
  %1607 = vmatprep.subr.mxu0 0.0
  %1608 = vmatpush2.msra.mxu0 0.0
  %1609 = vmatprep.mubr.f32.mxu0 0.0
  %1610 = vmatmul.mubr.f32.gmra.mxu0 %v1534
  %v1611 = vpop.f32.mrf.mxu0
  %v1612 = vadd.f32 0.0, %v1611
  %v1613 = vpop.f32.mrf.mxu0
  %v1614 = vadd.f32 0.0, %v1613
  %1615 = vmatprep.mubr.f32.mxu0 0.0
  %1616 = vmatmul.mubr.f32.gmra.mxu0 %v1537
  %v1617 = vpop.f32.mrf.mxu0
  %v1618 = vadd.f32 0.0, %v1617
  %v1619 = vpop.f32.mrf.mxu0
  %v1620 = vadd.f32 0.0, %v1619
  %1621 = vmatprep.mubr.f32.mxu0 0.0
  %1622 = vmatmul.mubr.f32.gmra.mxu0 %v1540
  %v1623 = vpop.f32.mrf.mxu0
  %v1624 = vadd.f32 0.0, %v1623
  %v1625 = vpop.f32.mrf.mxu0
  %v1626 = vadd.f32 0.0, %v1625
  %1627 = vmatprep.mubr.f32.mxu0 0.0
  %1628 = vmatmul.mubr.f32.gmra.mxu0 %v1543
  %v1629 = vpop.f32.mrf.mxu0
  %v1630 = vadd.f32 0.0, %v1629
  %v1631 = vpop.f32.mrf.mxu0
  %v1632 = vadd.f32 0.0, %v1631
  %1633 = vdwg.mxu0
  %1634 = vmatprep.subr.mxu0 0.0
  %1635 = vmatpush1.msra.mxu0 0.0
  %1636 = vmatprep.subr.mxu0 0.0
  %1637 = vmatpush1.msra.mxu0 0.0
  %1638 = vmatprep.subr.mxu0 0.0
  %1639 = vmatpush1.msra.mxu0 0.0
  %1640 = vmatprep.subr.mxu0 0.0
  %1641 = vmatpush1.msra.mxu0 0.0
  %1642 = vmatprep.subr.mxu0 0.0
  %1643 = vmatpush1.msra.mxu0 0.0
  %1644 = vmatprep.subr.mxu0 0.0
  %1645 = vmatpush1.msra.mxu0 0.0
  %1646 = vmatprep.subr.mxu0 0.0
  %1647 = vmatpush1.msra.mxu0 0.0
  %1648 = vmatprep.subr.mxu0 0.0
  %1649 = vmatpush1.msra.mxu0 0.0
  %1650 = vmatprep.subr.mxu0 0.0
  %1651 = vmatpush1.msra.mxu0 0.0
  %1652 = vmatprep.subr.mxu0 0.0
  %1653 = vmatpush1.msra.mxu0 0.0
  %1654 = vmatprep.subr.mxu0 0.0
  %1655 = vmatpush1.msra.mxu0 0.0
  %1656 = vmatprep.subr.mxu0 0.0
  %1657 = vmatpush1.msra.mxu0 0.0
  %1658 = vmatprep.subr.mxu0 0.0
  %1659 = vmatpush1.msra.mxu0 0.0
  %1660 = vmatprep.subr.mxu0 0.0
  %1661 = vmatpush1.msra.mxu0 0.0
  %1662 = vmatprep.subr.mxu0 0.0
  %1663 = vmatpush1.msra.mxu0 0.0
  %1664 = vmatprep.subr.mxu0 %v1527
  %1665 = vmatpush1.msra.mxu0 %v1526
  %1666 = vmatprep.subr.mxu0 0.0
  %1667 = vmatpush2.msra.mxu0 0.0
  %1668 = vmatprep.subr.mxu0 0.0
  %1669 = vmatpush2.msra.mxu0 0.0
  %1670 = vmatprep.subr.mxu0 0.0
  %1671 = vmatpush2.msra.mxu0 0.0
  %1672 = vmatprep.subr.mxu0 0.0
  %1673 = vmatpush2.msra.mxu0 0.0
  %1674 = vmatprep.subr.mxu0 0.0
  %1675 = vmatpush2.msra.mxu0 0.0
  %1676 = vmatprep.subr.mxu0 0.0
  %1677 = vmatpush2.msra.mxu0 0.0
  %1678 = vmatprep.subr.mxu0 0.0
  %1679 = vmatpush2.msra.mxu0 0.0
  %1680 = vmatprep.subr.mxu0 0.0
  %1681 = vmatpush2.msra.mxu0 0.0
  %1682 = vmatprep.subr.mxu0 0.0
  %1683 = vmatpush2.msra.mxu0 0.0
  %1684 = vmatprep.subr.mxu0 0.0
  %1685 = vmatpush2.msra.mxu0 0.0
  %1686 = vmatprep.subr.mxu0 0.0
  %1687 = vmatpush2.msra.mxu0 0.0
  %1688 = vmatprep.subr.mxu0 0.0
  %1689 = vmatpush2.msra.mxu0 0.0
  %1690 = vmatprep.subr.mxu0 0.0
  %1691 = vmatpush2.msra.mxu0 0.0
  %1692 = vmatprep.subr.mxu0 0.0
  %1693 = vmatpush2.msra.mxu0 0.0
  %1694 = vmatprep.subr.mxu0 0.0
  %1695 = vmatpush2.msra.mxu0 0.0
  %1696 = vmatprep.subr.mxu0 0.0
  %1697 = vmatpush2.msra.mxu0 0.0
  %1698 = vmatprep.mubr.f32.mxu0 0.0
  %1699 = vmatmul.mubr.f32.gmra.mxu0 %v1534
  %v1700 = vpop.f32.mrf.mxu0
  %v1701 = vadd.f32 0.0, %v1700
  %v1702 = vpop.f32.mrf.mxu0
  %v1703 = vadd.f32 0.0, %v1702
  %1704 = vmatprep.mubr.f32.mxu0 0.0
  %1705 = vmatmul.mubr.f32.gmra.mxu0 %v1537
  %v1706 = vpop.f32.mrf.mxu0
  %v1707 = vadd.f32 0.0, %v1706
  %v1708 = vpop.f32.mrf.mxu0
  %v1709 = vadd.f32 0.0, %v1708
  %1710 = vmatprep.mubr.f32.mxu0 0.0
  %1711 = vmatmul.mubr.f32.gmra.mxu0 %v1540
  %v1712 = vpop.f32.mrf.mxu0
  %v1713 = vadd.f32 0.0, %v1712
  %v1714 = vpop.f32.mrf.mxu0
  %v1715 = vadd.f32 0.0, %v1714
  %1716 = vmatprep.mubr.f32.mxu0 0.0
  %1717 = vmatmul.mubr.f32.gmra.mxu0 %v1543
  %v1718 = vpop.f32.mrf.mxu0
  %v1719 = vadd.f32 0.0, %v1718
  %v1720 = vpop.f32.mrf.mxu0
  %v1721 = vadd.f32 0.0, %v1720
  %1722 = vdwg.mxu0
  %v1723 = vadd.f32 %v1479, %v1612
  %v1724 = vadd.f32 %v1480, %v1614
  %v1725 = vadd.f32 %v1481, %v1701
  %v1726 = vadd.f32 %v1482, %v1703
  %v1727 = vadd.f32 %v1483, %v1618
  %v1728 = vadd.f32 %v1484, %v1620
  %v1729 = vadd.f32 %v1485, %v1707
  %v1730 = vadd.f32 %v1486, %v1709
  %v1731 = vadd.f32 %v1487, %v1624
  %v1732 = vadd.f32 %v1488, %v1626
  %v1733 = vadd.f32 %v1489, %v1713
  %v1734 = vadd.f32 %v1490, %v1715
  %v1735 = vadd.f32 %v1491, %v1630
  %v1736 = vadd.f32 %v1492, %v1632
  %v1737 = vadd.f32 %v1493, %v1719
  %v1738 = vadd.f32 %v1494, %v1721
  %1739 = vrot.lane.b32.xlu0 %v34, 112
  %v1740 = vpop.permute.xlu0 %1739
  %1741 = vrot.lane.b32.xlu0 %v35, 112
  %v1742 = vpop.permute.xlu0 %1741
  %1743 = vrot.lane.b32.xlu0 %v36, 112
  %v1744 = vpop.permute.xlu0 %1743
  %1745 = vrot.lane.b32.xlu0 %v37, 112
  %v1746 = vpop.permute.xlu0 %1745
  %vm1747 = vcmp.lt.s32.totalorder %v71, 112
  %v1748 = vsel %vm1747, %v1744, %v1746
  %v1749 = vsel %vm1747, %v1742, %v1744
  %v1750 = vsel %vm1747, %v1740, %v1742
  %v1751 = vsel %vm1747, %v1746, %v1740
  %v1752 = vlaneseq
  %v1753 = vshrl.u32 %v1752, 7
  %v1754 = vsub.s32 7, %v1753
  %v1755 = vrot.slane %v26, %v1754
  %v1756 = vlaneseq
  %v1757 = vshrl.u32 %v1756, 7
  %v1758 = vsub.s32 7, %v1757
  %v1759 = vrot.slane %v27, %v1758
  %v1760 = vlaneseq
  %v1761 = vshrl.u32 %v1760, 7
  %v1762 = vsub.s32 7, %v1761
  %v1763 = vrot.slane %v28, %v1762
  %v1764 = vlaneseq
  %v1765 = vshrl.u32 %v1764, 7
  %v1766 = vsub.s32 7, %v1765
  %v1767 = vrot.slane %v29, %v1766
  %v1768 = vmul.f32 %v1750, %v1755
  %v1769 = vmul.f32 %v1749, %v1759
  %v1770 = vmul.f32 %v1748, %v1763
  %v1771 = vmul.f32 %v1751, %v1767
  %s1772 = scalar_lea.vmem %s3, 224
  %v1773 = vld [vmem:[%s1772] sm:$0xff]
  %v1774 = vld [vmem:[%s1772 + $0x8] sm:$0xff]
  %v1775 = vld [vmem:[%s1772 + $0x10] sm:$0xff]
  %v1776 = vld [vmem:[%s1772 + $0x18] sm:$0xff]
  %v1778 = vsel %vm101, %v1773, 0
  %v1781 = vsel %vm101, %v1774, 0
  %v1784 = vsel %vm101, %v1775, 0
  %v1787 = vsel %vm101, %v1776, 0
  %1789 = vmatprep.subr.mxu0 0.0
  %1790 = vmatpush1.msra.mxu0 0.0
  %1791 = vmatprep.subr.mxu0 0.0
  %1792 = vmatpush1.msra.mxu0 0.0
  %1793 = vmatprep.subr.mxu0 0.0
  %1794 = vmatpush1.msra.mxu0 0.0
  %1795 = vmatprep.subr.mxu0 0.0
  %1796 = vmatpush1.msra.mxu0 0.0
  %1797 = vmatprep.subr.mxu0 0.0
  %1798 = vmatpush1.msra.mxu0 0.0
  %1799 = vmatprep.subr.mxu0 0.0
  %1800 = vmatpush1.msra.mxu0 0.0
  %1801 = vmatprep.subr.mxu0 0.0
  %1802 = vmatpush1.msra.mxu0 0.0
  %1803 = vmatprep.subr.mxu0 0.0
  %1804 = vmatpush1.msra.mxu0 0.0
  %1805 = vmatprep.subr.mxu0 0.0
  %1806 = vmatpush1.msra.mxu0 0.0
  %1807 = vmatprep.subr.mxu0 0.0
  %1808 = vmatpush1.msra.mxu0 0.0
  %1809 = vmatprep.subr.mxu0 0.0
  %1810 = vmatpush1.msra.mxu0 0.0
  %1811 = vmatprep.subr.mxu0 0.0
  %1812 = vmatpush1.msra.mxu0 0.0
  %1813 = vmatprep.subr.mxu0 0.0
  %1814 = vmatpush1.msra.mxu0 0.0
  %1815 = vmatprep.subr.mxu0 0.0
  %1816 = vmatpush1.msra.mxu0 0.0
  %1817 = vmatprep.subr.mxu0 0.0
  %1818 = vmatpush1.msra.mxu0 0.0
  %1819 = vmatprep.subr.mxu0 %v1769
  %1820 = vmatpush1.msra.mxu0 %v1768
  %1821 = vmatprep.subr.mxu0 0.0
  %1822 = vmatpush2.msra.mxu0 0.0
  %1823 = vmatprep.subr.mxu0 0.0
  %1824 = vmatpush2.msra.mxu0 0.0
  %1825 = vmatprep.subr.mxu0 0.0
  %1826 = vmatpush2.msra.mxu0 0.0
  %1827 = vmatprep.subr.mxu0 0.0
  %1828 = vmatpush2.msra.mxu0 0.0
  %1829 = vmatprep.subr.mxu0 0.0
  %1830 = vmatpush2.msra.mxu0 0.0
  %1831 = vmatprep.subr.mxu0 0.0
  %1832 = vmatpush2.msra.mxu0 0.0
  %1833 = vmatprep.subr.mxu0 0.0
  %1834 = vmatpush2.msra.mxu0 0.0
  %1835 = vmatprep.subr.mxu0 0.0
  %1836 = vmatpush2.msra.mxu0 0.0
  %1837 = vmatprep.subr.mxu0 0.0
  %1838 = vmatpush2.msra.mxu0 0.0
  %1839 = vmatprep.subr.mxu0 0.0
  %1840 = vmatpush2.msra.mxu0 0.0
  %1841 = vmatprep.subr.mxu0 0.0
  %1842 = vmatpush2.msra.mxu0 0.0
  %1843 = vmatprep.subr.mxu0 0.0
  %1844 = vmatpush2.msra.mxu0 0.0
  %1845 = vmatprep.subr.mxu0 0.0
  %1846 = vmatpush2.msra.mxu0 0.0
  %1847 = vmatprep.subr.mxu0 0.0
  %1848 = vmatpush2.msra.mxu0 0.0
  %1849 = vmatprep.subr.mxu0 0.0
  %1850 = vmatpush2.msra.mxu0 0.0
  %1851 = vmatprep.subr.mxu0 0.0
  %1852 = vmatpush2.msra.mxu0 0.0
  %1853 = vmatprep.mubr.f32.mxu0 0.0
  %1854 = vmatmul.mubr.f32.gmra.mxu0 %v1778
  %v1855 = vpop.f32.mrf.mxu0
  %v1856 = vadd.f32 0.0, %v1855
  %v1857 = vpop.f32.mrf.mxu0
  %v1858 = vadd.f32 0.0, %v1857
  %1859 = vmatprep.mubr.f32.mxu0 0.0
  %1860 = vmatmul.mubr.f32.gmra.mxu0 %v1781
  %v1861 = vpop.f32.mrf.mxu0
  %v1862 = vadd.f32 0.0, %v1861
  %v1863 = vpop.f32.mrf.mxu0
  %v1864 = vadd.f32 0.0, %v1863
  %1865 = vmatprep.mubr.f32.mxu0 0.0
  %1866 = vmatmul.mubr.f32.gmra.mxu0 %v1784
  %v1867 = vpop.f32.mrf.mxu0
  %v1868 = vadd.f32 0.0, %v1867
  %v1869 = vpop.f32.mrf.mxu0
  %v1870 = vadd.f32 0.0, %v1869
  %1871 = vmatprep.mubr.f32.mxu0 0.0
  %1872 = vmatmul.mubr.f32.gmra.mxu0 %v1787
  %v1873 = vpop.f32.mrf.mxu0
  %v1874 = vadd.f32 0.0, %v1873
  %v1875 = vpop.f32.mrf.mxu0
  %v1876 = vadd.f32 0.0, %v1875
  %1877 = vdwg.mxu0
  %1878 = vmatprep.subr.mxu0 0.0
  %1879 = vmatpush1.msra.mxu0 0.0
  %1880 = vmatprep.subr.mxu0 0.0
  %1881 = vmatpush1.msra.mxu0 0.0
  %1882 = vmatprep.subr.mxu0 0.0
  %1883 = vmatpush1.msra.mxu0 0.0
  %1884 = vmatprep.subr.mxu0 0.0
  %1885 = vmatpush1.msra.mxu0 0.0
  %1886 = vmatprep.subr.mxu0 0.0
  %1887 = vmatpush1.msra.mxu0 0.0
  %1888 = vmatprep.subr.mxu0 0.0
  %1889 = vmatpush1.msra.mxu0 0.0
  %1890 = vmatprep.subr.mxu0 0.0
  %1891 = vmatpush1.msra.mxu0 0.0
  %1892 = vmatprep.subr.mxu0 0.0
  %1893 = vmatpush1.msra.mxu0 0.0
  %1894 = vmatprep.subr.mxu0 0.0
  %1895 = vmatpush1.msra.mxu0 0.0
  %1896 = vmatprep.subr.mxu0 0.0
  %1897 = vmatpush1.msra.mxu0 0.0
  %1898 = vmatprep.subr.mxu0 0.0
  %1899 = vmatpush1.msra.mxu0 0.0
  %1900 = vmatprep.subr.mxu0 0.0
  %1901 = vmatpush1.msra.mxu0 0.0
  %1902 = vmatprep.subr.mxu0 0.0
  %1903 = vmatpush1.msra.mxu0 0.0
  %1904 = vmatprep.subr.mxu0 0.0
  %1905 = vmatpush1.msra.mxu0 0.0
  %1906 = vmatprep.subr.mxu0 0.0
  %1907 = vmatpush1.msra.mxu0 0.0
  %1908 = vmatprep.subr.mxu0 %v1771
  %1909 = vmatpush1.msra.mxu0 %v1770
  %1910 = vmatprep.subr.mxu0 0.0
  %1911 = vmatpush2.msra.mxu0 0.0
  %1912 = vmatprep.subr.mxu0 0.0
  %1913 = vmatpush2.msra.mxu0 0.0
  %1914 = vmatprep.subr.mxu0 0.0
  %1915 = vmatpush2.msra.mxu0 0.0
  %1916 = vmatprep.subr.mxu0 0.0
  %1917 = vmatpush2.msra.mxu0 0.0
  %1918 = vmatprep.subr.mxu0 0.0
  %1919 = vmatpush2.msra.mxu0 0.0
  %1920 = vmatprep.subr.mxu0 0.0
  %1921 = vmatpush2.msra.mxu0 0.0
  %1922 = vmatprep.subr.mxu0 0.0
  %1923 = vmatpush2.msra.mxu0 0.0
  %1924 = vmatprep.subr.mxu0 0.0
  %1925 = vmatpush2.msra.mxu0 0.0
  %1926 = vmatprep.subr.mxu0 0.0
  %1927 = vmatpush2.msra.mxu0 0.0
  %1928 = vmatprep.subr.mxu0 0.0
  %1929 = vmatpush2.msra.mxu0 0.0
  %1930 = vmatprep.subr.mxu0 0.0
  %1931 = vmatpush2.msra.mxu0 0.0
  %1932 = vmatprep.subr.mxu0 0.0
  %1933 = vmatpush2.msra.mxu0 0.0
  %1934 = vmatprep.subr.mxu0 0.0
  %1935 = vmatpush2.msra.mxu0 0.0
  %1936 = vmatprep.subr.mxu0 0.0
  %1937 = vmatpush2.msra.mxu0 0.0
  %1938 = vmatprep.subr.mxu0 0.0
  %1939 = vmatpush2.msra.mxu0 0.0
  %1940 = vmatprep.subr.mxu0 0.0
  %1941 = vmatpush2.msra.mxu0 0.0
  %1942 = vmatprep.mubr.f32.mxu0 0.0
  %1943 = vmatmul.mubr.f32.gmra.mxu0 %v1778
  %v1944 = vpop.f32.mrf.mxu0
  %v1945 = vadd.f32 0.0, %v1944
  %v1946 = vpop.f32.mrf.mxu0
  %v1947 = vadd.f32 0.0, %v1946
  %1948 = vmatprep.mubr.f32.mxu0 0.0
  %1949 = vmatmul.mubr.f32.gmra.mxu0 %v1781
  %v1950 = vpop.f32.mrf.mxu0
  %v1951 = vadd.f32 0.0, %v1950
  %v1952 = vpop.f32.mrf.mxu0
  %v1953 = vadd.f32 0.0, %v1952
  %1954 = vmatprep.mubr.f32.mxu0 0.0
  %1955 = vmatmul.mubr.f32.gmra.mxu0 %v1784
  %v1956 = vpop.f32.mrf.mxu0
  %v1957 = vadd.f32 0.0, %v1956
  %v1958 = vpop.f32.mrf.mxu0
  %v1959 = vadd.f32 0.0, %v1958
  %1960 = vmatprep.mubr.f32.mxu0 0.0
  %1961 = vmatmul.mubr.f32.gmra.mxu0 %v1787
  %v1962 = vpop.f32.mrf.mxu0
  %v1963 = vadd.f32 0.0, %v1962
  %v1964 = vpop.f32.mrf.mxu0
  %v1965 = vadd.f32 0.0, %v1964
  %1966 = vdwg.mxu0
  %v1967 = vadd.f32 %v1723, %v1856
  %v1968 = vadd.f32 %v1724, %v1858
  %v1969 = vadd.f32 %v1725, %v1945
  %v1970 = vadd.f32 %v1726, %v1947
  %v1971 = vadd.f32 %v1727, %v1862
  %v1972 = vadd.f32 %v1728, %v1864
  %v1973 = vadd.f32 %v1729, %v1951
  %v1974 = vadd.f32 %v1730, %v1953
  %v1975 = vadd.f32 %v1731, %v1868
  %v1976 = vadd.f32 %v1732, %v1870
  %v1977 = vadd.f32 %v1733, %v1957
  %v1978 = vadd.f32 %v1734, %v1959
  %v1979 = vadd.f32 %v1735, %v1874
  %v1980 = vadd.f32 %v1736, %v1876
  %v1981 = vadd.f32 %v1737, %v1963
  %v1982 = vadd.f32 %v1738, %v1965
  %1983 = vrot.lane.b32.xlu0 %v34, 111
  %v1984 = vpop.permute.xlu0 %1983
  %1985 = vrot.lane.b32.xlu0 %v35, 111
  %v1986 = vpop.permute.xlu0 %1985
  %1987 = vrot.lane.b32.xlu0 %v36, 111
  %v1988 = vpop.permute.xlu0 %1987
  %1989 = vrot.lane.b32.xlu0 %v37, 111
  %v1990 = vpop.permute.xlu0 %1989
  %vm1991 = vcmp.lt.s32.totalorder %v71, 111
  %v1992 = vsel %vm1991, %v1988, %v1990
  %v1993 = vsel %vm1991, %v1986, %v1988
  %v1994 = vsel %vm1991, %v1984, %v1986
  %v1995 = vsel %vm1991, %v1990, %v1984
  %v1996 = vlaneseq
  %v1997 = vshrl.u32 %v1996, 7
  %v1998 = vsub.s32 0, %v1997
  %v1999 = vrot.slane %v30, %v1998
  %v2000 = vlaneseq
  %v2001 = vshrl.u32 %v2000, 7
  %v2002 = vsub.s32 0, %v2001
  %v2003 = vrot.slane %v31, %v2002
  %v2004 = vlaneseq
  %v2005 = vshrl.u32 %v2004, 7
  %v2006 = vsub.s32 0, %v2005
  %v2007 = vrot.slane %v32, %v2006
  %v2008 = vlaneseq
  %v2009 = vshrl.u32 %v2008, 7
  %v2010 = vsub.s32 0, %v2009
  %v2011 = vrot.slane %v33, %v2010
  %v2012 = vmul.f32 %v1994, %v1999
  %v2013 = vmul.f32 %v1993, %v2003
  %v2014 = vmul.f32 %v1992, %v2007
  %v2015 = vmul.f32 %v1995, %v2011
  %s2016 = scalar_lea.vmem %s3, 256
  %v2017 = vld [vmem:[%s2016] sm:$0xff]
  %v2018 = vld [vmem:[%s2016 + $0x8] sm:$0xff]
  %v2019 = vld [vmem:[%s2016 + $0x10] sm:$0xff]
  %v2020 = vld [vmem:[%s2016 + $0x18] sm:$0xff]
  %v2022 = vsel %vm101, %v2017, 0
  %v2025 = vsel %vm101, %v2018, 0
  %v2028 = vsel %vm101, %v2019, 0
  %v2031 = vsel %vm101, %v2020, 0
  %2033 = vmatprep.subr.mxu0 0.0
  %2034 = vmatpush1.msra.mxu0 0.0
  %2035 = vmatprep.subr.mxu0 0.0
  %2036 = vmatpush1.msra.mxu0 0.0
  %2037 = vmatprep.subr.mxu0 0.0
  %2038 = vmatpush1.msra.mxu0 0.0
  %2039 = vmatprep.subr.mxu0 0.0
  %2040 = vmatpush1.msra.mxu0 0.0
  %2041 = vmatprep.subr.mxu0 0.0
  %2042 = vmatpush1.msra.mxu0 0.0
  %2043 = vmatprep.subr.mxu0 0.0
  %2044 = vmatpush1.msra.mxu0 0.0
  %2045 = vmatprep.subr.mxu0 0.0
  %2046 = vmatpush1.msra.mxu0 0.0
  %2047 = vmatprep.subr.mxu0 0.0
  %2048 = vmatpush1.msra.mxu0 0.0
  %2049 = vmatprep.subr.mxu0 0.0
  %2050 = vmatpush1.msra.mxu0 0.0
  %2051 = vmatprep.subr.mxu0 0.0
  %2052 = vmatpush1.msra.mxu0 0.0
  %2053 = vmatprep.subr.mxu0 0.0
  %2054 = vmatpush1.msra.mxu0 0.0
  %2055 = vmatprep.subr.mxu0 0.0
  %2056 = vmatpush1.msra.mxu0 0.0
  %2057 = vmatprep.subr.mxu0 0.0
  %2058 = vmatpush1.msra.mxu0 0.0
  %2059 = vmatprep.subr.mxu0 0.0
  %2060 = vmatpush1.msra.mxu0 0.0
  %2061 = vmatprep.subr.mxu0 0.0
  %2062 = vmatpush1.msra.mxu0 0.0
  %2063 = vmatprep.subr.mxu0 %v2013
  %2064 = vmatpush1.msra.mxu0 %v2012
  %2065 = vmatprep.subr.mxu0 0.0
  %2066 = vmatpush2.msra.mxu0 0.0
  %2067 = vmatprep.subr.mxu0 0.0
  %2068 = vmatpush2.msra.mxu0 0.0
  %2069 = vmatprep.subr.mxu0 0.0
  %2070 = vmatpush2.msra.mxu0 0.0
  %2071 = vmatprep.subr.mxu0 0.0
  %2072 = vmatpush2.msra.mxu0 0.0
  %2073 = vmatprep.subr.mxu0 0.0
  %2074 = vmatpush2.msra.mxu0 0.0
  %2075 = vmatprep.subr.mxu0 0.0
  %2076 = vmatpush2.msra.mxu0 0.0
  %2077 = vmatprep.subr.mxu0 0.0
  %2078 = vmatpush2.msra.mxu0 0.0
  %2079 = vmatprep.subr.mxu0 0.0
  %2080 = vmatpush2.msra.mxu0 0.0
  %2081 = vmatprep.subr.mxu0 0.0
  %2082 = vmatpush2.msra.mxu0 0.0
  %2083 = vmatprep.subr.mxu0 0.0
  %2084 = vmatpush2.msra.mxu0 0.0
  %2085 = vmatprep.subr.mxu0 0.0
  %2086 = vmatpush2.msra.mxu0 0.0
  %2087 = vmatprep.subr.mxu0 0.0
  %2088 = vmatpush2.msra.mxu0 0.0
  %2089 = vmatprep.subr.mxu0 0.0
  %2090 = vmatpush2.msra.mxu0 0.0
  %2091 = vmatprep.subr.mxu0 0.0
  %2092 = vmatpush2.msra.mxu0 0.0
  %2093 = vmatprep.subr.mxu0 0.0
  %2094 = vmatpush2.msra.mxu0 0.0
  %2095 = vmatprep.subr.mxu0 0.0
  %2096 = vmatpush2.msra.mxu0 0.0
  %2097 = vmatprep.mubr.f32.mxu0 0.0
  %2098 = vmatmul.mubr.f32.gmra.mxu0 %v2022
  %v2099 = vpop.f32.mrf.mxu0
  %v2100 = vadd.f32 0.0, %v2099
  %v2101 = vpop.f32.mrf.mxu0
  %v2102 = vadd.f32 0.0, %v2101
  %2103 = vmatprep.mubr.f32.mxu0 0.0
  %2104 = vmatmul.mubr.f32.gmra.mxu0 %v2025
  %v2105 = vpop.f32.mrf.mxu0
  %v2106 = vadd.f32 0.0, %v2105
  %v2107 = vpop.f32.mrf.mxu0
  %v2108 = vadd.f32 0.0, %v2107
  %2109 = vmatprep.mubr.f32.mxu0 0.0
  %2110 = vmatmul.mubr.f32.gmra.mxu0 %v2028
  %v2111 = vpop.f32.mrf.mxu0
  %v2112 = vadd.f32 0.0, %v2111
  %v2113 = vpop.f32.mrf.mxu0
  %v2114 = vadd.f32 0.0, %v2113
  %2115 = vmatprep.mubr.f32.mxu0 0.0
  %2116 = vmatmul.mubr.f32.gmra.mxu0 %v2031
  %v2117 = vpop.f32.mrf.mxu0
  %v2118 = vadd.f32 0.0, %v2117
  %v2119 = vpop.f32.mrf.mxu0
  %v2120 = vadd.f32 0.0, %v2119
  %2121 = vdwg.mxu0
  %2122 = vmatprep.subr.mxu0 0.0
  %2123 = vmatpush1.msra.mxu0 0.0
  %2124 = vmatprep.subr.mxu0 0.0
  %2125 = vmatpush1.msra.mxu0 0.0
  %2126 = vmatprep.subr.mxu0 0.0
  %2127 = vmatpush1.msra.mxu0 0.0
  %2128 = vmatprep.subr.mxu0 0.0
  %2129 = vmatpush1.msra.mxu0 0.0
  %2130 = vmatprep.subr.mxu0 0.0
  %2131 = vmatpush1.msra.mxu0 0.0
  %2132 = vmatprep.subr.mxu0 0.0
  %2133 = vmatpush1.msra.mxu0 0.0
  %2134 = vmatprep.subr.mxu0 0.0
  %2135 = vmatpush1.msra.mxu0 0.0
  %2136 = vmatprep.subr.mxu0 0.0
  %2137 = vmatpush1.msra.mxu0 0.0
  %2138 = vmatprep.subr.mxu0 0.0
  %2139 = vmatpush1.msra.mxu0 0.0
  %2140 = vmatprep.subr.mxu0 0.0
  %2141 = vmatpush1.msra.mxu0 0.0
  %2142 = vmatprep.subr.mxu0 0.0
  %2143 = vmatpush1.msra.mxu0 0.0
  %2144 = vmatprep.subr.mxu0 0.0
  %2145 = vmatpush1.msra.mxu0 0.0
  %2146 = vmatprep.subr.mxu0 0.0
  %2147 = vmatpush1.msra.mxu0 0.0
  %2148 = vmatprep.subr.mxu0 0.0
  %2149 = vmatpush1.msra.mxu0 0.0
  %2150 = vmatprep.subr.mxu0 0.0
  %2151 = vmatpush1.msra.mxu0 0.0
  %2152 = vmatprep.subr.mxu0 %v2015
  %2153 = vmatpush1.msra.mxu0 %v2014
  %2154 = vmatprep.subr.mxu0 0.0
  %2155 = vmatpush2.msra.mxu0 0.0
  %2156 = vmatprep.subr.mxu0 0.0
  %2157 = vmatpush2.msra.mxu0 0.0
  %2158 = vmatprep.subr.mxu0 0.0
  %2159 = vmatpush2.msra.mxu0 0.0
  %2160 = vmatprep.subr.mxu0 0.0
  %2161 = vmatpush2.msra.mxu0 0.0
  %2162 = vmatprep.subr.mxu0 0.0
  %2163 = vmatpush2.msra.mxu0 0.0
  %2164 = vmatprep.subr.mxu0 0.0
  %2165 = vmatpush2.msra.mxu0 0.0
  %2166 = vmatprep.subr.mxu0 0.0
  %2167 = vmatpush2.msra.mxu0 0.0
  %2168 = vmatprep.subr.mxu0 0.0
  %2169 = vmatpush2.msra.mxu0 0.0
  %2170 = vmatprep.subr.mxu0 0.0
  %2171 = vmatpush2.msra.mxu0 0.0
  %2172 = vmatprep.subr.mxu0 0.0
  %2173 = vmatpush2.msra.mxu0 0.0
  %2174 = vmatprep.subr.mxu0 0.0
  %2175 = vmatpush2.msra.mxu0 0.0
  %2176 = vmatprep.subr.mxu0 0.0
  %2177 = vmatpush2.msra.mxu0 0.0
  %2178 = vmatprep.subr.mxu0 0.0
  %2179 = vmatpush2.msra.mxu0 0.0
  %2180 = vmatprep.subr.mxu0 0.0
  %2181 = vmatpush2.msra.mxu0 0.0
  %2182 = vmatprep.subr.mxu0 0.0
  %2183 = vmatpush2.msra.mxu0 0.0
  %2184 = vmatprep.subr.mxu0 0.0
  %2185 = vmatpush2.msra.mxu0 0.0
  %2186 = vmatprep.mubr.f32.mxu0 0.0
  %2187 = vmatmul.mubr.f32.gmra.mxu0 %v2022
  %v2188 = vpop.f32.mrf.mxu0
  %v2189 = vadd.f32 0.0, %v2188
  %v2190 = vpop.f32.mrf.mxu0
  %v2191 = vadd.f32 0.0, %v2190
  %2192 = vmatprep.mubr.f32.mxu0 0.0
  %2193 = vmatmul.mubr.f32.gmra.mxu0 %v2025
  %v2194 = vpop.f32.mrf.mxu0
  %v2195 = vadd.f32 0.0, %v2194
  %v2196 = vpop.f32.mrf.mxu0
  %v2197 = vadd.f32 0.0, %v2196
  %2198 = vmatprep.mubr.f32.mxu0 0.0
  %2199 = vmatmul.mubr.f32.gmra.mxu0 %v2028
  %v2200 = vpop.f32.mrf.mxu0
  %v2201 = vadd.f32 0.0, %v2200
  %v2202 = vpop.f32.mrf.mxu0
  %v2203 = vadd.f32 0.0, %v2202
  %2204 = vmatprep.mubr.f32.mxu0 0.0
  %2205 = vmatmul.mubr.f32.gmra.mxu0 %v2031
  %v2206 = vpop.f32.mrf.mxu0
  %v2207 = vadd.f32 0.0, %v2206
  %v2208 = vpop.f32.mrf.mxu0
  %v2209 = vadd.f32 0.0, %v2208
  %2210 = vdwg.mxu0
  %v2211 = vadd.f32 %v1967, %v2100
  %v2212 = vadd.f32 %v1968, %v2102
  %v2213 = vadd.f32 %v1969, %v2189
  %v2214 = vadd.f32 %v1970, %v2191
  %v2215 = vadd.f32 %v1971, %v2106
  %v2216 = vadd.f32 %v1972, %v2108
  %v2217 = vadd.f32 %v1973, %v2195
  %v2218 = vadd.f32 %v1974, %v2197
  %v2219 = vadd.f32 %v1975, %v2112
  %v2220 = vadd.f32 %v1976, %v2114
  %v2221 = vadd.f32 %v1977, %v2201
  %v2222 = vadd.f32 %v1978, %v2203
  %v2223 = vadd.f32 %v1979, %v2118
  %v2224 = vadd.f32 %v1980, %v2120
  %v2225 = vadd.f32 %v1981, %v2207
  %v2226 = vadd.f32 %v1982, %v2209
  %v2227 = vmax.f32 %v2211, 0.0
  %v2228 = vmax.f32 %v2212, 0.0
  %v2229 = vmax.f32 %v2213, 0.0
  %v2230 = vmax.f32 %v2214, 0.0
  %v2231 = vmax.f32 %v2215, 0.0
  %v2232 = vmax.f32 %v2216, 0.0
  %v2233 = vmax.f32 %v2217, 0.0
  %v2234 = vmax.f32 %v2218, 0.0
  %v2235 = vmax.f32 %v2219, 0.0
  %v2236 = vmax.f32 %v2220, 0.0
  %v2237 = vmax.f32 %v2221, 0.0
  %v2238 = vmax.f32 %v2222, 0.0
  %v2239 = vmax.f32 %v2223, 0.0
  %v2240 = vmax.f32 %v2224, 0.0
  %v2241 = vmax.f32 %v2225, 0.0
  %v2242 = vmax.f32 %v2226, 0.0
  %v2243 = vld [vmem:[%s6] sm:$0xff]
  %2245 = vset.pattern.permute.xlu0 0
  %2246 = vperm.xlu0 %2245, %v2243
  %v2247 = vpop.permute.xlu0 %2246
  %2249 = vrot.lane.b32.xlu0 %v2227, 17
  %v2250 = vpop.permute.xlu0 %2249
  %2251 = vrot.lane.b32.xlu0 %v2231, 17
  %v2252 = vpop.permute.xlu0 %2251
  %2253 = vrot.lane.b32.xlu0 %v2235, 17
  %v2254 = vpop.permute.xlu0 %2253
  %2255 = vrot.lane.b32.xlu0 %v2239, 17
  %v2256 = vpop.permute.xlu0 %2255
  %2257 = vrot.lane.b32.xlu0 %v2228, 17
  %v2258 = vpop.permute.xlu0 %2257
  %2259 = vrot.lane.b32.xlu0 %v2232, 17
  %v2260 = vpop.permute.xlu0 %2259
  %2261 = vrot.lane.b32.xlu0 %v2236, 17
  %v2262 = vpop.permute.xlu0 %2261
  %2263 = vrot.lane.b32.xlu0 %v2240, 17
  %v2264 = vpop.permute.xlu0 %2263
  %2265 = vrot.lane.b32.xlu0 %v2229, 17
  %v2266 = vpop.permute.xlu0 %2265
  %2267 = vrot.lane.b32.xlu0 %v2233, 17
  %v2268 = vpop.permute.xlu0 %2267
  %2269 = vrot.lane.b32.xlu0 %v2237, 17
  %v2270 = vpop.permute.xlu0 %2269
  %2271 = vrot.lane.b32.xlu0 %v2241, 17
  %v2272 = vpop.permute.xlu0 %2271
  %2273 = vrot.lane.b32.xlu0 %v2230, 17
  %v2274 = vpop.permute.xlu0 %2273
  %2275 = vrot.lane.b32.xlu0 %v2234, 17
  %v2276 = vpop.permute.xlu0 %2275
  %2277 = vrot.lane.b32.xlu0 %v2238, 17
  %v2278 = vpop.permute.xlu0 %2277
  %2279 = vrot.lane.b32.xlu0 %v2242, 17
  %v2280 = vpop.permute.xlu0 %2279
  %v2281 = vsel %vm72, %v2266, %v2274
  %v2282 = vsel %vm72, %v2268, %v2276
  %v2283 = vsel %vm72, %v2270, %v2278
  %v2284 = vsel %vm72, %v2272, %v2280
  %v2285 = vsel %vm72, %v2258, %v2266
  %v2286 = vsel %vm72, %v2260, %v2268
  %v2287 = vsel %vm72, %v2262, %v2270
  %v2288 = vsel %vm72, %v2264, %v2272
  %v2289 = vsel %vm72, %v2250, %v2258
  %v2290 = vsel %vm72, %v2252, %v2260
  %v2291 = vsel %vm72, %v2254, %v2262
  %v2292 = vsel %vm72, %v2256, %v2264
  %v2293 = vsel %vm72, %v2274, %v2250
  %v2294 = vsel %vm72, %v2276, %v2252
  %v2295 = vsel %vm72, %v2278, %v2254
  %v2296 = vsel %vm72, %v2280, %v2256
  %v2297 = vmul.f32 %v2293, %v80
  %v2298 = vmul.f32 %v2289, %v84
  %v2299 = vmul.f32 %v2285, %v88
  %v2300 = vmul.f32 %v2281, %v92
  %v2301 = vmul.f32 %v2294, %v80
  %v2302 = vmul.f32 %v2290, %v84
  %v2303 = vmul.f32 %v2286, %v88
  %v2304 = vmul.f32 %v2282, %v92
  %v2305 = vmul.f32 %v2295, %v80
  %v2306 = vmul.f32 %v2291, %v84
  %v2307 = vmul.f32 %v2287, %v88
  %v2308 = vmul.f32 %v2283, %v92
  %v2309 = vmul.f32 %v2296, %v80
  %v2310 = vmul.f32 %v2292, %v84
  %v2311 = vmul.f32 %v2288, %v88
  %v2312 = vmul.f32 %v2284, %v92
  %v2313 = vld [vmem:[%s5] sm:$0xff]
  %vm2314 = vcmask 261120
  %v2316 = vsel %vm2314, %v2313, 0
  %2318 = vmatprep.subr.mxu0 0.0
  %2319 = vmatpush1.msra.mxu0 0.0
  %2320 = vmatprep.subr.mxu0 0.0
  %2321 = vmatpush1.msra.mxu0 0.0
  %2322 = vmatprep.subr.mxu0 0.0
  %2323 = vmatpush1.msra.mxu0 0.0
  %2324 = vmatprep.subr.mxu0 0.0
  %2325 = vmatpush1.msra.mxu0 0.0
  %2326 = vmatprep.subr.mxu0 0.0
  %2327 = vmatpush1.msra.mxu0 0.0
  %2328 = vmatprep.subr.mxu0 0.0
  %2329 = vmatpush1.msra.mxu0 0.0
  %2330 = vmatprep.subr.mxu0 0.0
  %2331 = vmatpush1.msra.mxu0 0.0
  %2332 = vmatprep.subr.mxu0 0.0
  %2333 = vmatpush1.msra.mxu0 0.0
  %2334 = vmatprep.subr.mxu0 0.0
  %2335 = vmatpush1.msra.mxu0 0.0
  %2336 = vmatprep.subr.mxu0 0.0
  %2337 = vmatpush1.msra.mxu0 0.0
  %2338 = vmatprep.subr.mxu0 0.0
  %2339 = vmatpush1.msra.mxu0 0.0
  %2340 = vmatprep.subr.mxu0 0.0
  %2341 = vmatpush1.msra.mxu0 0.0
  %2342 = vmatprep.subr.mxu0 %v2310
  %2343 = vmatpush1.msra.mxu0 %v2309
  %2344 = vmatprep.subr.mxu0 %v2306
  %2345 = vmatpush1.msra.mxu0 %v2305
  %2346 = vmatprep.subr.mxu0 %v2302
  %2347 = vmatpush1.msra.mxu0 %v2301
  %2348 = vmatprep.subr.mxu0 %v2298
  %2349 = vmatpush1.msra.mxu0 %v2297
  %2350 = vmatprep.subr.mxu0 0.0
  %2351 = vmatpush2.msra.mxu0 0.0
  %2352 = vmatprep.subr.mxu0 0.0
  %2353 = vmatpush2.msra.mxu0 0.0
  %2354 = vmatprep.subr.mxu0 0.0
  %2355 = vmatpush2.msra.mxu0 0.0
  %2356 = vmatprep.subr.mxu0 0.0
  %2357 = vmatpush2.msra.mxu0 0.0
  %2358 = vmatprep.subr.mxu0 0.0
  %2359 = vmatpush2.msra.mxu0 0.0
  %2360 = vmatprep.subr.mxu0 0.0
  %2361 = vmatpush2.msra.mxu0 0.0
  %2362 = vmatprep.subr.mxu0 0.0
  %2363 = vmatpush2.msra.mxu0 0.0
  %2364 = vmatprep.subr.mxu0 0.0
  %2365 = vmatpush2.msra.mxu0 0.0
  %2366 = vmatprep.subr.mxu0 0.0
  %2367 = vmatpush2.msra.mxu0 0.0
  %2368 = vmatprep.subr.mxu0 0.0
  %2369 = vmatpush2.msra.mxu0 0.0
  %2370 = vmatprep.subr.mxu0 0.0
  %2371 = vmatpush2.msra.mxu0 0.0
  %2372 = vmatprep.subr.mxu0 0.0
  %2373 = vmatpush2.msra.mxu0 0.0
  %2374 = vmatprep.subr.mxu0 0.0
  %2375 = vmatpush2.msra.mxu0 0.0
  %2376 = vmatprep.subr.mxu0 0.0
  %2377 = vmatpush2.msra.mxu0 0.0
  %2378 = vmatprep.subr.mxu0 0.0
  %2379 = vmatpush2.msra.mxu0 0.0
  %2380 = vmatprep.subr.mxu0 0.0
  %2381 = vmatpush2.msra.mxu0 0.0
  %2382 = vmatprep.mubr.f32.mxu0 0.0
  %2383 = vmatmul.mubr.f32.gmra.mxu0 %v2316
  %v2384 = vpop.f32.mrf.mxu0
  %v2385 = vadd.f32 0.0, %v2384
  %v2386 = vpop.f32.mrf.mxu0
  %v2387 = vadd.f32 0.0, %v2386
  %2388 = vdwg.mxu0
  %2389 = vmatprep.subr.mxu0 0.0
  %2390 = vmatpush1.msra.mxu0 0.0
  %2391 = vmatprep.subr.mxu0 0.0
  %2392 = vmatpush1.msra.mxu0 0.0
  %2393 = vmatprep.subr.mxu0 0.0
  %2394 = vmatpush1.msra.mxu0 0.0
  %2395 = vmatprep.subr.mxu0 0.0
  %2396 = vmatpush1.msra.mxu0 0.0
  %2397 = vmatprep.subr.mxu0 0.0
  %2398 = vmatpush1.msra.mxu0 0.0
  %2399 = vmatprep.subr.mxu0 0.0
  %2400 = vmatpush1.msra.mxu0 0.0
  %2401 = vmatprep.subr.mxu0 0.0
  %2402 = vmatpush1.msra.mxu0 0.0
  %2403 = vmatprep.subr.mxu0 0.0
  %2404 = vmatpush1.msra.mxu0 0.0
  %2405 = vmatprep.subr.mxu0 0.0
  %2406 = vmatpush1.msra.mxu0 0.0
  %2407 = vmatprep.subr.mxu0 0.0
  %2408 = vmatpush1.msra.mxu0 0.0
  %2409 = vmatprep.subr.mxu0 0.0
  %2410 = vmatpush1.msra.mxu0 0.0
  %2411 = vmatprep.subr.mxu0 0.0
  %2412 = vmatpush1.msra.mxu0 0.0
  %2413 = vmatprep.subr.mxu0 %v2312
  %2414 = vmatpush1.msra.mxu0 %v2311
  %2415 = vmatprep.subr.mxu0 %v2308
  %2416 = vmatpush1.msra.mxu0 %v2307
  %2417 = vmatprep.subr.mxu0 %v2304
  %2418 = vmatpush1.msra.mxu0 %v2303
  %2419 = vmatprep.subr.mxu0 %v2300
  %2420 = vmatpush1.msra.mxu0 %v2299
  %2421 = vmatprep.subr.mxu0 0.0
  %2422 = vmatpush2.msra.mxu0 0.0
  %2423 = vmatprep.subr.mxu0 0.0
  %2424 = vmatpush2.msra.mxu0 0.0
  %2425 = vmatprep.subr.mxu0 0.0
  %2426 = vmatpush2.msra.mxu0 0.0
  %2427 = vmatprep.subr.mxu0 0.0
  %2428 = vmatpush2.msra.mxu0 0.0
  %2429 = vmatprep.subr.mxu0 0.0
  %2430 = vmatpush2.msra.mxu0 0.0
  %2431 = vmatprep.subr.mxu0 0.0
  %2432 = vmatpush2.msra.mxu0 0.0
  %2433 = vmatprep.subr.mxu0 0.0
  %2434 = vmatpush2.msra.mxu0 0.0
  %2435 = vmatprep.subr.mxu0 0.0
  %2436 = vmatpush2.msra.mxu0 0.0
  %2437 = vmatprep.subr.mxu0 0.0
  %2438 = vmatpush2.msra.mxu0 0.0
  %2439 = vmatprep.subr.mxu0 0.0
  %2440 = vmatpush2.msra.mxu0 0.0
  %2441 = vmatprep.subr.mxu0 0.0
  %2442 = vmatpush2.msra.mxu0 0.0
  %2443 = vmatprep.subr.mxu0 0.0
  %2444 = vmatpush2.msra.mxu0 0.0
  %2445 = vmatprep.subr.mxu0 0.0
  %2446 = vmatpush2.msra.mxu0 0.0
  %2447 = vmatprep.subr.mxu0 0.0
  %2448 = vmatpush2.msra.mxu0 0.0
  %2449 = vmatprep.subr.mxu0 0.0
  %2450 = vmatpush2.msra.mxu0 0.0
  %2451 = vmatprep.subr.mxu0 0.0
  %2452 = vmatpush2.msra.mxu0 0.0
  %2453 = vmatprep.mubr.f32.mxu0 0.0
  %2454 = vmatmul.mubr.f32.gmra.mxu0 %v2316
  %v2455 = vpop.f32.mrf.mxu0
  %v2456 = vadd.f32 0.0, %v2455
  %v2457 = vpop.f32.mrf.mxu0
  %v2458 = vadd.f32 0.0, %v2457
  %2459 = vdwg.mxu0
  %v2460 = vadd.f32 %v2247, %v2385
  %v2461 = vadd.f32 %v2247, %v2387
  %v2462 = vadd.f32 %v2247, %v2456
  %v2463 = vadd.f32 %v2247, %v2458
  %2464 = vrot.lane.b32.xlu0 %v2227, 16
  %v2465 = vpop.permute.xlu0 %2464
  %2466 = vrot.lane.b32.xlu0 %v2231, 16
  %v2467 = vpop.permute.xlu0 %2466
  %2468 = vrot.lane.b32.xlu0 %v2235, 16
  %v2469 = vpop.permute.xlu0 %2468
  %2470 = vrot.lane.b32.xlu0 %v2239, 16
  %v2471 = vpop.permute.xlu0 %2470
  %2472 = vrot.lane.b32.xlu0 %v2228, 16
  %v2473 = vpop.permute.xlu0 %2472
  %2474 = vrot.lane.b32.xlu0 %v2232, 16
  %v2475 = vpop.permute.xlu0 %2474
  %2476 = vrot.lane.b32.xlu0 %v2236, 16
  %v2477 = vpop.permute.xlu0 %2476
  %2478 = vrot.lane.b32.xlu0 %v2240, 16
  %v2479 = vpop.permute.xlu0 %2478
  %2480 = vrot.lane.b32.xlu0 %v2229, 16
  %v2481 = vpop.permute.xlu0 %2480
  %2482 = vrot.lane.b32.xlu0 %v2233, 16
  %v2483 = vpop.permute.xlu0 %2482
  %2484 = vrot.lane.b32.xlu0 %v2237, 16
  %v2485 = vpop.permute.xlu0 %2484
  %2486 = vrot.lane.b32.xlu0 %v2241, 16
  %v2487 = vpop.permute.xlu0 %2486
  %2488 = vrot.lane.b32.xlu0 %v2230, 16
  %v2489 = vpop.permute.xlu0 %2488
  %2490 = vrot.lane.b32.xlu0 %v2234, 16
  %v2491 = vpop.permute.xlu0 %2490
  %2492 = vrot.lane.b32.xlu0 %v2238, 16
  %v2493 = vpop.permute.xlu0 %2492
  %2494 = vrot.lane.b32.xlu0 %v2242, 16
  %v2495 = vpop.permute.xlu0 %2494
  %v2496 = vsel %vm316, %v2481, %v2489
  %v2497 = vsel %vm316, %v2483, %v2491
  %v2498 = vsel %vm316, %v2485, %v2493
  %v2499 = vsel %vm316, %v2487, %v2495
  %v2500 = vsel %vm316, %v2473, %v2481
  %v2501 = vsel %vm316, %v2475, %v2483
  %v2502 = vsel %vm316, %v2477, %v2485
  %v2503 = vsel %vm316, %v2479, %v2487
  %v2504 = vsel %vm316, %v2465, %v2473
  %v2505 = vsel %vm316, %v2467, %v2475
  %v2506 = vsel %vm316, %v2469, %v2477
  %v2507 = vsel %vm316, %v2471, %v2479
  %v2508 = vsel %vm316, %v2489, %v2465
  %v2509 = vsel %vm316, %v2491, %v2467
  %v2510 = vsel %vm316, %v2493, %v2469
  %v2511 = vsel %vm316, %v2495, %v2471
  %v2512 = vmul.f32 %v2508, %v324
  %v2513 = vmul.f32 %v2504, %v328
  %v2514 = vmul.f32 %v2500, %v332
  %v2515 = vmul.f32 %v2496, %v336
  %v2516 = vmul.f32 %v2509, %v324
  %v2517 = vmul.f32 %v2505, %v328
  %v2518 = vmul.f32 %v2501, %v332
  %v2519 = vmul.f32 %v2497, %v336
  %v2520 = vmul.f32 %v2510, %v324
  %v2521 = vmul.f32 %v2506, %v328
  %v2522 = vmul.f32 %v2502, %v332
  %v2523 = vmul.f32 %v2498, %v336
  %v2524 = vmul.f32 %v2511, %v324
  %v2525 = vmul.f32 %v2507, %v328
  %v2526 = vmul.f32 %v2503, %v332
  %v2527 = vmul.f32 %v2499, %v336
  %s2528 = scalar_lea.vmem %s5, 8
  %v2529 = vld [vmem:[%s2528] sm:$0xff]
  %v2531 = vsel %vm2314, %v2529, 0
  %2533 = vmatprep.subr.mxu0 0.0
  %2534 = vmatpush1.msra.mxu0 0.0
  %2535 = vmatprep.subr.mxu0 0.0
  %2536 = vmatpush1.msra.mxu0 0.0
  %2537 = vmatprep.subr.mxu0 0.0
  %2538 = vmatpush1.msra.mxu0 0.0
  %2539 = vmatprep.subr.mxu0 0.0
  %2540 = vmatpush1.msra.mxu0 0.0
  %2541 = vmatprep.subr.mxu0 0.0
  %2542 = vmatpush1.msra.mxu0 0.0
  %2543 = vmatprep.subr.mxu0 0.0
  %2544 = vmatpush1.msra.mxu0 0.0
  %2545 = vmatprep.subr.mxu0 0.0
  %2546 = vmatpush1.msra.mxu0 0.0
  %2547 = vmatprep.subr.mxu0 0.0
  %2548 = vmatpush1.msra.mxu0 0.0
  %2549 = vmatprep.subr.mxu0 0.0
  %2550 = vmatpush1.msra.mxu0 0.0
  %2551 = vmatprep.subr.mxu0 0.0
  %2552 = vmatpush1.msra.mxu0 0.0
  %2553 = vmatprep.subr.mxu0 0.0
  %2554 = vmatpush1.msra.mxu0 0.0
  %2555 = vmatprep.subr.mxu0 0.0
  %2556 = vmatpush1.msra.mxu0 0.0
  %2557 = vmatprep.subr.mxu0 %v2525
  %2558 = vmatpush1.msra.mxu0 %v2524
  %2559 = vmatprep.subr.mxu0 %v2521
  %2560 = vmatpush1.msra.mxu0 %v2520
  %2561 = vmatprep.subr.mxu0 %v2517
  %2562 = vmatpush1.msra.mxu0 %v2516
  %2563 = vmatprep.subr.mxu0 %v2513
  %2564 = vmatpush1.msra.mxu0 %v2512
  %2565 = vmatprep.subr.mxu0 0.0
  %2566 = vmatpush2.msra.mxu0 0.0
  %2567 = vmatprep.subr.mxu0 0.0
  %2568 = vmatpush2.msra.mxu0 0.0
  %2569 = vmatprep.subr.mxu0 0.0
  %2570 = vmatpush2.msra.mxu0 0.0
  %2571 = vmatprep.subr.mxu0 0.0
  %2572 = vmatpush2.msra.mxu0 0.0
  %2573 = vmatprep.subr.mxu0 0.0
  %2574 = vmatpush2.msra.mxu0 0.0
  %2575 = vmatprep.subr.mxu0 0.0
  %2576 = vmatpush2.msra.mxu0 0.0
  %2577 = vmatprep.subr.mxu0 0.0
  %2578 = vmatpush2.msra.mxu0 0.0
  %2579 = vmatprep.subr.mxu0 0.0
  %2580 = vmatpush2.msra.mxu0 0.0
  %2581 = vmatprep.subr.mxu0 0.0
  %2582 = vmatpush2.msra.mxu0 0.0
  %2583 = vmatprep.subr.mxu0 0.0
  %2584 = vmatpush2.msra.mxu0 0.0
  %2585 = vmatprep.subr.mxu0 0.0
  %2586 = vmatpush2.msra.mxu0 0.0
  %2587 = vmatprep.subr.mxu0 0.0
  %2588 = vmatpush2.msra.mxu0 0.0
  %2589 = vmatprep.subr.mxu0 0.0
  %2590 = vmatpush2.msra.mxu0 0.0
  %2591 = vmatprep.subr.mxu0 0.0
  %2592 = vmatpush2.msra.mxu0 0.0
  %2593 = vmatprep.subr.mxu0 0.0
  %2594 = vmatpush2.msra.mxu0 0.0
  %2595 = vmatprep.subr.mxu0 0.0
  %2596 = vmatpush2.msra.mxu0 0.0
  %2597 = vmatprep.mubr.f32.mxu0 0.0
  %2598 = vmatmul.mubr.f32.gmra.mxu0 %v2531
  %v2599 = vpop.f32.mrf.mxu0
  %v2600 = vadd.f32 0.0, %v2599
  %v2601 = vpop.f32.mrf.mxu0
  %v2602 = vadd.f32 0.0, %v2601
  %2603 = vdwg.mxu0
  %2604 = vmatprep.subr.mxu0 0.0
  %2605 = vmatpush1.msra.mxu0 0.0
  %2606 = vmatprep.subr.mxu0 0.0
  %2607 = vmatpush1.msra.mxu0 0.0
  %2608 = vmatprep.subr.mxu0 0.0
  %2609 = vmatpush1.msra.mxu0 0.0
  %2610 = vmatprep.subr.mxu0 0.0
  %2611 = vmatpush1.msra.mxu0 0.0
  %2612 = vmatprep.subr.mxu0 0.0
  %2613 = vmatpush1.msra.mxu0 0.0
  %2614 = vmatprep.subr.mxu0 0.0
  %2615 = vmatpush1.msra.mxu0 0.0
  %2616 = vmatprep.subr.mxu0 0.0
  %2617 = vmatpush1.msra.mxu0 0.0
  %2618 = vmatprep.subr.mxu0 0.0
  %2619 = vmatpush1.msra.mxu0 0.0
  %2620 = vmatprep.subr.mxu0 0.0
  %2621 = vmatpush1.msra.mxu0 0.0
  %2622 = vmatprep.subr.mxu0 0.0
  %2623 = vmatpush1.msra.mxu0 0.0
  %2624 = vmatprep.subr.mxu0 0.0
  %2625 = vmatpush1.msra.mxu0 0.0
  %2626 = vmatprep.subr.mxu0 0.0
  %2627 = vmatpush1.msra.mxu0 0.0
  %2628 = vmatprep.subr.mxu0 %v2527
  %2629 = vmatpush1.msra.mxu0 %v2526
  %2630 = vmatprep.subr.mxu0 %v2523
  %2631 = vmatpush1.msra.mxu0 %v2522
  %2632 = vmatprep.subr.mxu0 %v2519
  %2633 = vmatpush1.msra.mxu0 %v2518
  %2634 = vmatprep.subr.mxu0 %v2515
  %2635 = vmatpush1.msra.mxu0 %v2514
  %2636 = vmatprep.subr.mxu0 0.0
  %2637 = vmatpush2.msra.mxu0 0.0
  %2638 = vmatprep.subr.mxu0 0.0
  %2639 = vmatpush2.msra.mxu0 0.0
  %2640 = vmatprep.subr.mxu0 0.0
  %2641 = vmatpush2.msra.mxu0 0.0
  %2642 = vmatprep.subr.mxu0 0.0
  %2643 = vmatpush2.msra.mxu0 0.0
  %2644 = vmatprep.subr.mxu0 0.0
  %2645 = vmatpush2.msra.mxu0 0.0
  %2646 = vmatprep.subr.mxu0 0.0
  %2647 = vmatpush2.msra.mxu0 0.0
  %2648 = vmatprep.subr.mxu0 0.0
  %2649 = vmatpush2.msra.mxu0 0.0
  %2650 = vmatprep.subr.mxu0 0.0
  %2651 = vmatpush2.msra.mxu0 0.0
  %2652 = vmatprep.subr.mxu0 0.0
  %2653 = vmatpush2.msra.mxu0 0.0
  %2654 = vmatprep.subr.mxu0 0.0
  %2655 = vmatpush2.msra.mxu0 0.0
  %2656 = vmatprep.subr.mxu0 0.0
  %2657 = vmatpush2.msra.mxu0 0.0
  %2658 = vmatprep.subr.mxu0 0.0
  %2659 = vmatpush2.msra.mxu0 0.0
  %2660 = vmatprep.subr.mxu0 0.0
  %2661 = vmatpush2.msra.mxu0 0.0
  %2662 = vmatprep.subr.mxu0 0.0
  %2663 = vmatpush2.msra.mxu0 0.0
  %2664 = vmatprep.subr.mxu0 0.0
  %2665 = vmatpush2.msra.mxu0 0.0
  %2666 = vmatprep.subr.mxu0 0.0
  %2667 = vmatpush2.msra.mxu0 0.0
  %2668 = vmatprep.mubr.f32.mxu0 0.0
  %2669 = vmatmul.mubr.f32.gmra.mxu0 %v2531
  %v2670 = vpop.f32.mrf.mxu0
  %v2671 = vadd.f32 0.0, %v2670
  %v2672 = vpop.f32.mrf.mxu0
  %v2673 = vadd.f32 0.0, %v2672
  %2674 = vdwg.mxu0
  %v2675 = vadd.f32 %v2460, %v2600
  %v2676 = vadd.f32 %v2461, %v2602
  %v2677 = vadd.f32 %v2462, %v2671
  %v2678 = vadd.f32 %v2463, %v2673
  %2679 = vrot.lane.b32.xlu0 %v2227, 15
  %v2680 = vpop.permute.xlu0 %2679
  %2681 = vrot.lane.b32.xlu0 %v2231, 15
  %v2682 = vpop.permute.xlu0 %2681
  %2683 = vrot.lane.b32.xlu0 %v2235, 15
  %v2684 = vpop.permute.xlu0 %2683
  %2685 = vrot.lane.b32.xlu0 %v2239, 15
  %v2686 = vpop.permute.xlu0 %2685
  %2687 = vrot.lane.b32.xlu0 %v2228, 15
  %v2688 = vpop.permute.xlu0 %2687
  %2689 = vrot.lane.b32.xlu0 %v2232, 15
  %v2690 = vpop.permute.xlu0 %2689
  %2691 = vrot.lane.b32.xlu0 %v2236, 15
  %v2692 = vpop.permute.xlu0 %2691
  %2693 = vrot.lane.b32.xlu0 %v2240, 15
  %v2694 = vpop.permute.xlu0 %2693
  %2695 = vrot.lane.b32.xlu0 %v2229, 15
  %v2696 = vpop.permute.xlu0 %2695
  %2697 = vrot.lane.b32.xlu0 %v2233, 15
  %v2698 = vpop.permute.xlu0 %2697
  %2699 = vrot.lane.b32.xlu0 %v2237, 15
  %v2700 = vpop.permute.xlu0 %2699
  %2701 = vrot.lane.b32.xlu0 %v2241, 15
  %v2702 = vpop.permute.xlu0 %2701
  %2703 = vrot.lane.b32.xlu0 %v2230, 15
  %v2704 = vpop.permute.xlu0 %2703
  %2705 = vrot.lane.b32.xlu0 %v2234, 15
  %v2706 = vpop.permute.xlu0 %2705
  %2707 = vrot.lane.b32.xlu0 %v2238, 15
  %v2708 = vpop.permute.xlu0 %2707
  %2709 = vrot.lane.b32.xlu0 %v2242, 15
  %v2710 = vpop.permute.xlu0 %2709
  %v2711 = vsel %vm560, %v2696, %v2704
  %v2712 = vsel %vm560, %v2698, %v2706
  %v2713 = vsel %vm560, %v2700, %v2708
  %v2714 = vsel %vm560, %v2702, %v2710
  %v2715 = vsel %vm560, %v2688, %v2696
  %v2716 = vsel %vm560, %v2690, %v2698
  %v2717 = vsel %vm560, %v2692, %v2700
  %v2718 = vsel %vm560, %v2694, %v2702
  %v2719 = vsel %vm560, %v2680, %v2688
  %v2720 = vsel %vm560, %v2682, %v2690
  %v2721 = vsel %vm560, %v2684, %v2692
  %v2722 = vsel %vm560, %v2686, %v2694
  %v2723 = vsel %vm560, %v2704, %v2680
  %v2724 = vsel %vm560, %v2706, %v2682
  %v2725 = vsel %vm560, %v2708, %v2684
  %v2726 = vsel %vm560, %v2710, %v2686
  %v2727 = vmul.f32 %v2723, %v568
  %v2728 = vmul.f32 %v2719, %v572
  %v2729 = vmul.f32 %v2715, %v576
  %v2730 = vmul.f32 %v2711, %v580
  %v2731 = vmul.f32 %v2724, %v568
  %v2732 = vmul.f32 %v2720, %v572
  %v2733 = vmul.f32 %v2716, %v576
  %v2734 = vmul.f32 %v2712, %v580
  %v2735 = vmul.f32 %v2725, %v568
  %v2736 = vmul.f32 %v2721, %v572
  %v2737 = vmul.f32 %v2717, %v576
  %v2738 = vmul.f32 %v2713, %v580
  %v2739 = vmul.f32 %v2726, %v568
  %v2740 = vmul.f32 %v2722, %v572
  %v2741 = vmul.f32 %v2718, %v576
  %v2742 = vmul.f32 %v2714, %v580
  %s2743 = scalar_lea.vmem %s5, 16
  %v2744 = vld [vmem:[%s2743] sm:$0xff]
  %v2746 = vsel %vm2314, %v2744, 0
  %2748 = vmatprep.subr.mxu0 0.0
  %2749 = vmatpush1.msra.mxu0 0.0
  %2750 = vmatprep.subr.mxu0 0.0
  %2751 = vmatpush1.msra.mxu0 0.0
  %2752 = vmatprep.subr.mxu0 0.0
  %2753 = vmatpush1.msra.mxu0 0.0
  %2754 = vmatprep.subr.mxu0 0.0
  %2755 = vmatpush1.msra.mxu0 0.0
  %2756 = vmatprep.subr.mxu0 0.0
  %2757 = vmatpush1.msra.mxu0 0.0
  %2758 = vmatprep.subr.mxu0 0.0
  %2759 = vmatpush1.msra.mxu0 0.0
  %2760 = vmatprep.subr.mxu0 0.0
  %2761 = vmatpush1.msra.mxu0 0.0
  %2762 = vmatprep.subr.mxu0 0.0
  %2763 = vmatpush1.msra.mxu0 0.0
  %2764 = vmatprep.subr.mxu0 0.0
  %2765 = vmatpush1.msra.mxu0 0.0
  %2766 = vmatprep.subr.mxu0 0.0
  %2767 = vmatpush1.msra.mxu0 0.0
  %2768 = vmatprep.subr.mxu0 0.0
  %2769 = vmatpush1.msra.mxu0 0.0
  %2770 = vmatprep.subr.mxu0 0.0
  %2771 = vmatpush1.msra.mxu0 0.0
  %2772 = vmatprep.subr.mxu0 %v2740
  %2773 = vmatpush1.msra.mxu0 %v2739
  %2774 = vmatprep.subr.mxu0 %v2736
  %2775 = vmatpush1.msra.mxu0 %v2735
  %2776 = vmatprep.subr.mxu0 %v2732
  %2777 = vmatpush1.msra.mxu0 %v2731
  %2778 = vmatprep.subr.mxu0 %v2728
  %2779 = vmatpush1.msra.mxu0 %v2727
  %2780 = vmatprep.subr.mxu0 0.0
  %2781 = vmatpush2.msra.mxu0 0.0
  %2782 = vmatprep.subr.mxu0 0.0
  %2783 = vmatpush2.msra.mxu0 0.0
  %2784 = vmatprep.subr.mxu0 0.0
  %2785 = vmatpush2.msra.mxu0 0.0
  %2786 = vmatprep.subr.mxu0 0.0
  %2787 = vmatpush2.msra.mxu0 0.0
  %2788 = vmatprep.subr.mxu0 0.0
  %2789 = vmatpush2.msra.mxu0 0.0
  %2790 = vmatprep.subr.mxu0 0.0
  %2791 = vmatpush2.msra.mxu0 0.0
  %2792 = vmatprep.subr.mxu0 0.0
  %2793 = vmatpush2.msra.mxu0 0.0
  %2794 = vmatprep.subr.mxu0 0.0
  %2795 = vmatpush2.msra.mxu0 0.0
  %2796 = vmatprep.subr.mxu0 0.0
  %2797 = vmatpush2.msra.mxu0 0.0
  %2798 = vmatprep.subr.mxu0 0.0
  %2799 = vmatpush2.msra.mxu0 0.0
  %2800 = vmatprep.subr.mxu0 0.0
  %2801 = vmatpush2.msra.mxu0 0.0
  %2802 = vmatprep.subr.mxu0 0.0
  %2803 = vmatpush2.msra.mxu0 0.0
  %2804 = vmatprep.subr.mxu0 0.0
  %2805 = vmatpush2.msra.mxu0 0.0
  %2806 = vmatprep.subr.mxu0 0.0
  %2807 = vmatpush2.msra.mxu0 0.0
  %2808 = vmatprep.subr.mxu0 0.0
  %2809 = vmatpush2.msra.mxu0 0.0
  %2810 = vmatprep.subr.mxu0 0.0
  %2811 = vmatpush2.msra.mxu0 0.0
  %2812 = vmatprep.mubr.f32.mxu0 0.0
  %2813 = vmatmul.mubr.f32.gmra.mxu0 %v2746
  %v2814 = vpop.f32.mrf.mxu0
  %v2815 = vadd.f32 0.0, %v2814
  %v2816 = vpop.f32.mrf.mxu0
  %v2817 = vadd.f32 0.0, %v2816
  %2818 = vdwg.mxu0
  %2819 = vmatprep.subr.mxu0 0.0
  %2820 = vmatpush1.msra.mxu0 0.0
  %2821 = vmatprep.subr.mxu0 0.0
  %2822 = vmatpush1.msra.mxu0 0.0
  %2823 = vmatprep.subr.mxu0 0.0
  %2824 = vmatpush1.msra.mxu0 0.0
  %2825 = vmatprep.subr.mxu0 0.0
  %2826 = vmatpush1.msra.mxu0 0.0
  %2827 = vmatprep.subr.mxu0 0.0
  %2828 = vmatpush1.msra.mxu0 0.0
  %2829 = vmatprep.subr.mxu0 0.0
  %2830 = vmatpush1.msra.mxu0 0.0
  %2831 = vmatprep.subr.mxu0 0.0
  %2832 = vmatpush1.msra.mxu0 0.0
  %2833 = vmatprep.subr.mxu0 0.0
  %2834 = vmatpush1.msra.mxu0 0.0
  %2835 = vmatprep.subr.mxu0 0.0
  %2836 = vmatpush1.msra.mxu0 0.0
  %2837 = vmatprep.subr.mxu0 0.0
  %2838 = vmatpush1.msra.mxu0 0.0
  %2839 = vmatprep.subr.mxu0 0.0
  %2840 = vmatpush1.msra.mxu0 0.0
  %2841 = vmatprep.subr.mxu0 0.0
  %2842 = vmatpush1.msra.mxu0 0.0
  %2843 = vmatprep.subr.mxu0 %v2742
  %2844 = vmatpush1.msra.mxu0 %v2741
  %2845 = vmatprep.subr.mxu0 %v2738
  %2846 = vmatpush1.msra.mxu0 %v2737
  %2847 = vmatprep.subr.mxu0 %v2734
  %2848 = vmatpush1.msra.mxu0 %v2733
  %2849 = vmatprep.subr.mxu0 %v2730
  %2850 = vmatpush1.msra.mxu0 %v2729
  %2851 = vmatprep.subr.mxu0 0.0
  %2852 = vmatpush2.msra.mxu0 0.0
  %2853 = vmatprep.subr.mxu0 0.0
  %2854 = vmatpush2.msra.mxu0 0.0
  %2855 = vmatprep.subr.mxu0 0.0
  %2856 = vmatpush2.msra.mxu0 0.0
  %2857 = vmatprep.subr.mxu0 0.0
  %2858 = vmatpush2.msra.mxu0 0.0
  %2859 = vmatprep.subr.mxu0 0.0
  %2860 = vmatpush2.msra.mxu0 0.0
  %2861 = vmatprep.subr.mxu0 0.0
  %2862 = vmatpush2.msra.mxu0 0.0
  %2863 = vmatprep.subr.mxu0 0.0
  %2864 = vmatpush2.msra.mxu0 0.0
  %2865 = vmatprep.subr.mxu0 0.0
  %2866 = vmatpush2.msra.mxu0 0.0
  %2867 = vmatprep.subr.mxu0 0.0
  %2868 = vmatpush2.msra.mxu0 0.0
  %2869 = vmatprep.subr.mxu0 0.0
  %2870 = vmatpush2.msra.mxu0 0.0
  %2871 = vmatprep.subr.mxu0 0.0
  %2872 = vmatpush2.msra.mxu0 0.0
  %2873 = vmatprep.subr.mxu0 0.0
  %2874 = vmatpush2.msra.mxu0 0.0
  %2875 = vmatprep.subr.mxu0 0.0
  %2876 = vmatpush2.msra.mxu0 0.0
  %2877 = vmatprep.subr.mxu0 0.0
  %2878 = vmatpush2.msra.mxu0 0.0
  %2879 = vmatprep.subr.mxu0 0.0
  %2880 = vmatpush2.msra.mxu0 0.0
  %2881 = vmatprep.subr.mxu0 0.0
  %2882 = vmatpush2.msra.mxu0 0.0
  %2883 = vmatprep.mubr.f32.mxu0 0.0
  %2884 = vmatmul.mubr.f32.gmra.mxu0 %v2746
  %v2885 = vpop.f32.mrf.mxu0
  %v2886 = vadd.f32 0.0, %v2885
  %v2887 = vpop.f32.mrf.mxu0
  %v2888 = vadd.f32 0.0, %v2887
  %2889 = vdwg.mxu0
  %v2890 = vadd.f32 %v2675, %v2815
  %v2891 = vadd.f32 %v2676, %v2817
  %v2892 = vadd.f32 %v2677, %v2886
  %v2893 = vadd.f32 %v2678, %v2888
  %2894 = vrot.lane.b32.xlu0 %v2227, 1
  %v2895 = vpop.permute.xlu0 %2894
  %2896 = vrot.lane.b32.xlu0 %v2231, 1
  %v2897 = vpop.permute.xlu0 %2896
  %2898 = vrot.lane.b32.xlu0 %v2235, 1
  %v2899 = vpop.permute.xlu0 %2898
  %2900 = vrot.lane.b32.xlu0 %v2239, 1
  %v2901 = vpop.permute.xlu0 %2900
  %2902 = vrot.lane.b32.xlu0 %v2228, 1
  %v2903 = vpop.permute.xlu0 %2902
  %2904 = vrot.lane.b32.xlu0 %v2232, 1
  %v2905 = vpop.permute.xlu0 %2904
  %2906 = vrot.lane.b32.xlu0 %v2236, 1
  %v2907 = vpop.permute.xlu0 %2906
  %2908 = vrot.lane.b32.xlu0 %v2240, 1
  %v2909 = vpop.permute.xlu0 %2908
  %2910 = vrot.lane.b32.xlu0 %v2229, 1
  %v2911 = vpop.permute.xlu0 %2910
  %2912 = vrot.lane.b32.xlu0 %v2233, 1
  %v2913 = vpop.permute.xlu0 %2912
  %2914 = vrot.lane.b32.xlu0 %v2237, 1
  %v2915 = vpop.permute.xlu0 %2914
  %2916 = vrot.lane.b32.xlu0 %v2241, 1
  %v2917 = vpop.permute.xlu0 %2916
  %2918 = vrot.lane.b32.xlu0 %v2230, 1
  %v2919 = vpop.permute.xlu0 %2918
  %2920 = vrot.lane.b32.xlu0 %v2234, 1
  %v2921 = vpop.permute.xlu0 %2920
  %2922 = vrot.lane.b32.xlu0 %v2238, 1
  %v2923 = vpop.permute.xlu0 %2922
  %2924 = vrot.lane.b32.xlu0 %v2242, 1
  %v2925 = vpop.permute.xlu0 %2924
  %v2926 = vsel %vm804, %v2911, %v2919
  %v2927 = vsel %vm804, %v2913, %v2921
  %v2928 = vsel %vm804, %v2915, %v2923
  %v2929 = vsel %vm804, %v2917, %v2925
  %v2930 = vsel %vm804, %v2903, %v2911
  %v2931 = vsel %vm804, %v2905, %v2913
  %v2932 = vsel %vm804, %v2907, %v2915
  %v2933 = vsel %vm804, %v2909, %v2917
  %v2934 = vsel %vm804, %v2895, %v2903
  %v2935 = vsel %vm804, %v2897, %v2905
  %v2936 = vsel %vm804, %v2899, %v2907
  %v2937 = vsel %vm804, %v2901, %v2909
  %v2938 = vsel %vm804, %v2919, %v2895
  %v2939 = vsel %vm804, %v2921, %v2897
  %v2940 = vsel %vm804, %v2923, %v2899
  %v2941 = vsel %vm804, %v2925, %v2901
  %v2942 = vmul.f32 %v2938, %v812
  %v2943 = vmul.f32 %v2934, %v816
  %v2944 = vmul.f32 %v2930, %v820
  %v2945 = vmul.f32 %v2926, %v824
  %v2946 = vmul.f32 %v2939, %v812
  %v2947 = vmul.f32 %v2935, %v816
  %v2948 = vmul.f32 %v2931, %v820
  %v2949 = vmul.f32 %v2927, %v824
  %v2950 = vmul.f32 %v2940, %v812
  %v2951 = vmul.f32 %v2936, %v816
  %v2952 = vmul.f32 %v2932, %v820
  %v2953 = vmul.f32 %v2928, %v824
  %v2954 = vmul.f32 %v2941, %v812
  %v2955 = vmul.f32 %v2937, %v816
  %v2956 = vmul.f32 %v2933, %v820
  %v2957 = vmul.f32 %v2929, %v824
  %s2958 = scalar_lea.vmem %s5, 24
  %v2959 = vld [vmem:[%s2958] sm:$0xff]
  %v2961 = vsel %vm2314, %v2959, 0
  %2963 = vmatprep.subr.mxu0 0.0
  %2964 = vmatpush1.msra.mxu0 0.0
  %2965 = vmatprep.subr.mxu0 0.0
  %2966 = vmatpush1.msra.mxu0 0.0
  %2967 = vmatprep.subr.mxu0 0.0
  %2968 = vmatpush1.msra.mxu0 0.0
  %2969 = vmatprep.subr.mxu0 0.0
  %2970 = vmatpush1.msra.mxu0 0.0
  %2971 = vmatprep.subr.mxu0 0.0
  %2972 = vmatpush1.msra.mxu0 0.0
  %2973 = vmatprep.subr.mxu0 0.0
  %2974 = vmatpush1.msra.mxu0 0.0
  %2975 = vmatprep.subr.mxu0 0.0
  %2976 = vmatpush1.msra.mxu0 0.0
  %2977 = vmatprep.subr.mxu0 0.0
  %2978 = vmatpush1.msra.mxu0 0.0
  %2979 = vmatprep.subr.mxu0 0.0
  %2980 = vmatpush1.msra.mxu0 0.0
  %2981 = vmatprep.subr.mxu0 0.0
  %2982 = vmatpush1.msra.mxu0 0.0
  %2983 = vmatprep.subr.mxu0 0.0
  %2984 = vmatpush1.msra.mxu0 0.0
  %2985 = vmatprep.subr.mxu0 0.0
  %2986 = vmatpush1.msra.mxu0 0.0
  %2987 = vmatprep.subr.mxu0 %v2955
  %2988 = vmatpush1.msra.mxu0 %v2954
  %2989 = vmatprep.subr.mxu0 %v2951
  %2990 = vmatpush1.msra.mxu0 %v2950
  %2991 = vmatprep.subr.mxu0 %v2947
  %2992 = vmatpush1.msra.mxu0 %v2946
  %2993 = vmatprep.subr.mxu0 %v2943
  %2994 = vmatpush1.msra.mxu0 %v2942
  %2995 = vmatprep.subr.mxu0 0.0
  %2996 = vmatpush2.msra.mxu0 0.0
  %2997 = vmatprep.subr.mxu0 0.0
  %2998 = vmatpush2.msra.mxu0 0.0
  %2999 = vmatprep.subr.mxu0 0.0
  %3000 = vmatpush2.msra.mxu0 0.0
  %3001 = vmatprep.subr.mxu0 0.0
  %3002 = vmatpush2.msra.mxu0 0.0
  %3003 = vmatprep.subr.mxu0 0.0
  %3004 = vmatpush2.msra.mxu0 0.0
  %3005 = vmatprep.subr.mxu0 0.0
  %3006 = vmatpush2.msra.mxu0 0.0
  %3007 = vmatprep.subr.mxu0 0.0
  %3008 = vmatpush2.msra.mxu0 0.0
  %3009 = vmatprep.subr.mxu0 0.0
  %3010 = vmatpush2.msra.mxu0 0.0
  %3011 = vmatprep.subr.mxu0 0.0
  %3012 = vmatpush2.msra.mxu0 0.0
  %3013 = vmatprep.subr.mxu0 0.0
  %3014 = vmatpush2.msra.mxu0 0.0
  %3015 = vmatprep.subr.mxu0 0.0
  %3016 = vmatpush2.msra.mxu0 0.0
  %3017 = vmatprep.subr.mxu0 0.0
  %3018 = vmatpush2.msra.mxu0 0.0
  %3019 = vmatprep.subr.mxu0 0.0
  %3020 = vmatpush2.msra.mxu0 0.0
  %3021 = vmatprep.subr.mxu0 0.0
  %3022 = vmatpush2.msra.mxu0 0.0
  %3023 = vmatprep.subr.mxu0 0.0
  %3024 = vmatpush2.msra.mxu0 0.0
  %3025 = vmatprep.subr.mxu0 0.0
  %3026 = vmatpush2.msra.mxu0 0.0
  %3027 = vmatprep.mubr.f32.mxu0 0.0
  %3028 = vmatmul.mubr.f32.gmra.mxu0 %v2961
  %v3029 = vpop.f32.mrf.mxu0
  %v3030 = vadd.f32 0.0, %v3029
  %v3031 = vpop.f32.mrf.mxu0
  %v3032 = vadd.f32 0.0, %v3031
  %3033 = vdwg.mxu0
  %3034 = vmatprep.subr.mxu0 0.0
  %3035 = vmatpush1.msra.mxu0 0.0
  %3036 = vmatprep.subr.mxu0 0.0
  %3037 = vmatpush1.msra.mxu0 0.0
  %3038 = vmatprep.subr.mxu0 0.0
  %3039 = vmatpush1.msra.mxu0 0.0
  %3040 = vmatprep.subr.mxu0 0.0
  %3041 = vmatpush1.msra.mxu0 0.0
  %3042 = vmatprep.subr.mxu0 0.0
  %3043 = vmatpush1.msra.mxu0 0.0
  %3044 = vmatprep.subr.mxu0 0.0
  %3045 = vmatpush1.msra.mxu0 0.0
  %3046 = vmatprep.subr.mxu0 0.0
  %3047 = vmatpush1.msra.mxu0 0.0
  %3048 = vmatprep.subr.mxu0 0.0
  %3049 = vmatpush1.msra.mxu0 0.0
  %3050 = vmatprep.subr.mxu0 0.0
  %3051 = vmatpush1.msra.mxu0 0.0
  %3052 = vmatprep.subr.mxu0 0.0
  %3053 = vmatpush1.msra.mxu0 0.0
  %3054 = vmatprep.subr.mxu0 0.0
  %3055 = vmatpush1.msra.mxu0 0.0
  %3056 = vmatprep.subr.mxu0 0.0
  %3057 = vmatpush1.msra.mxu0 0.0
  %3058 = vmatprep.subr.mxu0 %v2957
  %3059 = vmatpush1.msra.mxu0 %v2956
  %3060 = vmatprep.subr.mxu0 %v2953
  %3061 = vmatpush1.msra.mxu0 %v2952
  %3062 = vmatprep.subr.mxu0 %v2949
  %3063 = vmatpush1.msra.mxu0 %v2948
  %3064 = vmatprep.subr.mxu0 %v2945
  %3065 = vmatpush1.msra.mxu0 %v2944
  %3066 = vmatprep.subr.mxu0 0.0
  %3067 = vmatpush2.msra.mxu0 0.0
  %3068 = vmatprep.subr.mxu0 0.0
  %3069 = vmatpush2.msra.mxu0 0.0
  %3070 = vmatprep.subr.mxu0 0.0
  %3071 = vmatpush2.msra.mxu0 0.0
  %3072 = vmatprep.subr.mxu0 0.0
  %3073 = vmatpush2.msra.mxu0 0.0
  %3074 = vmatprep.subr.mxu0 0.0
  %3075 = vmatpush2.msra.mxu0 0.0
  %3076 = vmatprep.subr.mxu0 0.0
  %3077 = vmatpush2.msra.mxu0 0.0
  %3078 = vmatprep.subr.mxu0 0.0
  %3079 = vmatpush2.msra.mxu0 0.0
  %3080 = vmatprep.subr.mxu0 0.0
  %3081 = vmatpush2.msra.mxu0 0.0
  %3082 = vmatprep.subr.mxu0 0.0
  %3083 = vmatpush2.msra.mxu0 0.0
  %3084 = vmatprep.subr.mxu0 0.0
  %3085 = vmatpush2.msra.mxu0 0.0
  %3086 = vmatprep.subr.mxu0 0.0
  %3087 = vmatpush2.msra.mxu0 0.0
  %3088 = vmatprep.subr.mxu0 0.0
  %3089 = vmatpush2.msra.mxu0 0.0
  %3090 = vmatprep.subr.mxu0 0.0
  %3091 = vmatpush2.msra.mxu0 0.0
  %3092 = vmatprep.subr.mxu0 0.0
  %3093 = vmatpush2.msra.mxu0 0.0
  %3094 = vmatprep.subr.mxu0 0.0
  %3095 = vmatpush2.msra.mxu0 0.0
  %3096 = vmatprep.subr.mxu0 0.0
  %3097 = vmatpush2.msra.mxu0 0.0
  %3098 = vmatprep.mubr.f32.mxu0 0.0
  %3099 = vmatmul.mubr.f32.gmra.mxu0 %v2961
  %v3100 = vpop.f32.mrf.mxu0
  %v3101 = vadd.f32 0.0, %v3100
  %v3102 = vpop.f32.mrf.mxu0
  %v3103 = vadd.f32 0.0, %v3102
  %3104 = vdwg.mxu0
  %v3105 = vadd.f32 %v2890, %v3030
  %v3106 = vadd.f32 %v2891, %v3032
  %v3107 = vadd.f32 %v2892, %v3101
  %v3108 = vadd.f32 %v2893, %v3103
  %s3109 = scalar_lea.vmem %s5, 32
  %v3110 = vld [vmem:[%s3109] sm:$0xff]
  %v3112 = vsel %vm2314, %v3110, 0
  %3114 = vmatprep.subr.mxu0 0.0
  %3115 = vmatpush1.msra.mxu0 0.0
  %3116 = vmatprep.subr.mxu0 0.0
  %3117 = vmatpush1.msra.mxu0 0.0
  %3118 = vmatprep.subr.mxu0 0.0
  %3119 = vmatpush1.msra.mxu0 0.0
  %3120 = vmatprep.subr.mxu0 0.0
  %3121 = vmatpush1.msra.mxu0 0.0
  %3122 = vmatprep.subr.mxu0 0.0
  %3123 = vmatpush1.msra.mxu0 0.0
  %3124 = vmatprep.subr.mxu0 0.0
  %3125 = vmatpush1.msra.mxu0 0.0
  %3126 = vmatprep.subr.mxu0 0.0
  %3127 = vmatpush1.msra.mxu0 0.0
  %3128 = vmatprep.subr.mxu0 0.0
  %3129 = vmatpush1.msra.mxu0 0.0
  %3130 = vmatprep.subr.mxu0 0.0
  %3131 = vmatpush1.msra.mxu0 0.0
  %3132 = vmatprep.subr.mxu0 0.0
  %3133 = vmatpush1.msra.mxu0 0.0
  %3134 = vmatprep.subr.mxu0 0.0
  %3135 = vmatpush1.msra.mxu0 0.0
  %3136 = vmatprep.subr.mxu0 0.0
  %3137 = vmatpush1.msra.mxu0 0.0
  %3138 = vmatprep.subr.mxu0 %v2240
  %3139 = vmatpush1.msra.mxu0 %v2239
  %3140 = vmatprep.subr.mxu0 %v2236
  %3141 = vmatpush1.msra.mxu0 %v2235
  %3142 = vmatprep.subr.mxu0 %v2232
  %3143 = vmatpush1.msra.mxu0 %v2231
  %3144 = vmatprep.subr.mxu0 %v2228
  %3145 = vmatpush1.msra.mxu0 %v2227
  %3146 = vmatprep.subr.mxu0 0.0
  %3147 = vmatpush2.msra.mxu0 0.0
  %3148 = vmatprep.subr.mxu0 0.0
  %3149 = vmatpush2.msra.mxu0 0.0
  %3150 = vmatprep.subr.mxu0 0.0
  %3151 = vmatpush2.msra.mxu0 0.0
  %3152 = vmatprep.subr.mxu0 0.0
  %3153 = vmatpush2.msra.mxu0 0.0
  %3154 = vmatprep.subr.mxu0 0.0
  %3155 = vmatpush2.msra.mxu0 0.0
  %3156 = vmatprep.subr.mxu0 0.0
  %3157 = vmatpush2.msra.mxu0 0.0
  %3158 = vmatprep.subr.mxu0 0.0
  %3159 = vmatpush2.msra.mxu0 0.0
  %3160 = vmatprep.subr.mxu0 0.0
  %3161 = vmatpush2.msra.mxu0 0.0
  %3162 = vmatprep.subr.mxu0 0.0
  %3163 = vmatpush2.msra.mxu0 0.0
  %3164 = vmatprep.subr.mxu0 0.0
  %3165 = vmatpush2.msra.mxu0 0.0
  %3166 = vmatprep.subr.mxu0 0.0
  %3167 = vmatpush2.msra.mxu0 0.0
  %3168 = vmatprep.subr.mxu0 0.0
  %3169 = vmatpush2.msra.mxu0 0.0
  %3170 = vmatprep.subr.mxu0 0.0
  %3171 = vmatpush2.msra.mxu0 0.0
  %3172 = vmatprep.subr.mxu0 0.0
  %3173 = vmatpush2.msra.mxu0 0.0
  %3174 = vmatprep.subr.mxu0 0.0
  %3175 = vmatpush2.msra.mxu0 0.0
  %3176 = vmatprep.subr.mxu0 0.0
  %3177 = vmatpush2.msra.mxu0 0.0
  %3178 = vmatprep.mubr.f32.mxu0 0.0
  %3179 = vmatmul.mubr.f32.gmra.mxu0 %v3112
  %v3180 = vpop.f32.mrf.mxu0
  %v3181 = vadd.f32 0.0, %v3180
  %v3182 = vpop.f32.mrf.mxu0
  %v3183 = vadd.f32 0.0, %v3182
  %3184 = vdwg.mxu0
  %3185 = vmatprep.subr.mxu0 0.0
  %3186 = vmatpush1.msra.mxu0 0.0
  %3187 = vmatprep.subr.mxu0 0.0
  %3188 = vmatpush1.msra.mxu0 0.0
  %3189 = vmatprep.subr.mxu0 0.0
  %3190 = vmatpush1.msra.mxu0 0.0
  %3191 = vmatprep.subr.mxu0 0.0
  %3192 = vmatpush1.msra.mxu0 0.0
  %3193 = vmatprep.subr.mxu0 0.0
  %3194 = vmatpush1.msra.mxu0 0.0
  %3195 = vmatprep.subr.mxu0 0.0
  %3196 = vmatpush1.msra.mxu0 0.0
  %3197 = vmatprep.subr.mxu0 0.0
  %3198 = vmatpush1.msra.mxu0 0.0
  %3199 = vmatprep.subr.mxu0 0.0
  %3200 = vmatpush1.msra.mxu0 0.0
  %3201 = vmatprep.subr.mxu0 0.0
  %3202 = vmatpush1.msra.mxu0 0.0
  %3203 = vmatprep.subr.mxu0 0.0
  %3204 = vmatpush1.msra.mxu0 0.0
  %3205 = vmatprep.subr.mxu0 0.0
  %3206 = vmatpush1.msra.mxu0 0.0
  %3207 = vmatprep.subr.mxu0 0.0
  %3208 = vmatpush1.msra.mxu0 0.0
  %3209 = vmatprep.subr.mxu0 %v2242
  %3210 = vmatpush1.msra.mxu0 %v2241
  %3211 = vmatprep.subr.mxu0 %v2238
  %3212 = vmatpush1.msra.mxu0 %v2237
  %3213 = vmatprep.subr.mxu0 %v2234
  %3214 = vmatpush1.msra.mxu0 %v2233
  %3215 = vmatprep.subr.mxu0 %v2230
  %3216 = vmatpush1.msra.mxu0 %v2229
  %3217 = vmatprep.subr.mxu0 0.0
  %3218 = vmatpush2.msra.mxu0 0.0
  %3219 = vmatprep.subr.mxu0 0.0
  %3220 = vmatpush2.msra.mxu0 0.0
  %3221 = vmatprep.subr.mxu0 0.0
  %3222 = vmatpush2.msra.mxu0 0.0
  %3223 = vmatprep.subr.mxu0 0.0
  %3224 = vmatpush2.msra.mxu0 0.0
  %3225 = vmatprep.subr.mxu0 0.0
  %3226 = vmatpush2.msra.mxu0 0.0
  %3227 = vmatprep.subr.mxu0 0.0
  %3228 = vmatpush2.msra.mxu0 0.0
  %3229 = vmatprep.subr.mxu0 0.0
  %3230 = vmatpush2.msra.mxu0 0.0
  %3231 = vmatprep.subr.mxu0 0.0
  %3232 = vmatpush2.msra.mxu0 0.0
  %3233 = vmatprep.subr.mxu0 0.0
  %3234 = vmatpush2.msra.mxu0 0.0
  %3235 = vmatprep.subr.mxu0 0.0
  %3236 = vmatpush2.msra.mxu0 0.0
  %3237 = vmatprep.subr.mxu0 0.0
  %3238 = vmatpush2.msra.mxu0 0.0
  %3239 = vmatprep.subr.mxu0 0.0
  %3240 = vmatpush2.msra.mxu0 0.0
  %3241 = vmatprep.subr.mxu0 0.0
  %3242 = vmatpush2.msra.mxu0 0.0
  %3243 = vmatprep.subr.mxu0 0.0
  %3244 = vmatpush2.msra.mxu0 0.0
  %3245 = vmatprep.subr.mxu0 0.0
  %3246 = vmatpush2.msra.mxu0 0.0
  %3247 = vmatprep.subr.mxu0 0.0
  %3248 = vmatpush2.msra.mxu0 0.0
  %3249 = vmatprep.mubr.f32.mxu0 0.0
  %3250 = vmatmul.mubr.f32.gmra.mxu0 %v3112
  %v3251 = vpop.f32.mrf.mxu0
  %v3252 = vadd.f32 0.0, %v3251
  %v3253 = vpop.f32.mrf.mxu0
  %v3254 = vadd.f32 0.0, %v3253
  %3255 = vdwg.mxu0
  %v3256 = vadd.f32 %v3105, %v3181
  %v3257 = vadd.f32 %v3106, %v3183
  %v3258 = vadd.f32 %v3107, %v3252
  %v3259 = vadd.f32 %v3108, %v3254
  %3260 = vrot.lane.b32.xlu0 %v2227, 127
  %v3261 = vpop.permute.xlu0 %3260
  %3262 = vrot.lane.b32.xlu0 %v2231, 127
  %v3263 = vpop.permute.xlu0 %3262
  %3264 = vrot.lane.b32.xlu0 %v2235, 127
  %v3265 = vpop.permute.xlu0 %3264
  %3266 = vrot.lane.b32.xlu0 %v2239, 127
  %v3267 = vpop.permute.xlu0 %3266
  %3268 = vrot.lane.b32.xlu0 %v2228, 127
  %v3269 = vpop.permute.xlu0 %3268
  %3270 = vrot.lane.b32.xlu0 %v2232, 127
  %v3271 = vpop.permute.xlu0 %3270
  %3272 = vrot.lane.b32.xlu0 %v2236, 127
  %v3273 = vpop.permute.xlu0 %3272
  %3274 = vrot.lane.b32.xlu0 %v2240, 127
  %v3275 = vpop.permute.xlu0 %3274
  %3276 = vrot.lane.b32.xlu0 %v2229, 127
  %v3277 = vpop.permute.xlu0 %3276
  %3278 = vrot.lane.b32.xlu0 %v2233, 127
  %v3279 = vpop.permute.xlu0 %3278
  %3280 = vrot.lane.b32.xlu0 %v2237, 127
  %v3281 = vpop.permute.xlu0 %3280
  %3282 = vrot.lane.b32.xlu0 %v2241, 127
  %v3283 = vpop.permute.xlu0 %3282
  %3284 = vrot.lane.b32.xlu0 %v2230, 127
  %v3285 = vpop.permute.xlu0 %3284
  %3286 = vrot.lane.b32.xlu0 %v2234, 127
  %v3287 = vpop.permute.xlu0 %3286
  %3288 = vrot.lane.b32.xlu0 %v2238, 127
  %v3289 = vpop.permute.xlu0 %3288
  %3290 = vrot.lane.b32.xlu0 %v2242, 127
  %v3291 = vpop.permute.xlu0 %3290
  %v3292 = vsel %vm1259, %v3277, %v3285
  %v3293 = vsel %vm1259, %v3279, %v3287
  %v3294 = vsel %vm1259, %v3281, %v3289
  %v3295 = vsel %vm1259, %v3283, %v3291
  %v3296 = vsel %vm1259, %v3269, %v3277
  %v3297 = vsel %vm1259, %v3271, %v3279
  %v3298 = vsel %vm1259, %v3273, %v3281
  %v3299 = vsel %vm1259, %v3275, %v3283
  %v3300 = vsel %vm1259, %v3261, %v3269
  %v3301 = vsel %vm1259, %v3263, %v3271
  %v3302 = vsel %vm1259, %v3265, %v3273
  %v3303 = vsel %vm1259, %v3267, %v3275
  %v3304 = vsel %vm1259, %v3285, %v3261
  %v3305 = vsel %vm1259, %v3287, %v3263
  %v3306 = vsel %vm1259, %v3289, %v3265
  %v3307 = vsel %vm1259, %v3291, %v3267
  %v3308 = vmul.f32 %v3300, %v1267
  %v3309 = vmul.f32 %v3296, %v1271
  %v3310 = vmul.f32 %v3292, %v1275
  %v3311 = vmul.f32 %v3304, %v1279
  %v3312 = vmul.f32 %v3301, %v1267
  %v3313 = vmul.f32 %v3297, %v1271
  %v3314 = vmul.f32 %v3293, %v1275
  %v3315 = vmul.f32 %v3305, %v1279
  %v3316 = vmul.f32 %v3302, %v1267
  %v3317 = vmul.f32 %v3298, %v1271
  %v3318 = vmul.f32 %v3294, %v1275
  %v3319 = vmul.f32 %v3306, %v1279
  %v3320 = vmul.f32 %v3303, %v1267
  %v3321 = vmul.f32 %v3299, %v1271
  %v3322 = vmul.f32 %v3295, %v1275
  %v3323 = vmul.f32 %v3307, %v1279
  %s3324 = scalar_lea.vmem %s5, 40
  %v3325 = vld [vmem:[%s3324] sm:$0xff]
  %v3327 = vsel %vm2314, %v3325, 0
  %3329 = vmatprep.subr.mxu0 0.0
  %3330 = vmatpush1.msra.mxu0 0.0
  %3331 = vmatprep.subr.mxu0 0.0
  %3332 = vmatpush1.msra.mxu0 0.0
  %3333 = vmatprep.subr.mxu0 0.0
  %3334 = vmatpush1.msra.mxu0 0.0
  %3335 = vmatprep.subr.mxu0 0.0
  %3336 = vmatpush1.msra.mxu0 0.0
  %3337 = vmatprep.subr.mxu0 0.0
  %3338 = vmatpush1.msra.mxu0 0.0
  %3339 = vmatprep.subr.mxu0 0.0
  %3340 = vmatpush1.msra.mxu0 0.0
  %3341 = vmatprep.subr.mxu0 0.0
  %3342 = vmatpush1.msra.mxu0 0.0
  %3343 = vmatprep.subr.mxu0 0.0
  %3344 = vmatpush1.msra.mxu0 0.0
  %3345 = vmatprep.subr.mxu0 0.0
  %3346 = vmatpush1.msra.mxu0 0.0
  %3347 = vmatprep.subr.mxu0 0.0
  %3348 = vmatpush1.msra.mxu0 0.0
  %3349 = vmatprep.subr.mxu0 0.0
  %3350 = vmatpush1.msra.mxu0 0.0
  %3351 = vmatprep.subr.mxu0 0.0
  %3352 = vmatpush1.msra.mxu0 0.0
  %3353 = vmatprep.subr.mxu0 %v3321
  %3354 = vmatpush1.msra.mxu0 %v3320
  %3355 = vmatprep.subr.mxu0 %v3317
  %3356 = vmatpush1.msra.mxu0 %v3316
  %3357 = vmatprep.subr.mxu0 %v3313
  %3358 = vmatpush1.msra.mxu0 %v3312
  %3359 = vmatprep.subr.mxu0 %v3309
  %3360 = vmatpush1.msra.mxu0 %v3308
  %3361 = vmatprep.subr.mxu0 0.0
  %3362 = vmatpush2.msra.mxu0 0.0
  %3363 = vmatprep.subr.mxu0 0.0
  %3364 = vmatpush2.msra.mxu0 0.0
  %3365 = vmatprep.subr.mxu0 0.0
  %3366 = vmatpush2.msra.mxu0 0.0
  %3367 = vmatprep.subr.mxu0 0.0
  %3368 = vmatpush2.msra.mxu0 0.0
  %3369 = vmatprep.subr.mxu0 0.0
  %3370 = vmatpush2.msra.mxu0 0.0
  %3371 = vmatprep.subr.mxu0 0.0
  %3372 = vmatpush2.msra.mxu0 0.0
  %3373 = vmatprep.subr.mxu0 0.0
  %3374 = vmatpush2.msra.mxu0 0.0
  %3375 = vmatprep.subr.mxu0 0.0
  %3376 = vmatpush2.msra.mxu0 0.0
  %3377 = vmatprep.subr.mxu0 0.0
  %3378 = vmatpush2.msra.mxu0 0.0
  %3379 = vmatprep.subr.mxu0 0.0
  %3380 = vmatpush2.msra.mxu0 0.0
  %3381 = vmatprep.subr.mxu0 0.0
  %3382 = vmatpush2.msra.mxu0 0.0
  %3383 = vmatprep.subr.mxu0 0.0
  %3384 = vmatpush2.msra.mxu0 0.0
  %3385 = vmatprep.subr.mxu0 0.0
  %3386 = vmatpush2.msra.mxu0 0.0
  %3387 = vmatprep.subr.mxu0 0.0
  %3388 = vmatpush2.msra.mxu0 0.0
  %3389 = vmatprep.subr.mxu0 0.0
  %3390 = vmatpush2.msra.mxu0 0.0
  %3391 = vmatprep.subr.mxu0 0.0
  %3392 = vmatpush2.msra.mxu0 0.0
  %3393 = vmatprep.mubr.f32.mxu0 0.0
  %3394 = vmatmul.mubr.f32.gmra.mxu0 %v3327
  %v3395 = vpop.f32.mrf.mxu0
  %v3396 = vadd.f32 0.0, %v3395
  %v3397 = vpop.f32.mrf.mxu0
  %v3398 = vadd.f32 0.0, %v3397
  %3399 = vdwg.mxu0
  %3400 = vmatprep.subr.mxu0 0.0
  %3401 = vmatpush1.msra.mxu0 0.0
  %3402 = vmatprep.subr.mxu0 0.0
  %3403 = vmatpush1.msra.mxu0 0.0
  %3404 = vmatprep.subr.mxu0 0.0
  %3405 = vmatpush1.msra.mxu0 0.0
  %3406 = vmatprep.subr.mxu0 0.0
  %3407 = vmatpush1.msra.mxu0 0.0
  %3408 = vmatprep.subr.mxu0 0.0
  %3409 = vmatpush1.msra.mxu0 0.0
  %3410 = vmatprep.subr.mxu0 0.0
  %3411 = vmatpush1.msra.mxu0 0.0
  %3412 = vmatprep.subr.mxu0 0.0
  %3413 = vmatpush1.msra.mxu0 0.0
  %3414 = vmatprep.subr.mxu0 0.0
  %3415 = vmatpush1.msra.mxu0 0.0
  %3416 = vmatprep.subr.mxu0 0.0
  %3417 = vmatpush1.msra.mxu0 0.0
  %3418 = vmatprep.subr.mxu0 0.0
  %3419 = vmatpush1.msra.mxu0 0.0
  %3420 = vmatprep.subr.mxu0 0.0
  %3421 = vmatpush1.msra.mxu0 0.0
  %3422 = vmatprep.subr.mxu0 0.0
  %3423 = vmatpush1.msra.mxu0 0.0
  %3424 = vmatprep.subr.mxu0 %v3323
  %3425 = vmatpush1.msra.mxu0 %v3322
  %3426 = vmatprep.subr.mxu0 %v3319
  %3427 = vmatpush1.msra.mxu0 %v3318
  %3428 = vmatprep.subr.mxu0 %v3315
  %3429 = vmatpush1.msra.mxu0 %v3314
  %3430 = vmatprep.subr.mxu0 %v3311
  %3431 = vmatpush1.msra.mxu0 %v3310
  %3432 = vmatprep.subr.mxu0 0.0
  %3433 = vmatpush2.msra.mxu0 0.0
  %3434 = vmatprep.subr.mxu0 0.0
  %3435 = vmatpush2.msra.mxu0 0.0
  %3436 = vmatprep.subr.mxu0 0.0
  %3437 = vmatpush2.msra.mxu0 0.0
  %3438 = vmatprep.subr.mxu0 0.0
  %3439 = vmatpush2.msra.mxu0 0.0
  %3440 = vmatprep.subr.mxu0 0.0
  %3441 = vmatpush2.msra.mxu0 0.0
  %3442 = vmatprep.subr.mxu0 0.0
  %3443 = vmatpush2.msra.mxu0 0.0
  %3444 = vmatprep.subr.mxu0 0.0
  %3445 = vmatpush2.msra.mxu0 0.0
  %3446 = vmatprep.subr.mxu0 0.0
  %3447 = vmatpush2.msra.mxu0 0.0
  %3448 = vmatprep.subr.mxu0 0.0
  %3449 = vmatpush2.msra.mxu0 0.0
  %3450 = vmatprep.subr.mxu0 0.0
  %3451 = vmatpush2.msra.mxu0 0.0
  %3452 = vmatprep.subr.mxu0 0.0
  %3453 = vmatpush2.msra.mxu0 0.0
  %3454 = vmatprep.subr.mxu0 0.0
  %3455 = vmatpush2.msra.mxu0 0.0
  %3456 = vmatprep.subr.mxu0 0.0
  %3457 = vmatpush2.msra.mxu0 0.0
  %3458 = vmatprep.subr.mxu0 0.0
  %3459 = vmatpush2.msra.mxu0 0.0
  %3460 = vmatprep.subr.mxu0 0.0
  %3461 = vmatpush2.msra.mxu0 0.0
  %3462 = vmatprep.subr.mxu0 0.0
  %3463 = vmatpush2.msra.mxu0 0.0
  %3464 = vmatprep.mubr.f32.mxu0 0.0
  %3465 = vmatmul.mubr.f32.gmra.mxu0 %v3327
  %v3466 = vpop.f32.mrf.mxu0
  %v3467 = vadd.f32 0.0, %v3466
  %v3468 = vpop.f32.mrf.mxu0
  %v3469 = vadd.f32 0.0, %v3468
  %3470 = vdwg.mxu0
  %v3471 = vadd.f32 %v3256, %v3396
  %v3472 = vadd.f32 %v3257, %v3398
  %v3473 = vadd.f32 %v3258, %v3467
  %v3474 = vadd.f32 %v3259, %v3469
  %3475 = vrot.lane.b32.xlu0 %v2227, 113
  %v3476 = vpop.permute.xlu0 %3475
  %3477 = vrot.lane.b32.xlu0 %v2231, 113
  %v3478 = vpop.permute.xlu0 %3477
  %3479 = vrot.lane.b32.xlu0 %v2235, 113
  %v3480 = vpop.permute.xlu0 %3479
  %3481 = vrot.lane.b32.xlu0 %v2239, 113
  %v3482 = vpop.permute.xlu0 %3481
  %3483 = vrot.lane.b32.xlu0 %v2228, 113
  %v3484 = vpop.permute.xlu0 %3483
  %3485 = vrot.lane.b32.xlu0 %v2232, 113
  %v3486 = vpop.permute.xlu0 %3485
  %3487 = vrot.lane.b32.xlu0 %v2236, 113
  %v3488 = vpop.permute.xlu0 %3487
  %3489 = vrot.lane.b32.xlu0 %v2240, 113
  %v3490 = vpop.permute.xlu0 %3489
  %3491 = vrot.lane.b32.xlu0 %v2229, 113
  %v3492 = vpop.permute.xlu0 %3491
  %3493 = vrot.lane.b32.xlu0 %v2233, 113
  %v3494 = vpop.permute.xlu0 %3493
  %3495 = vrot.lane.b32.xlu0 %v2237, 113
  %v3496 = vpop.permute.xlu0 %3495
  %3497 = vrot.lane.b32.xlu0 %v2241, 113
  %v3498 = vpop.permute.xlu0 %3497
  %3499 = vrot.lane.b32.xlu0 %v2230, 113
  %v3500 = vpop.permute.xlu0 %3499
  %3501 = vrot.lane.b32.xlu0 %v2234, 113
  %v3502 = vpop.permute.xlu0 %3501
  %3503 = vrot.lane.b32.xlu0 %v2238, 113
  %v3504 = vpop.permute.xlu0 %3503
  %3505 = vrot.lane.b32.xlu0 %v2242, 113
  %v3506 = vpop.permute.xlu0 %3505
  %v3507 = vsel %vm1503, %v3492, %v3500
  %v3508 = vsel %vm1503, %v3494, %v3502
  %v3509 = vsel %vm1503, %v3496, %v3504
  %v3510 = vsel %vm1503, %v3498, %v3506
  %v3511 = vsel %vm1503, %v3484, %v3492
  %v3512 = vsel %vm1503, %v3486, %v3494
  %v3513 = vsel %vm1503, %v3488, %v3496
  %v3514 = vsel %vm1503, %v3490, %v3498
  %v3515 = vsel %vm1503, %v3476, %v3484
  %v3516 = vsel %vm1503, %v3478, %v3486
  %v3517 = vsel %vm1503, %v3480, %v3488
  %v3518 = vsel %vm1503, %v3482, %v3490
  %v3519 = vsel %vm1503, %v3500, %v3476
  %v3520 = vsel %vm1503, %v3502, %v3478
  %v3521 = vsel %vm1503, %v3504, %v3480
  %v3522 = vsel %vm1503, %v3506, %v3482
  %v3523 = vmul.f32 %v3515, %v1511
  %v3524 = vmul.f32 %v3511, %v1515
  %v3525 = vmul.f32 %v3507, %v1519
  %v3526 = vmul.f32 %v3519, %v1523
  %v3527 = vmul.f32 %v3516, %v1511
  %v3528 = vmul.f32 %v3512, %v1515
  %v3529 = vmul.f32 %v3508, %v1519
  %v3530 = vmul.f32 %v3520, %v1523
  %v3531 = vmul.f32 %v3517, %v1511
  %v3532 = vmul.f32 %v3513, %v1515
  %v3533 = vmul.f32 %v3509, %v1519
  %v3534 = vmul.f32 %v3521, %v1523
  %v3535 = vmul.f32 %v3518, %v1511
  %v3536 = vmul.f32 %v3514, %v1515
  %v3537 = vmul.f32 %v3510, %v1519
  %v3538 = vmul.f32 %v3522, %v1523
  %s3539 = scalar_lea.vmem %s5, 48
  %v3540 = vld [vmem:[%s3539] sm:$0xff]
  %v3542 = vsel %vm2314, %v3540, 0
  %3544 = vmatprep.subr.mxu0 0.0
  %3545 = vmatpush1.msra.mxu0 0.0
  %3546 = vmatprep.subr.mxu0 0.0
  %3547 = vmatpush1.msra.mxu0 0.0
  %3548 = vmatprep.subr.mxu0 0.0
  %3549 = vmatpush1.msra.mxu0 0.0
  %3550 = vmatprep.subr.mxu0 0.0
  %3551 = vmatpush1.msra.mxu0 0.0
  %3552 = vmatprep.subr.mxu0 0.0
  %3553 = vmatpush1.msra.mxu0 0.0
  %3554 = vmatprep.subr.mxu0 0.0
  %3555 = vmatpush1.msra.mxu0 0.0
  %3556 = vmatprep.subr.mxu0 0.0
  %3557 = vmatpush1.msra.mxu0 0.0
  %3558 = vmatprep.subr.mxu0 0.0
  %3559 = vmatpush1.msra.mxu0 0.0
  %3560 = vmatprep.subr.mxu0 0.0
  %3561 = vmatpush1.msra.mxu0 0.0
  %3562 = vmatprep.subr.mxu0 0.0
  %3563 = vmatpush1.msra.mxu0 0.0
  %3564 = vmatprep.subr.mxu0 0.0
  %3565 = vmatpush1.msra.mxu0 0.0
  %3566 = vmatprep.subr.mxu0 0.0
  %3567 = vmatpush1.msra.mxu0 0.0
  %3568 = vmatprep.subr.mxu0 %v3536
  %3569 = vmatpush1.msra.mxu0 %v3535
  %3570 = vmatprep.subr.mxu0 %v3532
  %3571 = vmatpush1.msra.mxu0 %v3531
  %3572 = vmatprep.subr.mxu0 %v3528
  %3573 = vmatpush1.msra.mxu0 %v3527
  %3574 = vmatprep.subr.mxu0 %v3524
  %3575 = vmatpush1.msra.mxu0 %v3523
  %3576 = vmatprep.subr.mxu0 0.0
  %3577 = vmatpush2.msra.mxu0 0.0
  %3578 = vmatprep.subr.mxu0 0.0
  %3579 = vmatpush2.msra.mxu0 0.0
  %3580 = vmatprep.subr.mxu0 0.0
  %3581 = vmatpush2.msra.mxu0 0.0
  %3582 = vmatprep.subr.mxu0 0.0
  %3583 = vmatpush2.msra.mxu0 0.0
  %3584 = vmatprep.subr.mxu0 0.0
  %3585 = vmatpush2.msra.mxu0 0.0
  %3586 = vmatprep.subr.mxu0 0.0
  %3587 = vmatpush2.msra.mxu0 0.0
  %3588 = vmatprep.subr.mxu0 0.0
  %3589 = vmatpush2.msra.mxu0 0.0
  %3590 = vmatprep.subr.mxu0 0.0
  %3591 = vmatpush2.msra.mxu0 0.0
  %3592 = vmatprep.subr.mxu0 0.0
  %3593 = vmatpush2.msra.mxu0 0.0
  %3594 = vmatprep.subr.mxu0 0.0
  %3595 = vmatpush2.msra.mxu0 0.0
  %3596 = vmatprep.subr.mxu0 0.0
  %3597 = vmatpush2.msra.mxu0 0.0
  %3598 = vmatprep.subr.mxu0 0.0
  %3599 = vmatpush2.msra.mxu0 0.0
  %3600 = vmatprep.subr.mxu0 0.0
  %3601 = vmatpush2.msra.mxu0 0.0
  %3602 = vmatprep.subr.mxu0 0.0
  %3603 = vmatpush2.msra.mxu0 0.0
  %3604 = vmatprep.subr.mxu0 0.0
  %3605 = vmatpush2.msra.mxu0 0.0
  %3606 = vmatprep.subr.mxu0 0.0
  %3607 = vmatpush2.msra.mxu0 0.0
  %3608 = vmatprep.mubr.f32.mxu0 0.0
  %3609 = vmatmul.mubr.f32.gmra.mxu0 %v3542
  %v3610 = vpop.f32.mrf.mxu0
  %v3611 = vadd.f32 0.0, %v3610
  %v3612 = vpop.f32.mrf.mxu0
  %v3613 = vadd.f32 0.0, %v3612
  %3614 = vdwg.mxu0
  %3615 = vmatprep.subr.mxu0 0.0
  %3616 = vmatpush1.msra.mxu0 0.0
  %3617 = vmatprep.subr.mxu0 0.0
  %3618 = vmatpush1.msra.mxu0 0.0
  %3619 = vmatprep.subr.mxu0 0.0
  %3620 = vmatpush1.msra.mxu0 0.0
  %3621 = vmatprep.subr.mxu0 0.0
  %3622 = vmatpush1.msra.mxu0 0.0
  %3623 = vmatprep.subr.mxu0 0.0
  %3624 = vmatpush1.msra.mxu0 0.0
  %3625 = vmatprep.subr.mxu0 0.0
  %3626 = vmatpush1.msra.mxu0 0.0
  %3627 = vmatprep.subr.mxu0 0.0
  %3628 = vmatpush1.msra.mxu0 0.0
  %3629 = vmatprep.subr.mxu0 0.0
  %3630 = vmatpush1.msra.mxu0 0.0
  %3631 = vmatprep.subr.mxu0 0.0
  %3632 = vmatpush1.msra.mxu0 0.0
  %3633 = vmatprep.subr.mxu0 0.0
  %3634 = vmatpush1.msra.mxu0 0.0
  %3635 = vmatprep.subr.mxu0 0.0
  %3636 = vmatpush1.msra.mxu0 0.0
  %3637 = vmatprep.subr.mxu0 0.0
  %3638 = vmatpush1.msra.mxu0 0.0
  %3639 = vmatprep.subr.mxu0 %v3538
  %3640 = vmatpush1.msra.mxu0 %v3537
  %3641 = vmatprep.subr.mxu0 %v3534
  %3642 = vmatpush1.msra.mxu0 %v3533
  %3643 = vmatprep.subr.mxu0 %v3530
  %3644 = vmatpush1.msra.mxu0 %v3529
  %3645 = vmatprep.subr.mxu0 %v3526
  %3646 = vmatpush1.msra.mxu0 %v3525
  %3647 = vmatprep.subr.mxu0 0.0
  %3648 = vmatpush2.msra.mxu0 0.0
  %3649 = vmatprep.subr.mxu0 0.0
  %3650 = vmatpush2.msra.mxu0 0.0
  %3651 = vmatprep.subr.mxu0 0.0
  %3652 = vmatpush2.msra.mxu0 0.0
  %3653 = vmatprep.subr.mxu0 0.0
  %3654 = vmatpush2.msra.mxu0 0.0
  %3655 = vmatprep.subr.mxu0 0.0
  %3656 = vmatpush2.msra.mxu0 0.0
  %3657 = vmatprep.subr.mxu0 0.0
  %3658 = vmatpush2.msra.mxu0 0.0
  %3659 = vmatprep.subr.mxu0 0.0
  %3660 = vmatpush2.msra.mxu0 0.0
  %3661 = vmatprep.subr.mxu0 0.0
  %3662 = vmatpush2.msra.mxu0 0.0
  %3663 = vmatprep.subr.mxu0 0.0
  %3664 = vmatpush2.msra.mxu0 0.0
  %3665 = vmatprep.subr.mxu0 0.0
  %3666 = vmatpush2.msra.mxu0 0.0
  %3667 = vmatprep.subr.mxu0 0.0
  %3668 = vmatpush2.msra.mxu0 0.0
  %3669 = vmatprep.subr.mxu0 0.0
  %3670 = vmatpush2.msra.mxu0 0.0
  %3671 = vmatprep.subr.mxu0 0.0
  %3672 = vmatpush2.msra.mxu0 0.0
  %3673 = vmatprep.subr.mxu0 0.0
  %3674 = vmatpush2.msra.mxu0 0.0
  %3675 = vmatprep.subr.mxu0 0.0
  %3676 = vmatpush2.msra.mxu0 0.0
  %3677 = vmatprep.subr.mxu0 0.0
  %3678 = vmatpush2.msra.mxu0 0.0
  %3679 = vmatprep.mubr.f32.mxu0 0.0
  %3680 = vmatmul.mubr.f32.gmra.mxu0 %v3542
  %v3681 = vpop.f32.mrf.mxu0
  %v3682 = vadd.f32 0.0, %v3681
  %v3683 = vpop.f32.mrf.mxu0
  %v3684 = vadd.f32 0.0, %v3683
  %3685 = vdwg.mxu0
  %v3686 = vadd.f32 %v3471, %v3611
  %v3687 = vadd.f32 %v3472, %v3613
  %v3688 = vadd.f32 %v3473, %v3682
  %v3689 = vadd.f32 %v3474, %v3684
  %3690 = vrot.lane.b32.xlu0 %v2227, 112
  %v3691 = vpop.permute.xlu0 %3690
  %3692 = vrot.lane.b32.xlu0 %v2231, 112
  %v3693 = vpop.permute.xlu0 %3692
  %3694 = vrot.lane.b32.xlu0 %v2235, 112
  %v3695 = vpop.permute.xlu0 %3694
  %3696 = vrot.lane.b32.xlu0 %v2239, 112
  %v3697 = vpop.permute.xlu0 %3696
  %3698 = vrot.lane.b32.xlu0 %v2228, 112
  %v3699 = vpop.permute.xlu0 %3698
  %3700 = vrot.lane.b32.xlu0 %v2232, 112
  %v3701 = vpop.permute.xlu0 %3700
  %3702 = vrot.lane.b32.xlu0 %v2236, 112
  %v3703 = vpop.permute.xlu0 %3702
  %3704 = vrot.lane.b32.xlu0 %v2240, 112
  %v3705 = vpop.permute.xlu0 %3704
  %3706 = vrot.lane.b32.xlu0 %v2229, 112
  %v3707 = vpop.permute.xlu0 %3706
  %3708 = vrot.lane.b32.xlu0 %v2233, 112
  %v3709 = vpop.permute.xlu0 %3708
  %3710 = vrot.lane.b32.xlu0 %v2237, 112
  %v3711 = vpop.permute.xlu0 %3710
  %3712 = vrot.lane.b32.xlu0 %v2241, 112
  %v3713 = vpop.permute.xlu0 %3712
  %3714 = vrot.lane.b32.xlu0 %v2230, 112
  %v3715 = vpop.permute.xlu0 %3714
  %3716 = vrot.lane.b32.xlu0 %v2234, 112
  %v3717 = vpop.permute.xlu0 %3716
  %3718 = vrot.lane.b32.xlu0 %v2238, 112
  %v3719 = vpop.permute.xlu0 %3718
  %3720 = vrot.lane.b32.xlu0 %v2242, 112
  %v3721 = vpop.permute.xlu0 %3720
  %v3722 = vsel %vm1747, %v3707, %v3715
  %v3723 = vsel %vm1747, %v3709, %v3717
  %v3724 = vsel %vm1747, %v3711, %v3719
  %v3725 = vsel %vm1747, %v3713, %v3721
  %v3726 = vsel %vm1747, %v3699, %v3707
  %v3727 = vsel %vm1747, %v3701, %v3709
  %v3728 = vsel %vm1747, %v3703, %v3711
  %v3729 = vsel %vm1747, %v3705, %v3713
  %v3730 = vsel %vm1747, %v3691, %v3699
  %v3731 = vsel %vm1747, %v3693, %v3701
  %v3732 = vsel %vm1747, %v3695, %v3703
  %v3733 = vsel %vm1747, %v3697, %v3705
  %v3734 = vsel %vm1747, %v3715, %v3691
  %v3735 = vsel %vm1747, %v3717, %v3693
  %v3736 = vsel %vm1747, %v3719, %v3695
  %v3737 = vsel %vm1747, %v3721, %v3697
  %v3738 = vmul.f32 %v3730, %v1755
  %v3739 = vmul.f32 %v3726, %v1759
  %v3740 = vmul.f32 %v3722, %v1763
  %v3741 = vmul.f32 %v3734, %v1767
  %v3742 = vmul.f32 %v3731, %v1755
  %v3743 = vmul.f32 %v3727, %v1759
  %v3744 = vmul.f32 %v3723, %v1763
  %v3745 = vmul.f32 %v3735, %v1767
  %v3746 = vmul.f32 %v3732, %v1755
  %v3747 = vmul.f32 %v3728, %v1759
  %v3748 = vmul.f32 %v3724, %v1763
  %v3749 = vmul.f32 %v3736, %v1767
  %v3750 = vmul.f32 %v3733, %v1755
  %v3751 = vmul.f32 %v3729, %v1759
  %v3752 = vmul.f32 %v3725, %v1763
  %v3753 = vmul.f32 %v3737, %v1767
  %s3754 = scalar_lea.vmem %s5, 56
  %v3755 = vld [vmem:[%s3754] sm:$0xff]
  %v3757 = vsel %vm2314, %v3755, 0
  %3759 = vmatprep.subr.mxu0 0.0
  %3760 = vmatpush1.msra.mxu0 0.0
  %3761 = vmatprep.subr.mxu0 0.0
  %3762 = vmatpush1.msra.mxu0 0.0
  %3763 = vmatprep.subr.mxu0 0.0
  %3764 = vmatpush1.msra.mxu0 0.0
  %3765 = vmatprep.subr.mxu0 0.0
  %3766 = vmatpush1.msra.mxu0 0.0
  %3767 = vmatprep.subr.mxu0 0.0
  %3768 = vmatpush1.msra.mxu0 0.0
  %3769 = vmatprep.subr.mxu0 0.0
  %3770 = vmatpush1.msra.mxu0 0.0
  %3771 = vmatprep.subr.mxu0 0.0
  %3772 = vmatpush1.msra.mxu0 0.0
  %3773 = vmatprep.subr.mxu0 0.0
  %3774 = vmatpush1.msra.mxu0 0.0
  %3775 = vmatprep.subr.mxu0 0.0
  %3776 = vmatpush1.msra.mxu0 0.0
  %3777 = vmatprep.subr.mxu0 0.0
  %3778 = vmatpush1.msra.mxu0 0.0
  %3779 = vmatprep.subr.mxu0 0.0
  %3780 = vmatpush1.msra.mxu0 0.0
  %3781 = vmatprep.subr.mxu0 0.0
  %3782 = vmatpush1.msra.mxu0 0.0
  %3783 = vmatprep.subr.mxu0 %v3751
  %3784 = vmatpush1.msra.mxu0 %v3750
  %3785 = vmatprep.subr.mxu0 %v3747
  %3786 = vmatpush1.msra.mxu0 %v3746
  %3787 = vmatprep.subr.mxu0 %v3743
  %3788 = vmatpush1.msra.mxu0 %v3742
  %3789 = vmatprep.subr.mxu0 %v3739
  %3790 = vmatpush1.msra.mxu0 %v3738
  %3791 = vmatprep.subr.mxu0 0.0
  %3792 = vmatpush2.msra.mxu0 0.0
  %3793 = vmatprep.subr.mxu0 0.0
  %3794 = vmatpush2.msra.mxu0 0.0
  %3795 = vmatprep.subr.mxu0 0.0
  %3796 = vmatpush2.msra.mxu0 0.0
  %3797 = vmatprep.subr.mxu0 0.0
  %3798 = vmatpush2.msra.mxu0 0.0
  %3799 = vmatprep.subr.mxu0 0.0
  %3800 = vmatpush2.msra.mxu0 0.0
  %3801 = vmatprep.subr.mxu0 0.0
  %3802 = vmatpush2.msra.mxu0 0.0
  %3803 = vmatprep.subr.mxu0 0.0
  %3804 = vmatpush2.msra.mxu0 0.0
  %3805 = vmatprep.subr.mxu0 0.0
  %3806 = vmatpush2.msra.mxu0 0.0
  %3807 = vmatprep.subr.mxu0 0.0
  %3808 = vmatpush2.msra.mxu0 0.0
  %3809 = vmatprep.subr.mxu0 0.0
  %3810 = vmatpush2.msra.mxu0 0.0
  %3811 = vmatprep.subr.mxu0 0.0
  %3812 = vmatpush2.msra.mxu0 0.0
  %3813 = vmatprep.subr.mxu0 0.0
  %3814 = vmatpush2.msra.mxu0 0.0
  %3815 = vmatprep.subr.mxu0 0.0
  %3816 = vmatpush2.msra.mxu0 0.0
  %3817 = vmatprep.subr.mxu0 0.0
  %3818 = vmatpush2.msra.mxu0 0.0
  %3819 = vmatprep.subr.mxu0 0.0
  %3820 = vmatpush2.msra.mxu0 0.0
  %3821 = vmatprep.subr.mxu0 0.0
  %3822 = vmatpush2.msra.mxu0 0.0
  %3823 = vmatprep.mubr.f32.mxu0 0.0
  %3824 = vmatmul.mubr.f32.gmra.mxu0 %v3757
  %v3825 = vpop.f32.mrf.mxu0
  %v3826 = vadd.f32 0.0, %v3825
  %v3827 = vpop.f32.mrf.mxu0
  %v3828 = vadd.f32 0.0, %v3827
  %3829 = vdwg.mxu0
  %3830 = vmatprep.subr.mxu0 0.0
  %3831 = vmatpush1.msra.mxu0 0.0
  %3832 = vmatprep.subr.mxu0 0.0
  %3833 = vmatpush1.msra.mxu0 0.0
  %3834 = vmatprep.subr.mxu0 0.0
  %3835 = vmatpush1.msra.mxu0 0.0
  %3836 = vmatprep.subr.mxu0 0.0
  %3837 = vmatpush1.msra.mxu0 0.0
  %3838 = vmatprep.subr.mxu0 0.0
  %3839 = vmatpush1.msra.mxu0 0.0
  %3840 = vmatprep.subr.mxu0 0.0
  %3841 = vmatpush1.msra.mxu0 0.0
  %3842 = vmatprep.subr.mxu0 0.0
  %3843 = vmatpush1.msra.mxu0 0.0
  %3844 = vmatprep.subr.mxu0 0.0
  %3845 = vmatpush1.msra.mxu0 0.0
  %3846 = vmatprep.subr.mxu0 0.0
  %3847 = vmatpush1.msra.mxu0 0.0
  %3848 = vmatprep.subr.mxu0 0.0
  %3849 = vmatpush1.msra.mxu0 0.0
  %3850 = vmatprep.subr.mxu0 0.0
  %3851 = vmatpush1.msra.mxu0 0.0
  %3852 = vmatprep.subr.mxu0 0.0
  %3853 = vmatpush1.msra.mxu0 0.0
  %3854 = vmatprep.subr.mxu0 %v3753
  %3855 = vmatpush1.msra.mxu0 %v3752
  %3856 = vmatprep.subr.mxu0 %v3749
  %3857 = vmatpush1.msra.mxu0 %v3748
  %3858 = vmatprep.subr.mxu0 %v3745
  %3859 = vmatpush1.msra.mxu0 %v3744
  %3860 = vmatprep.subr.mxu0 %v3741
  %3861 = vmatpush1.msra.mxu0 %v3740
  %3862 = vmatprep.subr.mxu0 0.0
  %3863 = vmatpush2.msra.mxu0 0.0
  %3864 = vmatprep.subr.mxu0 0.0
  %3865 = vmatpush2.msra.mxu0 0.0
  %3866 = vmatprep.subr.mxu0 0.0
  %3867 = vmatpush2.msra.mxu0 0.0
  %3868 = vmatprep.subr.mxu0 0.0
  %3869 = vmatpush2.msra.mxu0 0.0
  %3870 = vmatprep.subr.mxu0 0.0
  %3871 = vmatpush2.msra.mxu0 0.0
  %3872 = vmatprep.subr.mxu0 0.0
  %3873 = vmatpush2.msra.mxu0 0.0
  %3874 = vmatprep.subr.mxu0 0.0
  %3875 = vmatpush2.msra.mxu0 0.0
  %3876 = vmatprep.subr.mxu0 0.0
  %3877 = vmatpush2.msra.mxu0 0.0
  %3878 = vmatprep.subr.mxu0 0.0
  %3879 = vmatpush2.msra.mxu0 0.0
  %3880 = vmatprep.subr.mxu0 0.0
  %3881 = vmatpush2.msra.mxu0 0.0
  %3882 = vmatprep.subr.mxu0 0.0
  %3883 = vmatpush2.msra.mxu0 0.0
  %3884 = vmatprep.subr.mxu0 0.0
  %3885 = vmatpush2.msra.mxu0 0.0
  %3886 = vmatprep.subr.mxu0 0.0
  %3887 = vmatpush2.msra.mxu0 0.0
  %3888 = vmatprep.subr.mxu0 0.0
  %3889 = vmatpush2.msra.mxu0 0.0
  %3890 = vmatprep.subr.mxu0 0.0
  %3891 = vmatpush2.msra.mxu0 0.0
  %3892 = vmatprep.subr.mxu0 0.0
  %3893 = vmatpush2.msra.mxu0 0.0
  %3894 = vmatprep.mubr.f32.mxu0 0.0
  %3895 = vmatmul.mubr.f32.gmra.mxu0 %v3757
  %v3896 = vpop.f32.mrf.mxu0
  %v3897 = vadd.f32 0.0, %v3896
  %v3898 = vpop.f32.mrf.mxu0
  %v3899 = vadd.f32 0.0, %v3898
  %3900 = vdwg.mxu0
  %v3901 = vadd.f32 %v3686, %v3826
  %v3902 = vadd.f32 %v3687, %v3828
  %v3903 = vadd.f32 %v3688, %v3897
  %v3904 = vadd.f32 %v3689, %v3899
  %3905 = vrot.lane.b32.xlu0 %v2227, 111
  %v3906 = vpop.permute.xlu0 %3905
  %3907 = vrot.lane.b32.xlu0 %v2231, 111
  %v3908 = vpop.permute.xlu0 %3907
  %3909 = vrot.lane.b32.xlu0 %v2235, 111
  %v3910 = vpop.permute.xlu0 %3909
  %3911 = vrot.lane.b32.xlu0 %v2239, 111
  %v3912 = vpop.permute.xlu0 %3911
  %3913 = vrot.lane.b32.xlu0 %v2228, 111
  %v3914 = vpop.permute.xlu0 %3913
  %3915 = vrot.lane.b32.xlu0 %v2232, 111
  %v3916 = vpop.permute.xlu0 %3915
  %3917 = vrot.lane.b32.xlu0 %v2236, 111
  %v3918 = vpop.permute.xlu0 %3917
  %3919 = vrot.lane.b32.xlu0 %v2240, 111
  %v3920 = vpop.permute.xlu0 %3919
  %3921 = vrot.lane.b32.xlu0 %v2229, 111
  %v3922 = vpop.permute.xlu0 %3921
  %3923 = vrot.lane.b32.xlu0 %v2233, 111
  %v3924 = vpop.permute.xlu0 %3923
  %3925 = vrot.lane.b32.xlu0 %v2237, 111
  %v3926 = vpop.permute.xlu0 %3925
  %3927 = vrot.lane.b32.xlu0 %v2241, 111
  %v3928 = vpop.permute.xlu0 %3927
  %3929 = vrot.lane.b32.xlu0 %v2230, 111
  %v3930 = vpop.permute.xlu0 %3929
  %3931 = vrot.lane.b32.xlu0 %v2234, 111
  %v3932 = vpop.permute.xlu0 %3931
  %3933 = vrot.lane.b32.xlu0 %v2238, 111
  %v3934 = vpop.permute.xlu0 %3933
  %3935 = vrot.lane.b32.xlu0 %v2242, 111
  %v3936 = vpop.permute.xlu0 %3935
  %v3937 = vsel %vm1991, %v3922, %v3930
  %v3938 = vsel %vm1991, %v3924, %v3932
  %v3939 = vsel %vm1991, %v3926, %v3934
  %v3940 = vsel %vm1991, %v3928, %v3936
  %v3941 = vsel %vm1991, %v3914, %v3922
  %v3942 = vsel %vm1991, %v3916, %v3924
  %v3943 = vsel %vm1991, %v3918, %v3926
  %v3944 = vsel %vm1991, %v3920, %v3928
  %v3945 = vsel %vm1991, %v3906, %v3914
  %v3946 = vsel %vm1991, %v3908, %v3916
  %v3947 = vsel %vm1991, %v3910, %v3918
  %v3948 = vsel %vm1991, %v3912, %v3920
  %v3949 = vsel %vm1991, %v3930, %v3906
  %v3950 = vsel %vm1991, %v3932, %v3908
  %v3951 = vsel %vm1991, %v3934, %v3910
  %v3952 = vsel %vm1991, %v3936, %v3912
  %v3953 = vmul.f32 %v3945, %v1999
  %v3954 = vmul.f32 %v3941, %v2003
  %v3955 = vmul.f32 %v3937, %v2007
  %v3956 = vmul.f32 %v3949, %v2011
  %v3957 = vmul.f32 %v3946, %v1999
  %v3958 = vmul.f32 %v3942, %v2003
  %v3959 = vmul.f32 %v3938, %v2007
  %v3960 = vmul.f32 %v3950, %v2011
  %v3961 = vmul.f32 %v3947, %v1999
  %v3962 = vmul.f32 %v3943, %v2003
  %v3963 = vmul.f32 %v3939, %v2007
  %v3964 = vmul.f32 %v3951, %v2011
  %v3965 = vmul.f32 %v3948, %v1999
  %v3966 = vmul.f32 %v3944, %v2003
  %v3967 = vmul.f32 %v3940, %v2007
  %v3968 = vmul.f32 %v3952, %v2011
  %s3969 = scalar_lea.vmem %s5, 64
  %v3970 = vld [vmem:[%s3969] sm:$0xff]
  %v3972 = vsel %vm2314, %v3970, 0
  %3974 = vmatprep.subr.mxu0 0.0
  %3975 = vmatpush1.msra.mxu0 0.0
  %3976 = vmatprep.subr.mxu0 0.0
  %3977 = vmatpush1.msra.mxu0 0.0
  %3978 = vmatprep.subr.mxu0 0.0
  %3979 = vmatpush1.msra.mxu0 0.0
  %3980 = vmatprep.subr.mxu0 0.0
  %3981 = vmatpush1.msra.mxu0 0.0
  %3982 = vmatprep.subr.mxu0 0.0
  %3983 = vmatpush1.msra.mxu0 0.0
  %3984 = vmatprep.subr.mxu0 0.0
  %3985 = vmatpush1.msra.mxu0 0.0
  %3986 = vmatprep.subr.mxu0 0.0
  %3987 = vmatpush1.msra.mxu0 0.0
  %3988 = vmatprep.subr.mxu0 0.0
  %3989 = vmatpush1.msra.mxu0 0.0
  %3990 = vmatprep.subr.mxu0 0.0
  %3991 = vmatpush1.msra.mxu0 0.0
  %3992 = vmatprep.subr.mxu0 0.0
  %3993 = vmatpush1.msra.mxu0 0.0
  %3994 = vmatprep.subr.mxu0 0.0
  %3995 = vmatpush1.msra.mxu0 0.0
  %3996 = vmatprep.subr.mxu0 0.0
  %3997 = vmatpush1.msra.mxu0 0.0
  %3998 = vmatprep.subr.mxu0 %v3966
  %3999 = vmatpush1.msra.mxu0 %v3965
  %4000 = vmatprep.subr.mxu0 %v3962
  %4001 = vmatpush1.msra.mxu0 %v3961
  %4002 = vmatprep.subr.mxu0 %v3958
  %4003 = vmatpush1.msra.mxu0 %v3957
  %4004 = vmatprep.subr.mxu0 %v3954
  %4005 = vmatpush1.msra.mxu0 %v3953
  %4006 = vmatprep.subr.mxu0 0.0
  %4007 = vmatpush2.msra.mxu0 0.0
  %4008 = vmatprep.subr.mxu0 0.0
  %4009 = vmatpush2.msra.mxu0 0.0
  %4010 = vmatprep.subr.mxu0 0.0
  %4011 = vmatpush2.msra.mxu0 0.0
  %4012 = vmatprep.subr.mxu0 0.0
  %4013 = vmatpush2.msra.mxu0 0.0
  %4014 = vmatprep.subr.mxu0 0.0
  %4015 = vmatpush2.msra.mxu0 0.0
  %4016 = vmatprep.subr.mxu0 0.0
  %4017 = vmatpush2.msra.mxu0 0.0
  %4018 = vmatprep.subr.mxu0 0.0
  %4019 = vmatpush2.msra.mxu0 0.0
  %4020 = vmatprep.subr.mxu0 0.0
  %4021 = vmatpush2.msra.mxu0 0.0
  %4022 = vmatprep.subr.mxu0 0.0
  %4023 = vmatpush2.msra.mxu0 0.0
  %4024 = vmatprep.subr.mxu0 0.0
  %4025 = vmatpush2.msra.mxu0 0.0
  %4026 = vmatprep.subr.mxu0 0.0
  %4027 = vmatpush2.msra.mxu0 0.0
  %4028 = vmatprep.subr.mxu0 0.0
  %4029 = vmatpush2.msra.mxu0 0.0
  %4030 = vmatprep.subr.mxu0 0.0
  %4031 = vmatpush2.msra.mxu0 0.0
  %4032 = vmatprep.subr.mxu0 0.0
  %4033 = vmatpush2.msra.mxu0 0.0
  %4034 = vmatprep.subr.mxu0 0.0
  %4035 = vmatpush2.msra.mxu0 0.0
  %4036 = vmatprep.subr.mxu0 0.0
  %4037 = vmatpush2.msra.mxu0 0.0
  %4038 = vmatprep.mubr.f32.mxu0 0.0
  %4039 = vmatmul.mubr.f32.gmra.mxu0 %v3972
  %v4040 = vpop.f32.mrf.mxu0
  %v4041 = vadd.f32 0.0, %v4040
  %v4042 = vpop.f32.mrf.mxu0
  %v4043 = vadd.f32 0.0, %v4042
  %4044 = vdwg.mxu0
  %4045 = vmatprep.subr.mxu0 0.0
  %4046 = vmatpush1.msra.mxu0 0.0
  %4047 = vmatprep.subr.mxu0 0.0
  %4048 = vmatpush1.msra.mxu0 0.0
  %4049 = vmatprep.subr.mxu0 0.0
  %4050 = vmatpush1.msra.mxu0 0.0
  %4051 = vmatprep.subr.mxu0 0.0
  %4052 = vmatpush1.msra.mxu0 0.0
  %4053 = vmatprep.subr.mxu0 0.0
  %4054 = vmatpush1.msra.mxu0 0.0
  %4055 = vmatprep.subr.mxu0 0.0
  %4056 = vmatpush1.msra.mxu0 0.0
  %4057 = vmatprep.subr.mxu0 0.0
  %4058 = vmatpush1.msra.mxu0 0.0
  %4059 = vmatprep.subr.mxu0 0.0
  %4060 = vmatpush1.msra.mxu0 0.0
  %4061 = vmatprep.subr.mxu0 0.0
  %4062 = vmatpush1.msra.mxu0 0.0
  %4063 = vmatprep.subr.mxu0 0.0
  %4064 = vmatpush1.msra.mxu0 0.0
  %4065 = vmatprep.subr.mxu0 0.0
  %4066 = vmatpush1.msra.mxu0 0.0
  %4067 = vmatprep.subr.mxu0 0.0
  %4068 = vmatpush1.msra.mxu0 0.0
  %4069 = vmatprep.subr.mxu0 %v3968
  %4070 = vmatpush1.msra.mxu0 %v3967
  %4071 = vmatprep.subr.mxu0 %v3964
  %4072 = vmatpush1.msra.mxu0 %v3963
  %4073 = vmatprep.subr.mxu0 %v3960
  %4074 = vmatpush1.msra.mxu0 %v3959
  %4075 = vmatprep.subr.mxu0 %v3956
  %4076 = vmatpush1.msra.mxu0 %v3955
  %4077 = vmatprep.subr.mxu0 0.0
  %4078 = vmatpush2.msra.mxu0 0.0
  %4079 = vmatprep.subr.mxu0 0.0
  %4080 = vmatpush2.msra.mxu0 0.0
  %4081 = vmatprep.subr.mxu0 0.0
  %4082 = vmatpush2.msra.mxu0 0.0
  %4083 = vmatprep.subr.mxu0 0.0
  %4084 = vmatpush2.msra.mxu0 0.0
  %4085 = vmatprep.subr.mxu0 0.0
  %4086 = vmatpush2.msra.mxu0 0.0
  %4087 = vmatprep.subr.mxu0 0.0
  %4088 = vmatpush2.msra.mxu0 0.0
  %4089 = vmatprep.subr.mxu0 0.0
  %4090 = vmatpush2.msra.mxu0 0.0
  %4091 = vmatprep.subr.mxu0 0.0
  %4092 = vmatpush2.msra.mxu0 0.0
  %4093 = vmatprep.subr.mxu0 0.0
  %4094 = vmatpush2.msra.mxu0 0.0
  %4095 = vmatprep.subr.mxu0 0.0
  %4096 = vmatpush2.msra.mxu0 0.0
  %4097 = vmatprep.subr.mxu0 0.0
  %4098 = vmatpush2.msra.mxu0 0.0
  %4099 = vmatprep.subr.mxu0 0.0
  %4100 = vmatpush2.msra.mxu0 0.0
  %4101 = vmatprep.subr.mxu0 0.0
  %4102 = vmatpush2.msra.mxu0 0.0
  %4103 = vmatprep.subr.mxu0 0.0
  %4104 = vmatpush2.msra.mxu0 0.0
  %4105 = vmatprep.subr.mxu0 0.0
  %4106 = vmatpush2.msra.mxu0 0.0
  %4107 = vmatprep.subr.mxu0 0.0
  %4108 = vmatpush2.msra.mxu0 0.0
  %4109 = vmatprep.mubr.f32.mxu0 0.0
  %4110 = vmatmul.mubr.f32.gmra.mxu0 %v3972
  %v4111 = vpop.f32.mrf.mxu0
  %v4112 = vadd.f32 0.0, %v4111
  %v4113 = vpop.f32.mrf.mxu0
  %v4114 = vadd.f32 0.0, %v4113
  %4115 = vdwg.mxu0
  %v4116 = vadd.f32 %v3901, %v4041
  %v4117 = vadd.f32 %v3902, %v4043
  %v4118 = vadd.f32 %v3903, %v4112
  %v4119 = vadd.f32 %v3904, %v4114
  %v4120 = vld [vmem:[%s1] sm:$0xff]
  %v4121 = vld [vmem:[%s1 + $0x8] sm:$0xff]
  %v4123 = vcombine.high %v4120, %v4120
  %vm4125 = vcmask 1043456
  %v4126 = vsel %vm4125, %v4120, 0.0
  %v4127 = vsel %vm4125, %v4123, 0.0
  %v4128 = vadd.f32 %v4126, %v4127
  %4129 = vadd.xlane.f32.xlu0 %v4128
  %v4130 = vpop.xlane.xlu0 %4129
  %v4131 = vmul.f32 %v4130, 0.00390625
  %v4132 = vmul.f32 %v4130, %v4130
  %v4133 = vmul.f32 %v4131, %v4131
  %v4134 = vsub.f32 %v4132, %v4133
  %v4135 = vmul.f32 %v4134, 0.00390625
  %v4136 = vrsqrt.pop %v4135
  %v4139 = vunpack.c.l.s4 839922192
  %v4140 = vunpack.c.0.s8 %v4139
  %v4141 = vlaneseq
  %v4142 = vshrl.u32 %v4141, 7
  %v4143 = vsub.s32 %v4140, %v4142
  %v4144 = vrot.slane %v4131, %v4143
  %v4146 = vsub.f32 %v4120, %v4144
  %v4149 = vunpack.c.l.s4 839922192
  %v4150 = vunpack.c.0.s8 %v4149
  %v4151 = vlaneseq
  %v4152 = vshrl.u32 %v4151, 7
  %v4153 = vsub.s32 %v4150, %v4152
  %v4154 = vrot.slane %v4136, %v4153
  %v4156 = vmul.f32 %v4146, %v4154
  %v4157 = vadd.f32 %v4116, 1.0
  %v4158 = vadd.f32 %v4117, 1.0
  %v4161 = vcombine.low %v4157, %v4158
  %v4163 = vmul.f32 %v4156, %v4161
  %v4166 = vcombine.high %v4116, %v4117
  %v4168 = vadd.f32 %v4163, %v4166
  %4169 = vst [vmem:[%s7] sm:$0xff] %v4168
  %v4171 = vcombine.high %v4121, %v4121
  %v4173 = vsel %vm4125, %v4121, 0.0
  %v4174 = vsel %vm4125, %v4171, 0.0
  %v4175 = vadd.f32 %v4173, %v4174
  %4176 = vadd.xlane.f32.xlu0 %v4175
  %v4177 = vpop.xlane.xlu0 %4176
  %v4178 = vmul.f32 %v4177, 0.00390625
  %v4179 = vmul.f32 %v4177, %v4177
  %v4180 = vmul.f32 %v4178, %v4178
  %v4181 = vsub.f32 %v4179, %v4180
  %v4182 = vmul.f32 %v4181, 0.00390625
  %v4183 = vrsqrt.pop %v4182
  %v4186 = vunpack.c.l.s4 839922192
  %v4187 = vunpack.c.0.s8 %v4186
  %v4188 = vlaneseq
  %v4189 = vshrl.u32 %v4188, 7
  %v4190 = vsub.s32 %v4187, %v4189
  %v4191 = vrot.slane %v4178, %v4190
  %v4193 = vsub.f32 %v4121, %v4191
  %v4196 = vunpack.c.l.s4 839922192
  %v4197 = vunpack.c.0.s8 %v4196
  %v4198 = vlaneseq
  %v4199 = vshrl.u32 %v4198, 7
  %v4200 = vsub.s32 %v4197, %v4199
  %v4201 = vrot.slane %v4183, %v4200
  %v4203 = vmul.f32 %v4193, %v4201
  %v4204 = vadd.f32 %v4118, 1.0
  %v4205 = vadd.f32 %v4119, 1.0
  %v4208 = vcombine.low %v4204, %v4205
  %v4210 = vmul.f32 %v4203, %v4208
  %v4213 = vcombine.high %v4118, %v4119
  %v4215 = vadd.f32 %v4210, %v4213
  %4216 = vst [vmem:[%s7 + $0x8] sm:$0xff] %v4215
  // Predicated region
  $region30: #{spade_forward.1} parent=0 // pred_check
    _
  $region31: #{spade_forward.1} parent=0 // pred_check_branch
    %4218 = sbr.rel (0) target = $region33
  $region32: #{spade_forward.1} parent=0 // pred_region
    _
  $region33: #{spade_forward.1} parent=0 // pred_fallthru
    _
  // Predicated region
  $region34: #{spade_forward.1} parent=0 // pred_check
    _
  $region35: #{spade_forward.1} parent=0 // pred_check_branch
    %4220 = sbr.rel (0) target = $region37
  $region36: #{spade_forward.1} parent=0 // pred_region
    _
  $region37: #{spade_forward.1} parent=0 // pred_fallthru
    _

</llo_original>
